<compile_context>
chip_gen: v6e
topology: v6e:2x2x1
jax: 0.10.0
libtpu: 0.0.40
codegen_flags: <defaults>
</compile_context>

<pallas_src>
import functools

import jax
import jax.numpy as jnp
from jax.experimental import pallas as pl
from jax.experimental.pallas import tpu as pltpu


# ----------------------------------------------------------------------------
# Fused forward kernel
# ----------------------------------------------------------------------------
def _fused_forward_kernel(xpat_ref, w1_ref, b1_ref, w2_ref, b2_ref,
                          w3_ref, b3_ref, wl_ref, bl_ref, emb_ref,
                          o_ref, *, hp, wp):
    """Whole RVAEEncodeToLatentModel forward in one kernel.

    xpat_ref : (M, P*P*Cin)  bf16  patchified raster rows, M = B*hp*wp
    w1_ref   : (P*P*Cin, C1) bf16  synthetic-encoder patchify-conv weight
    w2_ref   : (9, C1, 2L)   bf16  synthetic-encoder 3x3 conv weight (per tap)
    w3_ref   : (9, 2L, L)    bf16  pre_quantization_conv weight (per tap)
    wl_ref   : (L, L)        bf16  linear weight, (in, out) == torch weight.T
    emb_ref  : (K, L)        f32   codebook
    o_ref    : (1, M)        int32 VQ indices (lane-dense)
    biases   : (1, C)        f32
    """
    f32 = jnp.float32
    bf16 = jnp.bfloat16
    M = xpat_ref.shape[0]

    # ---- row-index geometry of the flattened (b, h, w) ordering -------------
    shift = (wp - 1).bit_length()                       # wp is a power of two
    r = jax.lax.broadcasted_iota(jnp.int32, (M, 1), 0)  # flat row id
    wcol = jnp.bitwise_and(r, wp - 1)                   # w coordinate
    hrow = jnp.bitwise_and(jnp.right_shift(r, shift), hp - 1)  # h coordinate

    pad_rows = 2 * wp                                   # >= wp + 1 (max shift)
    shifts, masks = [], []
    for t in range(9):                                  # tap t = (dy+1)*3+(dx+1)
        dy, dx = t // 3 - 1, t % 3 - 1
        valid = ((hrow + dy >= 0) & (hrow + dy < hp) &
                 (wcol + dx >= 0) & (wcol + dx < wp))
        masks.append(valid.astype(f32))                 # (M, 1) border mask
        shifts.append(dy * wp + dx)                     # flat-row shift per tap

    def conv3x3(y, w_ref, b_ref):
        """3x3 / stride-1 / pad-1 conv on the flattened (M, Cin) activation.

        In-kernel im2col: each tap is a row-shifted, border-masked copy of `y`
        fed straight to the MXU; no patch matrix ever touches HBM.
        """
        cin = y.shape[1]
        cout = w_ref.shape[-1]
        zpad = jnp.zeros((pad_rows, cin), f32)
        yext = jnp.concatenate([zpad, y, zpad], axis=0)  # (M + 2*pad_rows, cin)
        acc = jnp.zeros((M, cout), f32)
        for t in range(9):
            start = pad_rows + shifts[t]                 # static slice offset
            xs = yext[start:start + M, :] * masks[t]     # masked shifted rows
            acc = acc + jnp.dot(xs.astype(bf16), w_ref[t],
                                preferred_element_type=f32)
        return acc + b_ref[...]

    # ---- synthetic raster encoder, layer 1: 4x4/stride-4 patchify conv + ReLU
    h1 = jnp.dot(xpat_ref[...], w1_ref[...], preferred_element_type=f32)
    h1 = jnp.maximum(h1 + b1_ref[...], 0.0)              # (M, C1)

    # ---- synthetic raster encoder, layer 2: 3x3 conv + ReLU -> latent (M, 2L)
    latent = jnp.maximum(conv3x3(h1, w2_ref, b2_ref), 0.0)

    # ---- pre_quantization_conv: 3x3 conv, no activation -> (M, L) ------------
    pre = conv3x3(latent, w3_ref, b3_ref)

    # ---- linear ---------------------------------------------------------------
    flat = jnp.dot(pre.astype(bf16), wl_ref[...],
                   preferred_element_type=f32) + bl_ref[...]   # (M, L)

    # ---- VQ codebook assignment (f32; x^2 dropped: per-row constant) ----------
    e = emb_ref[...]                                           # (K, L)
    e2 = jnp.sum(e * e, axis=1, keepdims=True)                 # (K, 1)
    xe = jax.lax.dot_general(e, flat, (((1,), (1,)), ((), ())),
                             preferred_element_type=f32)       # (K, M)
    d = e2 - 2.0 * xe                                          # (K, M)
    dmin = jnp.min(d, axis=0, keepdims=True)                   # (1, M)
    iota = jax.lax.broadcasted_iota(jnp.int32, d.shape, 0)     # (K, M)
    big = jnp.iinfo(jnp.int32).max
    # first-occurrence argmin along the codebook axis (torch semantics),
    # written lane-dense as (1, M) int32
    o_ref[...] = jnp.min(jnp.where(d <= dmin, iota, big), axis=0, keepdims=True)


# ----------------------------------------------------------------------------
# Parameters (deterministic synthetic init; shapes follow the module __init__)
# ----------------------------------------------------------------------------
def init_params(key, in_ch, latent_channel, num_embeddings,
                patch=4, enc_hidden=16):
    ks = jax.random.split(key, 9)

    def w_conv(k, kh, kw, cin, cout):
        scale = 1.0 / float(kh * kw * cin) ** 0.5
        return jax.random.normal(k, (kh, kw, cin, cout), jnp.float32) * scale

    two_l = 2 * latent_channel
    return {
        # synthetic raster encoder (stand-in for RVAEEncoder)
        "enc1_w": w_conv(ks[0], patch, patch, in_ch, enc_hidden),
        "enc1_b": jax.random.normal(ks[1], (enc_hidden,), jnp.float32) * 0.01,
        "enc2_w": w_conv(ks[2], 3, 3, enc_hidden, two_l),
        "enc2_b": jax.random.normal(ks[3], (two_l,), jnp.float32) * 0.01,
        # pre_quantization_conv: Conv2d(2L, L, 3, 1, 1)
        "preq_w": w_conv(ks[4], 3, 3, two_l, latent_channel),
        "preq_b": jax.random.normal(ks[5], (latent_channel,), jnp.float32) * 0.01,
        # Linear(L, L) stored as (in, out); equals torch weight.T
        "lin_w": jax.random.normal(ks[6], (latent_channel, latent_channel),
                                   jnp.float32) * (1.0 / float(latent_channel) ** 0.5),
        "lin_b": jax.random.normal(ks[7], (latent_channel,), jnp.float32) * 0.01,
        # Embedding(num_embeddings, L)
        "emb_w": jax.random.normal(ks[8], (num_embeddings, latent_channel),
                                   jnp.float32),
    }


# ----------------------------------------------------------------------------
# Forward pass (mirrors RVAEEncodeToLatentModel.forward)
# ----------------------------------------------------------------------------
def forward(params, line_raster_nchw):
    B, Cin, H, W = line_raster_nchw.shape
    L = params["lin_w"].shape[0]
    two_l = 2 * L
    P = params["enc1_w"].shape[0]
    enc_hidden = params["enc1_w"].shape[-1]
    Hp, Wp = H // P, W // P
    assert Hp == 8 and Wp == 8, "latent grid must be 8x8 so view(-1, 64) is valid"
    M = B * Hp * Wp

    # NCHW -> NHWC (the torch permute(0,2,3,1) later is then a no-op)
    x = jnp.transpose(line_raster_nchw, (0, 2, 3, 1))
    # patchify / space-to-depth: single cheap relayout, no im2col duplication
    xpat = x.reshape(B, Hp, P, Wp, P, Cin).transpose(0, 1, 3, 2, 4, 5)
    xpat = xpat.reshape(M, P * P * Cin).astype(jnp.bfloat16)

    # kernel-ready weight layouts (bf16 for the MXU; biases & codebook stay f32)
    w1 = params["enc1_w"].reshape(P * P * Cin, enc_hidden).astype(jnp.bfloat16)
    b1 = params["enc1_b"].reshape(1, enc_hidden)
    w2 = params["enc2_w"].reshape(9, enc_hidden, two_l).astype(jnp.bfloat16)
    b2 = params["enc2_b"].reshape(1, two_l)
    w3 = params["preq_w"].reshape(9, two_l, L).astype(jnp.bfloat16)
    b3 = params["preq_b"].reshape(1, L)
    wl = params["lin_w"].astype(jnp.bfloat16)
    bl = params["lin_b"].reshape(1, L)
    emb = params["emb_w"]
    K = emb.shape[0]

    kernel = functools.partial(_fused_forward_kernel, hp=Hp, wp=Wp)

    idx = pl.pallas_call(
        kernel,
        out_shape=jax.ShapeDtypeStruct((1, M), jnp.int32),
        grid=(1,),
        in_specs=[
            pl.BlockSpec((M, P * P * Cin), lambda i: (0, 0)),
            pl.BlockSpec((P * P * Cin, enc_hidden), lambda i: (0, 0)),
            pl.BlockSpec((1, enc_hidden), lambda i: (0, 0)),
            pl.BlockSpec((9, enc_hidden, two_l), lambda i: (0, 0, 0)),
            pl.BlockSpec((1, two_l), lambda i: (0, 0)),
            pl.BlockSpec((9, two_l, L), lambda i: (0, 0, 0)),
            pl.BlockSpec((1, L), lambda i: (0, 0)),
            pl.BlockSpec((L, L), lambda i: (0, 0)),
            pl.BlockSpec((1, L), lambda i: (0, 0)),
            pl.BlockSpec((K, L), lambda i: (0, 0)),
        ],
        out_specs=pl.BlockSpec((1, M), lambda i: (0, 0)),
        compiler_params=pltpu.CompilerParams(
            dimension_semantics=("arbitrary",)),
    )(xpat, w1, b1, w2, b2, w3, b3, wl, bl, emb)

    # encoding_indices.view(-1, 64)
    return idx.reshape(-1, 64)


# ----------------------------------------------------------------------------
if __name__ == "__main__":
    # small config: latent_channel=32, num_embeddings=16, raster = (2, 4, 32, 32)
    LATENT_CHANNEL = 32
    NUM_EMBEDDINGS = 16
    IN_CH = 4

    key = jax.random.PRNGKey(0)
    k_params, k_x = jax.random.split(key)
    params = init_params(k_params, IN_CH, LATENT_CHANNEL, NUM_EMBEDDINGS)

    line_raster = jax.random.normal(k_x, (2, IN_CH, 32, 32), jnp.float32)  # NCHW

    out = jax.jit(forward)(params, line_raster)
    out = jax.block_until_ready(out)

    assert out.shape == (2, 64), out.shape
    assert out.dtype == jnp.int32
    assert bool(jnp.all(out >= 0)) and bool(jnp.all(out < NUM_EMBEDDINGS))
    print("KERNEL_OK")
</pallas_src>

<mosaic_0001>
module attributes {stable_mosaic.version = 11 : i64} {
  func.func @_fused_forward_kernel(%arg0: i32, %arg1: memref<128x64xbf16, #tpu.memory_space<vmem>>, %arg2: memref<64x16xbf16, #tpu.memory_space<vmem>>, %arg3: memref<1x16xf32, #tpu.memory_space<vmem>>, %arg4: memref<9x16x64xbf16, #tpu.memory_space<vmem>>, %arg5: memref<1x64xf32, #tpu.memory_space<vmem>>, %arg6: memref<9x64x32xbf16, #tpu.memory_space<vmem>>, %arg7: memref<1x32xf32, #tpu.memory_space<vmem>>, %arg8: memref<32x32xbf16, #tpu.memory_space<vmem>>, %arg9: memref<1x32xf32, #tpu.memory_space<vmem>>, %arg10: memref<16x32xf32, #tpu.memory_space<vmem>>, %arg11: memref<1x128xi32, #tpu.memory_space<vmem>>) attributes {dimension_semantics = [#tpu.dimension_semantics<arbitrary>], iteration_bounds = array<i64: 1>, scalar_prefetch = 0 : i64, scratch_operands = 0 : i64, tpu.core_type = #tpu.core_type<tc>, window_params = [{pipeline_mode = #tpu.pipeline_mode<synchronous>, transform_indices = @transform_0, window_bounds = array<i64: 128, 64>}, {pipeline_mode = #tpu.pipeline_mode<synchronous>, transform_indices = @transform_1, window_bounds = array<i64: 64, 16>}, {pipeline_mode = #tpu.pipeline_mode<synchronous>, transform_indices = @transform_2, window_bounds = array<i64: 1, 16>}, {pipeline_mode = #tpu.pipeline_mode<synchronous>, transform_indices = @transform_3, window_bounds = array<i64: 9, 16, 64>}, {pipeline_mode = #tpu.pipeline_mode<synchronous>, transform_indices = @transform_4, window_bounds = array<i64: 1, 64>}, {pipeline_mode = #tpu.pipeline_mode<synchronous>, transform_indices = @transform_5, window_bounds = array<i64: 9, 64, 32>}, {pipeline_mode = #tpu.pipeline_mode<synchronous>, transform_indices = @transform_6, window_bounds = array<i64: 1, 32>}, {pipeline_mode = #tpu.pipeline_mode<synchronous>, transform_indices = @transform_7, window_bounds = array<i64: 32, 32>}, {pipeline_mode = #tpu.pipeline_mode<synchronous>, transform_indices = @transform_8, window_bounds = array<i64: 1, 32>}, {pipeline_mode = #tpu.pipeline_mode<synchronous>, transform_indices = @transform_9, window_bounds = array<i64: 16, 32>}, {pipeline_mode = #tpu.pipeline_mode<synchronous>, transform_indices = @transform_10, window_bounds = array<i64: 1, 128>}]} {
    %0 = tpu.iota {dimensions = array<i32: 0>} : vector<128x1xi32>
    %c7_i32 = arith.constant 7 : i32
    %1 = vector.broadcast %c7_i32 : i32 to vector<128x1xi32>
    %2 = arith.andi %0, %1 : vector<128x1xi32>
    %c3_i32 = arith.constant 3 : i32
    %3 = vector.broadcast %c3_i32 : i32 to vector<128x1xi32>
    %4 = arith.shrsi %0, %3 : vector<128x1xi32>
    %c7_i32_0 = arith.constant 7 : i32
    %5 = vector.broadcast %c7_i32_0 : i32 to vector<128x1xi32>
    %6 = arith.andi %4, %5 : vector<128x1xi32>
    %c-1_i32 = arith.constant -1 : i32
    %7 = vector.broadcast %c-1_i32 : i32 to vector<128x1xi32>
    %8 = arith.addi %6, %7 : vector<128x1xi32>
    %c0_i32 = arith.constant 0 : i32
    %9 = vector.broadcast %c0_i32 : i32 to vector<128x1xi32>
    %10 = arith.cmpi sge, %8, %9 : vector<128x1xi32>
    %c-1_i32_1 = arith.constant -1 : i32
    %11 = vector.broadcast %c-1_i32_1 : i32 to vector<128x1xi32>
    %12 = arith.addi %6, %11 : vector<128x1xi32>
    %c8_i32 = arith.constant 8 : i32
    %13 = vector.broadcast %c8_i32 : i32 to vector<128x1xi32>
    %14 = arith.cmpi slt, %12, %13 : vector<128x1xi32>
    %15 = arith.andi %10, %14 : vector<128x1xi1>
    %c-1_i32_2 = arith.constant -1 : i32
    %16 = vector.broadcast %c-1_i32_2 : i32 to vector<128x1xi32>
    %17 = arith.addi %2, %16 : vector<128x1xi32>
    %c0_i32_3 = arith.constant 0 : i32
    %18 = vector.broadcast %c0_i32_3 : i32 to vector<128x1xi32>
    %19 = arith.cmpi sge, %17, %18 : vector<128x1xi32>
    %20 = arith.andi %15, %19 : vector<128x1xi1>
    %c-1_i32_4 = arith.constant -1 : i32
    %21 = vector.broadcast %c-1_i32_4 : i32 to vector<128x1xi32>
    %22 = arith.addi %2, %21 : vector<128x1xi32>
    %c8_i32_5 = arith.constant 8 : i32
    %23 = vector.broadcast %c8_i32_5 : i32 to vector<128x1xi32>
    %24 = arith.cmpi slt, %22, %23 : vector<128x1xi32>
    %25 = arith.andi %20, %24 : vector<128x1xi1>
    %26 = arith.extui %25 : vector<128x1xi1> to vector<128x1xi32>
    %27 = arith.sitofp %26 : vector<128x1xi32> to vector<128x1xf32>
    %c-1_i32_6 = arith.constant -1 : i32
    %28 = vector.broadcast %c-1_i32_6 : i32 to vector<128x1xi32>
    %29 = arith.addi %6, %28 : vector<128x1xi32>
    %c0_i32_7 = arith.constant 0 : i32
    %30 = vector.broadcast %c0_i32_7 : i32 to vector<128x1xi32>
    %31 = arith.cmpi sge, %29, %30 : vector<128x1xi32>
    %c-1_i32_8 = arith.constant -1 : i32
    %32 = vector.broadcast %c-1_i32_8 : i32 to vector<128x1xi32>
    %33 = arith.addi %6, %32 : vector<128x1xi32>
    %c8_i32_9 = arith.constant 8 : i32
    %34 = vector.broadcast %c8_i32_9 : i32 to vector<128x1xi32>
    %35 = arith.cmpi slt, %33, %34 : vector<128x1xi32>
    %36 = arith.andi %31, %35 : vector<128x1xi1>
    %c0_i32_10 = arith.constant 0 : i32
    %37 = vector.broadcast %c0_i32_10 : i32 to vector<128x1xi32>
    %38 = arith.addi %2, %37 : vector<128x1xi32>
    %c0_i32_11 = arith.constant 0 : i32
    %39 = vector.broadcast %c0_i32_11 : i32 to vector<128x1xi32>
    %40 = arith.cmpi sge, %38, %39 : vector<128x1xi32>
    %41 = arith.andi %36, %40 : vector<128x1xi1>
    %c0_i32_12 = arith.constant 0 : i32
    %42 = vector.broadcast %c0_i32_12 : i32 to vector<128x1xi32>
    %43 = arith.addi %2, %42 : vector<128x1xi32>
    %c8_i32_13 = arith.constant 8 : i32
    %44 = vector.broadcast %c8_i32_13 : i32 to vector<128x1xi32>
    %45 = arith.cmpi slt, %43, %44 : vector<128x1xi32>
    %46 = arith.andi %41, %45 : vector<128x1xi1>
    %47 = arith.extui %46 : vector<128x1xi1> to vector<128x1xi32>
    %48 = arith.sitofp %47 : vector<128x1xi32> to vector<128x1xf32>
    %c-1_i32_14 = arith.constant -1 : i32
    %49 = vector.broadcast %c-1_i32_14 : i32 to vector<128x1xi32>
    %50 = arith.addi %6, %49 : vector<128x1xi32>
    %c0_i32_15 = arith.constant 0 : i32
    %51 = vector.broadcast %c0_i32_15 : i32 to vector<128x1xi32>
    %52 = arith.cmpi sge, %50, %51 : vector<128x1xi32>
    %c-1_i32_16 = arith.constant -1 : i32
    %53 = vector.broadcast %c-1_i32_16 : i32 to vector<128x1xi32>
    %54 = arith.addi %6, %53 : vector<128x1xi32>
    %c8_i32_17 = arith.constant 8 : i32
    %55 = vector.broadcast %c8_i32_17 : i32 to vector<128x1xi32>
    %56 = arith.cmpi slt, %54, %55 : vector<128x1xi32>
    %57 = arith.andi %52, %56 : vector<128x1xi1>
    %c1_i32 = arith.constant 1 : i32
    %58 = vector.broadcast %c1_i32 : i32 to vector<128x1xi32>
    %59 = arith.addi %2, %58 : vector<128x1xi32>
    %c0_i32_18 = arith.constant 0 : i32
    %60 = vector.broadcast %c0_i32_18 : i32 to vector<128x1xi32>
    %61 = arith.cmpi sge, %59, %60 : vector<128x1xi32>
    %62 = arith.andi %57, %61 : vector<128x1xi1>
    %c1_i32_19 = arith.constant 1 : i32
    %63 = vector.broadcast %c1_i32_19 : i32 to vector<128x1xi32>
    %64 = arith.addi %2, %63 : vector<128x1xi32>
    %c8_i32_20 = arith.constant 8 : i32
    %65 = vector.broadcast %c8_i32_20 : i32 to vector<128x1xi32>
    %66 = arith.cmpi slt, %64, %65 : vector<128x1xi32>
    %67 = arith.andi %62, %66 : vector<128x1xi1>
    %68 = arith.extui %67 : vector<128x1xi1> to vector<128x1xi32>
    %69 = arith.sitofp %68 : vector<128x1xi32> to vector<128x1xf32>
    %c0_i32_21 = arith.constant 0 : i32
    %70 = vector.broadcast %c0_i32_21 : i32 to vector<128x1xi32>
    %71 = arith.addi %6, %70 : vector<128x1xi32>
    %c0_i32_22 = arith.constant 0 : i32
    %72 = vector.broadcast %c0_i32_22 : i32 to vector<128x1xi32>
    %73 = arith.cmpi sge, %71, %72 : vector<128x1xi32>
    %c0_i32_23 = arith.constant 0 : i32
    %74 = vector.broadcast %c0_i32_23 : i32 to vector<128x1xi32>
    %75 = arith.addi %6, %74 : vector<128x1xi32>
    %c8_i32_24 = arith.constant 8 : i32
    %76 = vector.broadcast %c8_i32_24 : i32 to vector<128x1xi32>
    %77 = arith.cmpi slt, %75, %76 : vector<128x1xi32>
    %78 = arith.andi %73, %77 : vector<128x1xi1>
    %c-1_i32_25 = arith.constant -1 : i32
    %79 = vector.broadcast %c-1_i32_25 : i32 to vector<128x1xi32>
    %80 = arith.addi %2, %79 : vector<128x1xi32>
    %c0_i32_26 = arith.constant 0 : i32
    %81 = vector.broadcast %c0_i32_26 : i32 to vector<128x1xi32>
    %82 = arith.cmpi sge, %80, %81 : vector<128x1xi32>
    %83 = arith.andi %78, %82 : vector<128x1xi1>
    %c-1_i32_27 = arith.constant -1 : i32
    %84 = vector.broadcast %c-1_i32_27 : i32 to vector<128x1xi32>
    %85 = arith.addi %2, %84 : vector<128x1xi32>
    %c8_i32_28 = arith.constant 8 : i32
    %86 = vector.broadcast %c8_i32_28 : i32 to vector<128x1xi32>
    %87 = arith.cmpi slt, %85, %86 : vector<128x1xi32>
    %88 = arith.andi %83, %87 : vector<128x1xi1>
    %89 = arith.extui %88 : vector<128x1xi1> to vector<128x1xi32>
    %90 = arith.sitofp %89 : vector<128x1xi32> to vector<128x1xf32>
    %c0_i32_29 = arith.constant 0 : i32
    %91 = vector.broadcast %c0_i32_29 : i32 to vector<128x1xi32>
    %92 = arith.addi %6, %91 : vector<128x1xi32>
    %c0_i32_30 = arith.constant 0 : i32
    %93 = vector.broadcast %c0_i32_30 : i32 to vector<128x1xi32>
    %94 = arith.cmpi sge, %92, %93 : vector<128x1xi32>
    %c0_i32_31 = arith.constant 0 : i32
    %95 = vector.broadcast %c0_i32_31 : i32 to vector<128x1xi32>
    %96 = arith.addi %6, %95 : vector<128x1xi32>
    %c8_i32_32 = arith.constant 8 : i32
    %97 = vector.broadcast %c8_i32_32 : i32 to vector<128x1xi32>
    %98 = arith.cmpi slt, %96, %97 : vector<128x1xi32>
    %99 = arith.andi %94, %98 : vector<128x1xi1>
    %c0_i32_33 = arith.constant 0 : i32
    %100 = vector.broadcast %c0_i32_33 : i32 to vector<128x1xi32>
    %101 = arith.addi %2, %100 : vector<128x1xi32>
    %c0_i32_34 = arith.constant 0 : i32
    %102 = vector.broadcast %c0_i32_34 : i32 to vector<128x1xi32>
    %103 = arith.cmpi sge, %101, %102 : vector<128x1xi32>
    %104 = arith.andi %99, %103 : vector<128x1xi1>
    %c0_i32_35 = arith.constant 0 : i32
    %105 = vector.broadcast %c0_i32_35 : i32 to vector<128x1xi32>
    %106 = arith.addi %2, %105 : vector<128x1xi32>
    %c8_i32_36 = arith.constant 8 : i32
    %107 = vector.broadcast %c8_i32_36 : i32 to vector<128x1xi32>
    %108 = arith.cmpi slt, %106, %107 : vector<128x1xi32>
    %109 = arith.andi %104, %108 : vector<128x1xi1>
    %110 = arith.extui %109 : vector<128x1xi1> to vector<128x1xi32>
    %111 = arith.sitofp %110 : vector<128x1xi32> to vector<128x1xf32>
    %c0_i32_37 = arith.constant 0 : i32
    %112 = vector.broadcast %c0_i32_37 : i32 to vector<128x1xi32>
    %113 = arith.addi %6, %112 : vector<128x1xi32>
    %c0_i32_38 = arith.constant 0 : i32
    %114 = vector.broadcast %c0_i32_38 : i32 to vector<128x1xi32>
    %115 = arith.cmpi sge, %113, %114 : vector<128x1xi32>
    %c0_i32_39 = arith.constant 0 : i32
    %116 = vector.broadcast %c0_i32_39 : i32 to vector<128x1xi32>
    %117 = arith.addi %6, %116 : vector<128x1xi32>
    %c8_i32_40 = arith.constant 8 : i32
    %118 = vector.broadcast %c8_i32_40 : i32 to vector<128x1xi32>
    %119 = arith.cmpi slt, %117, %118 : vector<128x1xi32>
    %120 = arith.andi %115, %119 : vector<128x1xi1>
    %c1_i32_41 = arith.constant 1 : i32
    %121 = vector.broadcast %c1_i32_41 : i32 to vector<128x1xi32>
    %122 = arith.addi %2, %121 : vector<128x1xi32>
    %c0_i32_42 = arith.constant 0 : i32
    %123 = vector.broadcast %c0_i32_42 : i32 to vector<128x1xi32>
    %124 = arith.cmpi sge, %122, %123 : vector<128x1xi32>
    %125 = arith.andi %120, %124 : vector<128x1xi1>
    %c1_i32_43 = arith.constant 1 : i32
    %126 = vector.broadcast %c1_i32_43 : i32 to vector<128x1xi32>
    %127 = arith.addi %2, %126 : vector<128x1xi32>
    %c8_i32_44 = arith.constant 8 : i32
    %128 = vector.broadcast %c8_i32_44 : i32 to vector<128x1xi32>
    %129 = arith.cmpi slt, %127, %128 : vector<128x1xi32>
    %130 = arith.andi %125, %129 : vector<128x1xi1>
    %131 = arith.extui %130 : vector<128x1xi1> to vector<128x1xi32>
    %132 = arith.sitofp %131 : vector<128x1xi32> to vector<128x1xf32>
    %c1_i32_45 = arith.constant 1 : i32
    %133 = vector.broadcast %c1_i32_45 : i32 to vector<128x1xi32>
    %134 = arith.addi %6, %133 : vector<128x1xi32>
    %c0_i32_46 = arith.constant 0 : i32
    %135 = vector.broadcast %c0_i32_46 : i32 to vector<128x1xi32>
    %136 = arith.cmpi sge, %134, %135 : vector<128x1xi32>
    %c1_i32_47 = arith.constant 1 : i32
    %137 = vector.broadcast %c1_i32_47 : i32 to vector<128x1xi32>
    %138 = arith.addi %6, %137 : vector<128x1xi32>
    %c8_i32_48 = arith.constant 8 : i32
    %139 = vector.broadcast %c8_i32_48 : i32 to vector<128x1xi32>
    %140 = arith.cmpi slt, %138, %139 : vector<128x1xi32>
    %141 = arith.andi %136, %140 : vector<128x1xi1>
    %c-1_i32_49 = arith.constant -1 : i32
    %142 = vector.broadcast %c-1_i32_49 : i32 to vector<128x1xi32>
    %143 = arith.addi %2, %142 : vector<128x1xi32>
    %c0_i32_50 = arith.constant 0 : i32
    %144 = vector.broadcast %c0_i32_50 : i32 to vector<128x1xi32>
    %145 = arith.cmpi sge, %143, %144 : vector<128x1xi32>
    %146 = arith.andi %141, %145 : vector<128x1xi1>
    %c-1_i32_51 = arith.constant -1 : i32
    %147 = vector.broadcast %c-1_i32_51 : i32 to vector<128x1xi32>
    %148 = arith.addi %2, %147 : vector<128x1xi32>
    %c8_i32_52 = arith.constant 8 : i32
    %149 = vector.broadcast %c8_i32_52 : i32 to vector<128x1xi32>
    %150 = arith.cmpi slt, %148, %149 : vector<128x1xi32>
    %151 = arith.andi %146, %150 : vector<128x1xi1>
    %152 = arith.extui %151 : vector<128x1xi1> to vector<128x1xi32>
    %153 = arith.sitofp %152 : vector<128x1xi32> to vector<128x1xf32>
    %c1_i32_53 = arith.constant 1 : i32
    %154 = vector.broadcast %c1_i32_53 : i32 to vector<128x1xi32>
    %155 = arith.addi %6, %154 : vector<128x1xi32>
    %c0_i32_54 = arith.constant 0 : i32
    %156 = vector.broadcast %c0_i32_54 : i32 to vector<128x1xi32>
    %157 = arith.cmpi sge, %155, %156 : vector<128x1xi32>
    %c1_i32_55 = arith.constant 1 : i32
    %158 = vector.broadcast %c1_i32_55 : i32 to vector<128x1xi32>
    %159 = arith.addi %6, %158 : vector<128x1xi32>
    %c8_i32_56 = arith.constant 8 : i32
    %160 = vector.broadcast %c8_i32_56 : i32 to vector<128x1xi32>
    %161 = arith.cmpi slt, %159, %160 : vector<128x1xi32>
    %162 = arith.andi %157, %161 : vector<128x1xi1>
    %c0_i32_57 = arith.constant 0 : i32
    %163 = vector.broadcast %c0_i32_57 : i32 to vector<128x1xi32>
    %164 = arith.addi %2, %163 : vector<128x1xi32>
    %c0_i32_58 = arith.constant 0 : i32
    %165 = vector.broadcast %c0_i32_58 : i32 to vector<128x1xi32>
    %166 = arith.cmpi sge, %164, %165 : vector<128x1xi32>
    %167 = arith.andi %162, %166 : vector<128x1xi1>
    %c0_i32_59 = arith.constant 0 : i32
    %168 = vector.broadcast %c0_i32_59 : i32 to vector<128x1xi32>
    %169 = arith.addi %2, %168 : vector<128x1xi32>
    %c8_i32_60 = arith.constant 8 : i32
    %170 = vector.broadcast %c8_i32_60 : i32 to vector<128x1xi32>
    %171 = arith.cmpi slt, %169, %170 : vector<128x1xi32>
    %172 = arith.andi %167, %171 : vector<128x1xi1>
    %173 = arith.extui %172 : vector<128x1xi1> to vector<128x1xi32>
    %174 = arith.sitofp %173 : vector<128x1xi32> to vector<128x1xf32>
    %c1_i32_61 = arith.constant 1 : i32
    %175 = vector.broadcast %c1_i32_61 : i32 to vector<128x1xi32>
    %176 = arith.addi %6, %175 : vector<128x1xi32>
    %c0_i32_62 = arith.constant 0 : i32
    %177 = vector.broadcast %c0_i32_62 : i32 to vector<128x1xi32>
    %178 = arith.cmpi sge, %176, %177 : vector<128x1xi32>
    %c1_i32_63 = arith.constant 1 : i32
    %179 = vector.broadcast %c1_i32_63 : i32 to vector<128x1xi32>
    %180 = arith.addi %6, %179 : vector<128x1xi32>
    %c8_i32_64 = arith.constant 8 : i32
    %181 = vector.broadcast %c8_i32_64 : i32 to vector<128x1xi32>
    %182 = arith.cmpi slt, %180, %181 : vector<128x1xi32>
    %183 = arith.andi %178, %182 : vector<128x1xi1>
    %c1_i32_65 = arith.constant 1 : i32
    %184 = vector.broadcast %c1_i32_65 : i32 to vector<128x1xi32>
    %185 = arith.addi %2, %184 : vector<128x1xi32>
    %c0_i32_66 = arith.constant 0 : i32
    %186 = vector.broadcast %c0_i32_66 : i32 to vector<128x1xi32>
    %187 = arith.cmpi sge, %185, %186 : vector<128x1xi32>
    %188 = arith.andi %183, %187 : vector<128x1xi1>
    %c1_i32_67 = arith.constant 1 : i32
    %189 = vector.broadcast %c1_i32_67 : i32 to vector<128x1xi32>
    %190 = arith.addi %2, %189 : vector<128x1xi32>
    %c8_i32_68 = arith.constant 8 : i32
    %191 = vector.broadcast %c8_i32_68 : i32 to vector<128x1xi32>
    %192 = arith.cmpi slt, %190, %191 : vector<128x1xi32>
    %193 = arith.andi %188, %192 : vector<128x1xi1>
    %194 = arith.extui %193 : vector<128x1xi1> to vector<128x1xi32>
    %195 = arith.sitofp %194 : vector<128x1xi32> to vector<128x1xf32>
    %c0 = arith.constant 0 : index
    %c0_69 = arith.constant 0 : index
    %196 = vector.load %arg1[%c0, %c0_69] : memref<128x64xbf16, #tpu.memory_space<vmem>>, vector<128x64xbf16>
    %c0_70 = arith.constant 0 : index
    %c0_71 = arith.constant 0 : index
    %197 = vector.load %arg2[%c0_70, %c0_71] : memref<64x16xbf16, #tpu.memory_space<vmem>>, vector<64x16xbf16>
    %cst = arith.constant dense<0.000000e+00> : vector<128x16xf32>
    %198 = tpu.matmul %196, %197, %cst {dimension_numbers = #tpu.dot_dimension_numbers<[1], [0], [0], [1], [0, 0, 1, 1], [], []>} : vector<128x64xbf16>, vector<64x16xbf16>, vector<128x16xf32> -> vector<128x16xf32>
    %c0_72 = arith.constant 0 : index
    %c0_73 = arith.constant 0 : index
    %199 = vector.load %arg3[%c0_72, %c0_73] : memref<1x16xf32, #tpu.memory_space<vmem>>, vector<1x16xf32>
    %200 = vector.broadcast %199 : vector<1x16xf32> to vector<128x16xf32>
    %201 = arith.addf %198, %200 : vector<128x16xf32>
    %cst_74 = arith.constant 0.000000e+00 : f32
    %202 = vector.broadcast %cst_74 : f32 to vector<128x16xf32>
    %203 = arith.maximumf %201, %202 : vector<128x16xf32>
    %cst_75 = arith.constant 0.000000e+00 : f32
    %204 = vector.broadcast %cst_75 : f32 to vector<16x16xf32>
    %205 = tpu.concatenate %204, %203, %204 in 0 : vector<16x16xf32>, vector<128x16xf32>, vector<16x16xf32> -> vector<160x16xf32>
    %cst_76 = arith.constant 0.000000e+00 : f32
    %206 = vector.broadcast %cst_76 : f32 to vector<128x64xf32>
    %207 = vector.extract_strided_slice %205 {offsets = [7, 0], sizes = [128, 16], strides = [1, 1]} : vector<160x16xf32> to vector<128x16xf32>
    %208 = vector.broadcast %27 : vector<128x1xf32> to vector<128x16xf32>
    %209 = arith.mulf %207, %208 : vector<128x16xf32>
    %210 = arith.truncf %209 : vector<128x16xf32> to vector<128x16xbf16>
    %c0_77 = arith.constant 0 : index
    %c0_78 = arith.constant 0 : index
    %c0_79 = arith.constant 0 : index
    %211 = vector.load %arg4[%c0_77, %c0_78, %c0_79] : memref<9x16x64xbf16, #tpu.memory_space<vmem>>, vector<1x16x64xbf16>
    %212 = vector.shape_cast %211 : vector<1x16x64xbf16> to vector<16x64xbf16>
    %cst_80 = arith.constant dense<0.000000e+00> : vector<128x64xf32>
    %213 = tpu.matmul %210, %212, %cst_80 {dimension_numbers = #tpu.dot_dimension_numbers<[1], [0], [0], [1], [0, 0, 1, 1], [], []>} : vector<128x16xbf16>, vector<16x64xbf16>, vector<128x64xf32> -> vector<128x64xf32>
    %214 = arith.addf %206, %213 : vector<128x64xf32>
    %215 = vector.extract_strided_slice %205 {offsets = [8, 0], sizes = [128, 16], strides = [1, 1]} : vector<160x16xf32> to vector<128x16xf32>
    %216 = vector.broadcast %48 : vector<128x1xf32> to vector<128x16xf32>
    %217 = arith.mulf %215, %216 : vector<128x16xf32>
    %218 = arith.truncf %217 : vector<128x16xf32> to vector<128x16xbf16>
    %c1 = arith.constant 1 : index
    %c0_81 = arith.constant 0 : index
    %c0_82 = arith.constant 0 : index
    %219 = vector.load %arg4[%c1, %c0_81, %c0_82] : memref<9x16x64xbf16, #tpu.memory_space<vmem>>, vector<1x16x64xbf16>
    %220 = vector.shape_cast %219 : vector<1x16x64xbf16> to vector<16x64xbf16>
    %cst_83 = arith.constant dense<0.000000e+00> : vector<128x64xf32>
    %221 = tpu.matmul %218, %220, %cst_83 {dimension_numbers = #tpu.dot_dimension_numbers<[1], [0], [0], [1], [0, 0, 1, 1], [], []>} : vector<128x16xbf16>, vector<16x64xbf16>, vector<128x64xf32> -> vector<128x64xf32>
    %222 = arith.addf %214, %221 : vector<128x64xf32>
    %223 = vector.extract_strided_slice %205 {offsets = [9, 0], sizes = [128, 16], strides = [1, 1]} : vector<160x16xf32> to vector<128x16xf32>
    %224 = vector.broadcast %69 : vector<128x1xf32> to vector<128x16xf32>
    %225 = arith.mulf %223, %224 : vector<128x16xf32>
    %226 = arith.truncf %225 : vector<128x16xf32> to vector<128x16xbf16>
    %c2 = arith.constant 2 : index
    %c0_84 = arith.constant 0 : index
    %c0_85 = arith.constant 0 : index
    %227 = vector.load %arg4[%c2, %c0_84, %c0_85] : memref<9x16x64xbf16, #tpu.memory_space<vmem>>, vector<1x16x64xbf16>
    %228 = vector.shape_cast %227 : vector<1x16x64xbf16> to vector<16x64xbf16>
    %cst_86 = arith.constant dense<0.000000e+00> : vector<128x64xf32>
    %229 = tpu.matmul %226, %228, %cst_86 {dimension_numbers = #tpu.dot_dimension_numbers<[1], [0], [0], [1], [0, 0, 1, 1], [], []>} : vector<128x16xbf16>, vector<16x64xbf16>, vector<128x64xf32> -> vector<128x64xf32>
    %230 = arith.addf %222, %229 : vector<128x64xf32>
    %231 = vector.extract_strided_slice %205 {offsets = [15, 0], sizes = [128, 16], strides = [1, 1]} : vector<160x16xf32> to vector<128x16xf32>
    %232 = vector.broadcast %90 : vector<128x1xf32> to vector<128x16xf32>
    %233 = arith.mulf %231, %232 : vector<128x16xf32>
    %234 = arith.truncf %233 : vector<128x16xf32> to vector<128x16xbf16>
    %c3 = arith.constant 3 : index
    %c0_87 = arith.constant 0 : index
    %c0_88 = arith.constant 0 : index
    %235 = vector.load %arg4[%c3, %c0_87, %c0_88] : memref<9x16x64xbf16, #tpu.memory_space<vmem>>, vector<1x16x64xbf16>
    %236 = vector.shape_cast %235 : vector<1x16x64xbf16> to vector<16x64xbf16>
    %cst_89 = arith.constant dense<0.000000e+00> : vector<128x64xf32>
    %237 = tpu.matmul %234, %236, %cst_89 {dimension_numbers = #tpu.dot_dimension_numbers<[1], [0], [0], [1], [0, 0, 1, 1], [], []>} : vector<128x16xbf16>, vector<16x64xbf16>, vector<128x64xf32> -> vector<128x64xf32>
    %238 = arith.addf %230, %237 : vector<128x64xf32>
    %239 = vector.extract_strided_slice %205 {offsets = [16, 0], sizes = [128, 16], strides = [1, 1]} : vector<160x16xf32> to vector<128x16xf32>
    %240 = vector.broadcast %111 : vector<128x1xf32> to vector<128x16xf32>
    %241 = arith.mulf %239, %240 : vector<128x16xf32>
    %242 = arith.truncf %241 : vector<128x16xf32> to vector<128x16xbf16>
    %c4 = arith.constant 4 : index
    %c0_90 = arith.constant 0 : index
    %c0_91 = arith.constant 0 : index
    %243 = vector.load %arg4[%c4, %c0_90, %c0_91] : memref<9x16x64xbf16, #tpu.memory_space<vmem>>, vector<1x16x64xbf16>
    %244 = vector.shape_cast %243 : vector<1x16x64xbf16> to vector<16x64xbf16>
    %cst_92 = arith.constant dense<0.000000e+00> : vector<128x64xf32>
    %245 = tpu.matmul %242, %244, %cst_92 {dimension_numbers = #tpu.dot_dimension_numbers<[1], [0], [0], [1], [0, 0, 1, 1], [], []>} : vector<128x16xbf16>, vector<16x64xbf16>, vector<128x64xf32> -> vector<128x64xf32>
    %246 = arith.addf %238, %245 : vector<128x64xf32>
    %247 = vector.extract_strided_slice %205 {offsets = [17, 0], sizes = [128, 16], strides = [1, 1]} : vector<160x16xf32> to vector<128x16xf32>
    %248 = vector.broadcast %132 : vector<128x1xf32> to vector<128x16xf32>
    %249 = arith.mulf %247, %248 : vector<128x16xf32>
    %250 = arith.truncf %249 : vector<128x16xf32> to vector<128x16xbf16>
    %c5 = arith.constant 5 : index
    %c0_93 = arith.constant 0 : index
    %c0_94 = arith.constant 0 : index
    %251 = vector.load %arg4[%c5, %c0_93, %c0_94] : memref<9x16x64xbf16, #tpu.memory_space<vmem>>, vector<1x16x64xbf16>
    %252 = vector.shape_cast %251 : vector<1x16x64xbf16> to vector<16x64xbf16>
    %cst_95 = arith.constant dense<0.000000e+00> : vector<128x64xf32>
    %253 = tpu.matmul %250, %252, %cst_95 {dimension_numbers = #tpu.dot_dimension_numbers<[1], [0], [0], [1], [0, 0, 1, 1], [], []>} : vector<128x16xbf16>, vector<16x64xbf16>, vector<128x64xf32> -> vector<128x64xf32>
    %254 = arith.addf %246, %253 : vector<128x64xf32>
    %255 = vector.extract_strided_slice %205 {offsets = [23, 0], sizes = [128, 16], strides = [1, 1]} : vector<160x16xf32> to vector<128x16xf32>
    %256 = vector.broadcast %153 : vector<128x1xf32> to vector<128x16xf32>
    %257 = arith.mulf %255, %256 : vector<128x16xf32>
    %258 = arith.truncf %257 : vector<128x16xf32> to vector<128x16xbf16>
    %c6 = arith.constant 6 : index
    %c0_96 = arith.constant 0 : index
    %c0_97 = arith.constant 0 : index
    %259 = vector.load %arg4[%c6, %c0_96, %c0_97] : memref<9x16x64xbf16, #tpu.memory_space<vmem>>, vector<1x16x64xbf16>
    %260 = vector.shape_cast %259 : vector<1x16x64xbf16> to vector<16x64xbf16>
    %cst_98 = arith.constant dense<0.000000e+00> : vector<128x64xf32>
    %261 = tpu.matmul %258, %260, %cst_98 {dimension_numbers = #tpu.dot_dimension_numbers<[1], [0], [0], [1], [0, 0, 1, 1], [], []>} : vector<128x16xbf16>, vector<16x64xbf16>, vector<128x64xf32> -> vector<128x64xf32>
    %262 = arith.addf %254, %261 : vector<128x64xf32>
    %263 = vector.extract_strided_slice %205 {offsets = [24, 0], sizes = [128, 16], strides = [1, 1]} : vector<160x16xf32> to vector<128x16xf32>
    %264 = vector.broadcast %174 : vector<128x1xf32> to vector<128x16xf32>
    %265 = arith.mulf %263, %264 : vector<128x16xf32>
    %266 = arith.truncf %265 : vector<128x16xf32> to vector<128x16xbf16>
    %c7 = arith.constant 7 : index
    %c0_99 = arith.constant 0 : index
    %c0_100 = arith.constant 0 : index
    %267 = vector.load %arg4[%c7, %c0_99, %c0_100] : memref<9x16x64xbf16, #tpu.memory_space<vmem>>, vector<1x16x64xbf16>
    %268 = vector.shape_cast %267 : vector<1x16x64xbf16> to vector<16x64xbf16>
    %cst_101 = arith.constant dense<0.000000e+00> : vector<128x64xf32>
    %269 = tpu.matmul %266, %268, %cst_101 {dimension_numbers = #tpu.dot_dimension_numbers<[1], [0], [0], [1], [0, 0, 1, 1], [], []>} : vector<128x16xbf16>, vector<16x64xbf16>, vector<128x64xf32> -> vector<128x64xf32>
    %270 = arith.addf %262, %269 : vector<128x64xf32>
    %271 = vector.extract_strided_slice %205 {offsets = [25, 0], sizes = [128, 16], strides = [1, 1]} : vector<160x16xf32> to vector<128x16xf32>
    %272 = vector.broadcast %195 : vector<128x1xf32> to vector<128x16xf32>
    %273 = arith.mulf %271, %272 : vector<128x16xf32>
    %274 = arith.truncf %273 : vector<128x16xf32> to vector<128x16xbf16>
    %c8 = arith.constant 8 : index
    %c0_102 = arith.constant 0 : index
    %c0_103 = arith.constant 0 : index
    %275 = vector.load %arg4[%c8, %c0_102, %c0_103] : memref<9x16x64xbf16, #tpu.memory_space<vmem>>, vector<1x16x64xbf16>
    %276 = vector.shape_cast %275 : vector<1x16x64xbf16> to vector<16x64xbf16>
    %cst_104 = arith.constant dense<0.000000e+00> : vector<128x64xf32>
    %277 = tpu.matmul %274, %276, %cst_104 {dimension_numbers = #tpu.dot_dimension_numbers<[1], [0], [0], [1], [0, 0, 1, 1], [], []>} : vector<128x16xbf16>, vector<16x64xbf16>, vector<128x64xf32> -> vector<128x64xf32>
    %278 = arith.addf %270, %277 : vector<128x64xf32>
    %c0_105 = arith.constant 0 : index
    %c0_106 = arith.constant 0 : index
    %279 = vector.load %arg5[%c0_105, %c0_106] : memref<1x64xf32, #tpu.memory_space<vmem>>, vector<1x64xf32>
    %280 = vector.broadcast %279 : vector<1x64xf32> to vector<128x64xf32>
    %281 = arith.addf %278, %280 : vector<128x64xf32>
    %cst_107 = arith.constant 0.000000e+00 : f32
    %282 = vector.broadcast %cst_107 : f32 to vector<128x64xf32>
    %283 = arith.maximumf %281, %282 : vector<128x64xf32>
    %cst_108 = arith.constant 0.000000e+00 : f32
    %284 = vector.broadcast %cst_108 : f32 to vector<16x64xf32>
    %285 = tpu.concatenate %284, %283, %284 in 0 : vector<16x64xf32>, vector<128x64xf32>, vector<16x64xf32> -> vector<160x64xf32>
    %cst_109 = arith.constant 0.000000e+00 : f32
    %286 = vector.broadcast %cst_109 : f32 to vector<128x32xf32>
    %287 = vector.extract_strided_slice %285 {offsets = [7, 0], sizes = [128, 64], strides = [1, 1]} : vector<160x64xf32> to vector<128x64xf32>
    %288 = vector.broadcast %27 : vector<128x1xf32> to vector<128x64xf32>
    %289 = arith.mulf %287, %288 : vector<128x64xf32>
    %290 = arith.truncf %289 : vector<128x64xf32> to vector<128x64xbf16>
    %c0_110 = arith.constant 0 : index
    %c0_111 = arith.constant 0 : index
    %c0_112 = arith.constant 0 : index
    %291 = vector.load %arg6[%c0_110, %c0_111, %c0_112] : memref<9x64x32xbf16, #tpu.memory_space<vmem>>, vector<1x64x32xbf16>
    %292 = vector.shape_cast %291 : vector<1x64x32xbf16> to vector<64x32xbf16>
    %cst_113 = arith.constant dense<0.000000e+00> : vector<128x32xf32>
    %293 = tpu.matmul %290, %292, %cst_113 {dimension_numbers = #tpu.dot_dimension_numbers<[1], [0], [0], [1], [0, 0, 1, 1], [], []>} : vector<128x64xbf16>, vector<64x32xbf16>, vector<128x32xf32> -> vector<128x32xf32>
    %294 = arith.addf %286, %293 : vector<128x32xf32>
    %295 = vector.extract_strided_slice %285 {offsets = [8, 0], sizes = [128, 64], strides = [1, 1]} : vector<160x64xf32> to vector<128x64xf32>
    %296 = vector.broadcast %48 : vector<128x1xf32> to vector<128x64xf32>
    %297 = arith.mulf %295, %296 : vector<128x64xf32>
    %298 = arith.truncf %297 : vector<128x64xf32> to vector<128x64xbf16>
    %c1_114 = arith.constant 1 : index
    %c0_115 = arith.constant 0 : index
    %c0_116 = arith.constant 0 : index
    %299 = vector.load %arg6[%c1_114, %c0_115, %c0_116] : memref<9x64x32xbf16, #tpu.memory_space<vmem>>, vector<1x64x32xbf16>
    %300 = vector.shape_cast %299 : vector<1x64x32xbf16> to vector<64x32xbf16>
    %cst_117 = arith.constant dense<0.000000e+00> : vector<128x32xf32>
    %301 = tpu.matmul %298, %300, %cst_117 {dimension_numbers = #tpu.dot_dimension_numbers<[1], [0], [0], [1], [0, 0, 1, 1], [], []>} : vector<128x64xbf16>, vector<64x32xbf16>, vector<128x32xf32> -> vector<128x32xf32>
    %302 = arith.addf %294, %301 : vector<128x32xf32>
    %303 = vector.extract_strided_slice %285 {offsets = [9, 0], sizes = [128, 64], strides = [1, 1]} : vector<160x64xf32> to vector<128x64xf32>
    %304 = vector.broadcast %69 : vector<128x1xf32> to vector<128x64xf32>
    %305 = arith.mulf %303, %304 : vector<128x64xf32>
    %306 = arith.truncf %305 : vector<128x64xf32> to vector<128x64xbf16>
    %c2_118 = arith.constant 2 : index
    %c0_119 = arith.constant 0 : index
    %c0_120 = arith.constant 0 : index
    %307 = vector.load %arg6[%c2_118, %c0_119, %c0_120] : memref<9x64x32xbf16, #tpu.memory_space<vmem>>, vector<1x64x32xbf16>
    %308 = vector.shape_cast %307 : vector<1x64x32xbf16> to vector<64x32xbf16>
    %cst_121 = arith.constant dense<0.000000e+00> : vector<128x32xf32>
    %309 = tpu.matmul %306, %308, %cst_121 {dimension_numbers = #tpu.dot_dimension_numbers<[1], [0], [0], [1], [0, 0, 1, 1], [], []>} : vector<128x64xbf16>, vector<64x32xbf16>, vector<128x32xf32> -> vector<128x32xf32>
    %310 = arith.addf %302, %309 : vector<128x32xf32>
    %311 = vector.extract_strided_slice %285 {offsets = [15, 0], sizes = [128, 64], strides = [1, 1]} : vector<160x64xf32> to vector<128x64xf32>
    %312 = vector.broadcast %90 : vector<128x1xf32> to vector<128x64xf32>
    %313 = arith.mulf %311, %312 : vector<128x64xf32>
    %314 = arith.truncf %313 : vector<128x64xf32> to vector<128x64xbf16>
    %c3_122 = arith.constant 3 : index
    %c0_123 = arith.constant 0 : index
    %c0_124 = arith.constant 0 : index
    %315 = vector.load %arg6[%c3_122, %c0_123, %c0_124] : memref<9x64x32xbf16, #tpu.memory_space<vmem>>, vector<1x64x32xbf16>
    %316 = vector.shape_cast %315 : vector<1x64x32xbf16> to vector<64x32xbf16>
    %cst_125 = arith.constant dense<0.000000e+00> : vector<128x32xf32>
    %317 = tpu.matmul %314, %316, %cst_125 {dimension_numbers = #tpu.dot_dimension_numbers<[1], [0], [0], [1], [0, 0, 1, 1], [], []>} : vector<128x64xbf16>, vector<64x32xbf16>, vector<128x32xf32> -> vector<128x32xf32>
    %318 = arith.addf %310, %317 : vector<128x32xf32>
    %319 = vector.extract_strided_slice %285 {offsets = [16, 0], sizes = [128, 64], strides = [1, 1]} : vector<160x64xf32> to vector<128x64xf32>
    %320 = vector.broadcast %111 : vector<128x1xf32> to vector<128x64xf32>
    %321 = arith.mulf %319, %320 : vector<128x64xf32>
    %322 = arith.truncf %321 : vector<128x64xf32> to vector<128x64xbf16>
    %c4_126 = arith.constant 4 : index
    %c0_127 = arith.constant 0 : index
    %c0_128 = arith.constant 0 : index
    %323 = vector.load %arg6[%c4_126, %c0_127, %c0_128] : memref<9x64x32xbf16, #tpu.memory_space<vmem>>, vector<1x64x32xbf16>
    %324 = vector.shape_cast %323 : vector<1x64x32xbf16> to vector<64x32xbf16>
    %cst_129 = arith.constant dense<0.000000e+00> : vector<128x32xf32>
    %325 = tpu.matmul %322, %324, %cst_129 {dimension_numbers = #tpu.dot_dimension_numbers<[1], [0], [0], [1], [0, 0, 1, 1], [], []>} : vector<128x64xbf16>, vector<64x32xbf16>, vector<128x32xf32> -> vector<128x32xf32>
    %326 = arith.addf %318, %325 : vector<128x32xf32>
    %327 = vector.extract_strided_slice %285 {offsets = [17, 0], sizes = [128, 64], strides = [1, 1]} : vector<160x64xf32> to vector<128x64xf32>
    %328 = vector.broadcast %132 : vector<128x1xf32> to vector<128x64xf32>
    %329 = arith.mulf %327, %328 : vector<128x64xf32>
    %330 = arith.truncf %329 : vector<128x64xf32> to vector<128x64xbf16>
    %c5_130 = arith.constant 5 : index
    %c0_131 = arith.constant 0 : index
    %c0_132 = arith.constant 0 : index
    %331 = vector.load %arg6[%c5_130, %c0_131, %c0_132] : memref<9x64x32xbf16, #tpu.memory_space<vmem>>, vector<1x64x32xbf16>
    %332 = vector.shape_cast %331 : vector<1x64x32xbf16> to vector<64x32xbf16>
    %cst_133 = arith.constant dense<0.000000e+00> : vector<128x32xf32>
    %333 = tpu.matmul %330, %332, %cst_133 {dimension_numbers = #tpu.dot_dimension_numbers<[1], [0], [0], [1], [0, 0, 1, 1], [], []>} : vector<128x64xbf16>, vector<64x32xbf16>, vector<128x32xf32> -> vector<128x32xf32>
    %334 = arith.addf %326, %333 : vector<128x32xf32>
    %335 = vector.extract_strided_slice %285 {offsets = [23, 0], sizes = [128, 64], strides = [1, 1]} : vector<160x64xf32> to vector<128x64xf32>
    %336 = vector.broadcast %153 : vector<128x1xf32> to vector<128x64xf32>
    %337 = arith.mulf %335, %336 : vector<128x64xf32>
    %338 = arith.truncf %337 : vector<128x64xf32> to vector<128x64xbf16>
    %c6_134 = arith.constant 6 : index
    %c0_135 = arith.constant 0 : index
    %c0_136 = arith.constant 0 : index
    %339 = vector.load %arg6[%c6_134, %c0_135, %c0_136] : memref<9x64x32xbf16, #tpu.memory_space<vmem>>, vector<1x64x32xbf16>
    %340 = vector.shape_cast %339 : vector<1x64x32xbf16> to vector<64x32xbf16>
    %cst_137 = arith.constant dense<0.000000e+00> : vector<128x32xf32>
    %341 = tpu.matmul %338, %340, %cst_137 {dimension_numbers = #tpu.dot_dimension_numbers<[1], [0], [0], [1], [0, 0, 1, 1], [], []>} : vector<128x64xbf16>, vector<64x32xbf16>, vector<128x32xf32> -> vector<128x32xf32>
    %342 = arith.addf %334, %341 : vector<128x32xf32>
    %343 = vector.extract_strided_slice %285 {offsets = [24, 0], sizes = [128, 64], strides = [1, 1]} : vector<160x64xf32> to vector<128x64xf32>
    %344 = vector.broadcast %174 : vector<128x1xf32> to vector<128x64xf32>
    %345 = arith.mulf %343, %344 : vector<128x64xf32>
    %346 = arith.truncf %345 : vector<128x64xf32> to vector<128x64xbf16>
    %c7_138 = arith.constant 7 : index
    %c0_139 = arith.constant 0 : index
    %c0_140 = arith.constant 0 : index
    %347 = vector.load %arg6[%c7_138, %c0_139, %c0_140] : memref<9x64x32xbf16, #tpu.memory_space<vmem>>, vector<1x64x32xbf16>
    %348 = vector.shape_cast %347 : vector<1x64x32xbf16> to vector<64x32xbf16>
    %cst_141 = arith.constant dense<0.000000e+00> : vector<128x32xf32>
    %349 = tpu.matmul %346, %348, %cst_141 {dimension_numbers = #tpu.dot_dimension_numbers<[1], [0], [0], [1], [0, 0, 1, 1], [], []>} : vector<128x64xbf16>, vector<64x32xbf16>, vector<128x32xf32> -> vector<128x32xf32>
    %350 = arith.addf %342, %349 : vector<128x32xf32>
    %351 = vector.extract_strided_slice %285 {offsets = [25, 0], sizes = [128, 64], strides = [1, 1]} : vector<160x64xf32> to vector<128x64xf32>
    %352 = vector.broadcast %195 : vector<128x1xf32> to vector<128x64xf32>
    %353 = arith.mulf %351, %352 : vector<128x64xf32>
    %354 = arith.truncf %353 : vector<128x64xf32> to vector<128x64xbf16>
    %c8_142 = arith.constant 8 : index
    %c0_143 = arith.constant 0 : index
    %c0_144 = arith.constant 0 : index
    %355 = vector.load %arg6[%c8_142, %c0_143, %c0_144] : memref<9x64x32xbf16, #tpu.memory_space<vmem>>, vector<1x64x32xbf16>
    %356 = vector.shape_cast %355 : vector<1x64x32xbf16> to vector<64x32xbf16>
    %cst_145 = arith.constant dense<0.000000e+00> : vector<128x32xf32>
    %357 = tpu.matmul %354, %356, %cst_145 {dimension_numbers = #tpu.dot_dimension_numbers<[1], [0], [0], [1], [0, 0, 1, 1], [], []>} : vector<128x64xbf16>, vector<64x32xbf16>, vector<128x32xf32> -> vector<128x32xf32>
    %358 = arith.addf %350, %357 : vector<128x32xf32>
    %c0_146 = arith.constant 0 : index
    %c0_147 = arith.constant 0 : index
    %359 = vector.load %arg7[%c0_146, %c0_147] : memref<1x32xf32, #tpu.memory_space<vmem>>, vector<1x32xf32>
    %360 = vector.broadcast %359 : vector<1x32xf32> to vector<128x32xf32>
    %361 = arith.addf %358, %360 : vector<128x32xf32>
    %362 = arith.truncf %361 : vector<128x32xf32> to vector<128x32xbf16>
    %c0_148 = arith.constant 0 : index
    %c0_149 = arith.constant 0 : index
    %363 = vector.load %arg8[%c0_148, %c0_149] : memref<32x32xbf16, #tpu.memory_space<vmem>>, vector<32x32xbf16>
    %cst_150 = arith.constant dense<0.000000e+00> : vector<128x32xf32>
    %364 = tpu.matmul %362, %363, %cst_150 {dimension_numbers = #tpu.dot_dimension_numbers<[1], [0], [0], [1], [0, 0, 1, 1], [], []>} : vector<128x32xbf16>, vector<32x32xbf16>, vector<128x32xf32> -> vector<128x32xf32>
    %c0_151 = arith.constant 0 : index
    %c0_152 = arith.constant 0 : index
    %365 = vector.load %arg9[%c0_151, %c0_152] : memref<1x32xf32, #tpu.memory_space<vmem>>, vector<1x32xf32>
    %366 = vector.broadcast %365 : vector<1x32xf32> to vector<128x32xf32>
    %367 = arith.addf %364, %366 : vector<128x32xf32>
    %c0_153 = arith.constant 0 : index
    %c0_154 = arith.constant 0 : index
    %368 = vector.load %arg10[%c0_153, %c0_154] : memref<16x32xf32, #tpu.memory_space<vmem>>, vector<16x32xf32>
    %369 = arith.mulf %368, %368 : vector<16x32xf32>
    %cst_155 = arith.constant dense<0.000000e+00> : vector<16xf32>
    %370 = vector.multi_reduction <add>, %369, %cst_155 [1] : vector<16x32xf32> to vector<16xf32>
    %371 = vector.shape_cast %370 : vector<16xf32> to vector<16x1xf32>
    %cst_156 = arith.constant dense<0.000000e+00> : vector<16x128xf32>
    %372 = tpu.matmul %368, %367, %cst_156 {dimension_numbers = #tpu.dot_dimension_numbers<[1], [1], [0], [0], [0, 0, 1, 0], [], []>} : vector<16x32xf32>, vector<128x32xf32>, vector<16x128xf32> -> vector<16x128xf32>
    %cst_157 = arith.constant 2.000000e+00 : f32
    %373 = vector.broadcast %cst_157 : f32 to vector<16x128xf32>
    %374 = arith.mulf %373, %372 : vector<16x128xf32>
    %375 = vector.broadcast %371 : vector<16x1xf32> to vector<16x128xf32>
    %376 = arith.subf %375, %374 : vector<16x128xf32>
    %cst_158 = arith.constant dense<0x7F800000> : vector<128xf32>
    %377 = vector.multi_reduction <minimumf>, %376, %cst_158 [0] : vector<16x128xf32> to vector<128xf32>
    %378 = vector.shape_cast %377 : vector<128xf32> to vector<1x128xf32>
    %379 = tpu.iota {dimensions = array<i32: 0>} : vector<16x128xi32>
    %380 = vector.broadcast %378 : vector<1x128xf32> to vector<16x128xf32>
    %381 = arith.cmpf ole, %376, %380 : vector<16x128xf32>
    %c2147483647_i32 = arith.constant 2147483647 : i32
    %382 = vector.broadcast %c2147483647_i32 : i32 to vector<16x128xi32>
    %383 = arith.select %381, %379, %382 : vector<16x128xi1>, vector<16x128xi32>
    %cst_159 = arith.constant dense<2147483647> : vector<128xi32>
    %384 = vector.multi_reduction <minsi>, %383, %cst_159 [0] : vector<16x128xi32> to vector<128xi32>
    %385 = vector.shape_cast %384 : vector<128xi32> to vector<1x128xi32>
    %c0_160 = arith.constant 0 : index
    %c0_161 = arith.constant 0 : index
    %386 = vector.load %arg11[%c0_160, %c0_161] : memref<1x128xi32, #tpu.memory_space<vmem>>, vector<1x128xi32>
    tpu.vector_store %arg11[%c0_160, %c0_161], %385 {strides = array<i32>} : memref<1x128xi32, #tpu.memory_space<vmem>>, vector<1x128xi32>,
    return
  }
  func.func @transform_0(%arg0: i32) -> (i32, i32) {
    %c0_i32 = arith.constant 0 : i32
    %c0_i32_0 = arith.constant 0 : i32
    %c0_i32_1 = arith.constant 0 : i32
    return %c0_i32, %c0_i32_0 : i32, i32
  }
  func.func @transform_1(%arg0: i32) -> (i32, i32) {
    %c0_i32 = arith.constant 0 : i32
    %c0_i32_0 = arith.constant 0 : i32
    %c0_i32_1 = arith.constant 0 : i32
    return %c0_i32, %c0_i32_0 : i32, i32
  }
  func.func @transform_2(%arg0: i32) -> (i32, i32) {
    %c0_i32 = arith.constant 0 : i32
    %c0_i32_0 = arith.constant 0 : i32
    %c0_i32_1 = arith.constant 0 : i32
    return %c0_i32, %c0_i32_0 : i32, i32
  }
  func.func @transform_3(%arg0: i32) -> (i32, i32, i32) {
    %c0_i32 = arith.constant 0 : i32
    %c0_i32_0 = arith.constant 0 : i32
    %c0_i32_1 = arith.constant 0 : i32
    %c0_i32_2 = arith.constant 0 : i32
    return %c0_i32, %c0_i32_0, %c0_i32_1 : i32, i32, i32
  }
  func.func @transform_4(%arg0: i32) -> (i32, i32) {
    %c0_i32 = arith.constant 0 : i32
    %c0_i32_0 = arith.constant 0 : i32
    %c0_i32_1 = arith.constant 0 : i32
    return %c0_i32, %c0_i32_0 : i32, i32
  }
  func.func @transform_5(%arg0: i32) -> (i32, i32, i32) {
    %c0_i32 = arith.constant 0 : i32
    %c0_i32_0 = arith.constant 0 : i32
    %c0_i32_1 = arith.constant 0 : i32
    %c0_i32_2 = arith.constant 0 : i32
    return %c0_i32, %c0_i32_0, %c0_i32_1 : i32, i32, i32
  }
  func.func @transform_6(%arg0: i32) -> (i32, i32) {
    %c0_i32 = arith.constant 0 : i32
    %c0_i32_0 = arith.constant 0 : i32
    %c0_i32_1 = arith.constant 0 : i32
    return %c0_i32, %c0_i32_0 : i32, i32
  }
  func.func @transform_7(%arg0: i32) -> (i32, i32) {
    %c0_i32 = arith.constant 0 : i32
    %c0_i32_0 = arith.constant 0 : i32
    %c0_i32_1 = arith.constant 0 : i32
    return %c0_i32, %c0_i32_0 : i32, i32
  }
  func.func @transform_8(%arg0: i32) -> (i32, i32) {
    %c0_i32 = arith.constant 0 : i32
    %c0_i32_0 = arith.constant 0 : i32
    %c0_i32_1 = arith.constant 0 : i32
    return %c0_i32, %c0_i32_0 : i32, i32
  }
  func.func @transform_9(%arg0: i32) -> (i32, i32) {
    %c0_i32 = arith.constant 0 : i32
    %c0_i32_0 = arith.constant 0 : i32
    %c0_i32_1 = arith.constant 0 : i32
    return %c0_i32, %c0_i32_0 : i32, i32
  }
  func.func @transform_10(%arg0: i32) -> (i32, i32) {
    %c0_i32 = arith.constant 0 : i32
    %c0_i32_0 = arith.constant 0 : i32
    %c0_i32_1 = arith.constant 0 : i32
    return %c0_i32, %c0_i32_0 : i32, i32
  }
}

</mosaic_0001>

<llo_original>
// kernel: forward.1
$region0: #{forward.1}
  #allocation0 [shape = 'u32[]', space=smem, size = 0x4, offset = 0x4, fixed_abs, tag = 'smem constant byte address 0x4 - core index']
  #allocation1 [shape = 'u32[144,128]{1,0:T(1,128)}', space=vmem, size = 0x12000, scoped, tag = 'internal scratch']
  %s0 = inlined_call_operand.vmem [shape: bf16[128,64], index: 0, kind: input, shape index: {}]
  %s1 = inlined_call_operand.vmem [shape: bf16[64,16], index: 1, kind: input, shape index: {}]
  %s2 = inlined_call_operand.vmem [shape: f32[1,16], index: 2, kind: input, shape index: {}]
  %s3 = inlined_call_operand.vmem [shape: bf16[9,16,64], index: 3, kind: input, shape index: {}]
  %s4 = inlined_call_operand.vmem [shape: f32[1,64], index: 4, kind: input, shape index: {}]
  %s5 = inlined_call_operand.vmem [shape: bf16[9,64,32], index: 5, kind: input, shape index: {}]
  %s6 = inlined_call_operand.vmem [shape: f32[1,32], index: 6, kind: input, shape index: {}]
  %s7 = inlined_call_operand.vmem [shape: bf16[32,32], index: 7, kind: input, shape index: {}]
  %s8 = inlined_call_operand.vmem [shape: f32[1,32], index: 8, kind: input, shape index: {}]
  %s9 = inlined_call_operand.vmem [shape: f32[16,32], index: 9, kind: input, shape index: {}]
  %s10 = inlined_call_operand.vmem [shape: s32[1,128], index: 10, kind: output, shape index: {}]
  %s11 = sld [smem:[#allocation0]]
  $region50: #{forward.1} parent=0
    _
  %s13 = ssub.s32 1, %s11
  %s14 = scalar_select 0, %s13, %s11
  // Predicated region
  $region2: #{forward.1} parent=0 // pred_check
    _
  $region3: #{forward.1} parent=0 // pred_check_branch
    %16 = sbr.rel (0) target = $region5
  $region4: #{forward.1} parent=0 // pred_region
    _
  $region5: #{forward.1} parent=0 // pred_fallthru
    _
  // Predicated region
  $region6: #{forward.1} parent=0 // pred_check
    _
  $region7: #{forward.1} parent=0 // pred_check_branch
    %18 = sbr.rel (0) target = $region9
  $region8: #{forward.1} parent=0 // pred_region
    _
  $region9: #{forward.1} parent=0 // pred_fallthru
    _
  // Predicated region
  $region10: #{forward.1} parent=0 // pred_check
    _
  $region11: #{forward.1} parent=0 // pred_check_branch
    %20 = sbr.rel (0) target = $region13
  $region12: #{forward.1} parent=0 // pred_region
    _
  $region13: #{forward.1} parent=0 // pred_fallthru
    _
  // Predicated region
  $region14: #{forward.1} parent=0 // pred_check
    _
  $region15: #{forward.1} parent=0 // pred_check_branch
    %22 = sbr.rel (0) target = $region17
  $region16: #{forward.1} parent=0 // pred_region
    _
  $region17: #{forward.1} parent=0 // pred_fallthru
    _
  // Predicated region
  $region18: #{forward.1} parent=0 // pred_check
    _
  $region19: #{forward.1} parent=0 // pred_check_branch
    %24 = sbr.rel (0) target = $region21
  $region20: #{forward.1} parent=0 // pred_region
    _
  $region21: #{forward.1} parent=0 // pred_fallthru
    _
  // Predicated region
  $region22: #{forward.1} parent=0 // pred_check
    _
  $region23: #{forward.1} parent=0 // pred_check_branch
    %26 = sbr.rel (0) target = $region25
  $region24: #{forward.1} parent=0 // pred_region
    _
  $region25: #{forward.1} parent=0 // pred_fallthru
    _
  // Predicated region
  $region26: #{forward.1} parent=0 // pred_check
    _
  $region27: #{forward.1} parent=0 // pred_check_branch
    %28 = sbr.rel (0) target = $region29
  $region28: #{forward.1} parent=0 // pred_region
    _
  $region29: #{forward.1} parent=0 // pred_fallthru
    _
  // Predicated region
  $region30: #{forward.1} parent=0 // pred_check
    _
  $region31: #{forward.1} parent=0 // pred_check_branch
    %30 = sbr.rel (0) target = $region33
  $region32: #{forward.1} parent=0 // pred_region
    _
  $region33: #{forward.1} parent=0 // pred_fallthru
    _
  // Predicated region
  $region34: #{forward.1} parent=0 // pred_check
    _
  $region35: #{forward.1} parent=0 // pred_check_branch
    %32 = sbr.rel (0) target = $region37
  $region36: #{forward.1} parent=0 // pred_region
    _
  $region37: #{forward.1} parent=0 // pred_fallthru
    _
  // Predicated region
  $region38: #{forward.1} parent=0 // pred_check
    _
  $region39: #{forward.1} parent=0 // pred_check_branch
    %34 = sbr.rel (0) target = $region41
  $region40: #{forward.1} parent=0 // pred_region
    _
  $region41: #{forward.1} parent=0 // pred_fallthru
    _
  %v36 = vlaneseq
  %v37 = vshrl.u32 %v36, 7
  %v38 = vadd.s32 %v37, 8
  %v39 = vadd.s32 %v37, 16
  %v40 = vadd.s32 %v37, 24
  %v41 = vadd.s32 %v37, 32
  %v42 = vadd.s32 %v37, 40
  %v43 = vadd.s32 %v37, 48
  %v44 = vadd.s32 %v37, 56
  %v45 = vadd.s32 %v37, 64
  %v46 = vadd.s32 %v37, 72
  %v47 = vadd.s32 %v37, 80
  %v48 = vadd.s32 %v37, 88
  %v49 = vadd.s32 %v37, 96
  %v50 = vadd.s32 %v37, 104
  %v51 = vadd.s32 %v37, 112
  %v52 = vadd.s32 %v37, 120
  %v53 = vand.u32 %v37, 7
  %v54 = vand.u32 %v38, 7
  %v55 = vand.u32 %v39, 7
  %v56 = vand.u32 %v40, 7
  %v57 = vand.u32 %v41, 7
  %v58 = vand.u32 %v42, 7
  %v59 = vand.u32 %v43, 7
  %v60 = vand.u32 %v44, 7
  %v61 = vand.u32 %v45, 7
  %v62 = vand.u32 %v46, 7
  %v63 = vand.u32 %v47, 7
  %v64 = vand.u32 %v48, 7
  %v65 = vand.u32 %v49, 7
  %v66 = vand.u32 %v50, 7
  %v67 = vand.u32 %v51, 7
  %v68 = vand.u32 %v52, 7
  %v69 = vshra.s32 %v37, 3
  %v70 = vshra.s32 %v38, 3
  %v71 = vshra.s32 %v39, 3
  %v72 = vshra.s32 %v40, 3
  %v73 = vshra.s32 %v41, 3
  %v74 = vshra.s32 %v42, 3
  %v75 = vshra.s32 %v43, 3
  %v76 = vshra.s32 %v44, 3
  %v77 = vshra.s32 %v45, 3
  %v78 = vshra.s32 %v46, 3
  %v79 = vshra.s32 %v47, 3
  %v80 = vshra.s32 %v48, 3
  %v81 = vshra.s32 %v49, 3
  %v82 = vshra.s32 %v50, 3
  %v83 = vshra.s32 %v51, 3
  %v84 = vshra.s32 %v52, 3
  %v85 = vand.u32 %v69, 7
  %v86 = vand.u32 %v70, 7
  %v87 = vand.u32 %v71, 7
  %v88 = vand.u32 %v72, 7
  %v89 = vand.u32 %v73, 7
  %v90 = vand.u32 %v74, 7
  %v91 = vand.u32 %v75, 7
  %v92 = vand.u32 %v76, 7
  %v93 = vand.u32 %v77, 7
  %v94 = vand.u32 %v78, 7
  %v95 = vand.u32 %v79, 7
  %v96 = vand.u32 %v80, 7
  %v97 = vand.u32 %v81, 7
  %v98 = vand.u32 %v82, 7
  %v99 = vand.u32 %v83, 7
  %v100 = vand.u32 %v84, 7
  %v101 = vadd.s32 %v85, 4294967295
  %v102 = vadd.s32 %v86, 4294967295
  %v103 = vadd.s32 %v87, 4294967295
  %v104 = vadd.s32 %v88, 4294967295
  %v105 = vadd.s32 %v89, 4294967295
  %v106 = vadd.s32 %v90, 4294967295
  %v107 = vadd.s32 %v91, 4294967295
  %v108 = vadd.s32 %v92, 4294967295
  %v109 = vadd.s32 %v93, 4294967295
  %v110 = vadd.s32 %v94, 4294967295
  %v111 = vadd.s32 %v95, 4294967295
  %v112 = vadd.s32 %v96, 4294967295
  %v113 = vadd.s32 %v97, 4294967295
  %v114 = vadd.s32 %v98, 4294967295
  %v115 = vadd.s32 %v99, 4294967295
  %v116 = vadd.s32 %v100, 4294967295
  %vm117 = vcmp.ge.s32.totalorder %v101, 0
  %vm118 = vcmp.ge.s32.totalorder %v102, 0
  %vm119 = vcmp.ge.s32.totalorder %v103, 0
  %vm120 = vcmp.ge.s32.totalorder %v104, 0
  %vm121 = vcmp.ge.s32.totalorder %v105, 0
  %vm122 = vcmp.ge.s32.totalorder %v106, 0
  %vm123 = vcmp.ge.s32.totalorder %v107, 0
  %vm124 = vcmp.ge.s32.totalorder %v108, 0
  %vm125 = vcmp.ge.s32.totalorder %v109, 0
  %vm126 = vcmp.ge.s32.totalorder %v110, 0
  %vm127 = vcmp.ge.s32.totalorder %v111, 0
  %vm128 = vcmp.ge.s32.totalorder %v112, 0
  %vm129 = vcmp.ge.s32.totalorder %v113, 0
  %vm130 = vcmp.ge.s32.totalorder %v114, 0
  %vm131 = vcmp.ge.s32.totalorder %v115, 0
  %vm132 = vcmp.ge.s32.totalorder %v116, 0
  %vm133 = vcmp.lt.s32.totalorder %v101, 8
  %vm134 = vcmp.lt.s32.totalorder %v102, 8
  %vm135 = vcmp.lt.s32.totalorder %v103, 8
  %vm136 = vcmp.lt.s32.totalorder %v104, 8
  %vm137 = vcmp.lt.s32.totalorder %v105, 8
  %vm138 = vcmp.lt.s32.totalorder %v106, 8
  %vm139 = vcmp.lt.s32.totalorder %v107, 8
  %vm140 = vcmp.lt.s32.totalorder %v108, 8
  %vm141 = vcmp.lt.s32.totalorder %v109, 8
  %vm142 = vcmp.lt.s32.totalorder %v110, 8
  %vm143 = vcmp.lt.s32.totalorder %v111, 8
  %vm144 = vcmp.lt.s32.totalorder %v112, 8
  %vm145 = vcmp.lt.s32.totalorder %v113, 8
  %vm146 = vcmp.lt.s32.totalorder %v114, 8
  %vm147 = vcmp.lt.s32.totalorder %v115, 8
  %vm148 = vcmp.lt.s32.totalorder %v116, 8
  %vm149 = vmand %vm117, %vm133
  %vm150 = vmand %vm118, %vm134
  %vm151 = vmand %vm119, %vm135
  %vm152 = vmand %vm120, %vm136
  %vm153 = vmand %vm121, %vm137
  %vm154 = vmand %vm122, %vm138
  %vm155 = vmand %vm123, %vm139
  %vm156 = vmand %vm124, %vm140
  %vm157 = vmand %vm125, %vm141
  %vm158 = vmand %vm126, %vm142
  %vm159 = vmand %vm127, %vm143
  %vm160 = vmand %vm128, %vm144
  %vm161 = vmand %vm129, %vm145
  %vm162 = vmand %vm130, %vm146
  %vm163 = vmand %vm131, %vm147
  %vm164 = vmand %vm132, %vm148
  %v165 = vadd.s32 %v53, 4294967295
  %v166 = vadd.s32 %v54, 4294967295
  %v167 = vadd.s32 %v55, 4294967295
  %v168 = vadd.s32 %v56, 4294967295
  %v169 = vadd.s32 %v57, 4294967295
  %v170 = vadd.s32 %v58, 4294967295
  %v171 = vadd.s32 %v59, 4294967295
  %v172 = vadd.s32 %v60, 4294967295
  %v173 = vadd.s32 %v61, 4294967295
  %v174 = vadd.s32 %v62, 4294967295
  %v175 = vadd.s32 %v63, 4294967295
  %v176 = vadd.s32 %v64, 4294967295
  %v177 = vadd.s32 %v65, 4294967295
  %v178 = vadd.s32 %v66, 4294967295
  %v179 = vadd.s32 %v67, 4294967295
  %v180 = vadd.s32 %v68, 4294967295
  %vm181 = vcmp.ge.s32.totalorder %v165, 0
  %vm182 = vcmp.ge.s32.totalorder %v166, 0
  %vm183 = vcmp.ge.s32.totalorder %v167, 0
  %vm184 = vcmp.ge.s32.totalorder %v168, 0
  %vm185 = vcmp.ge.s32.totalorder %v169, 0
  %vm186 = vcmp.ge.s32.totalorder %v170, 0
  %vm187 = vcmp.ge.s32.totalorder %v171, 0
  %vm188 = vcmp.ge.s32.totalorder %v172, 0
  %vm189 = vcmp.ge.s32.totalorder %v173, 0
  %vm190 = vcmp.ge.s32.totalorder %v174, 0
  %vm191 = vcmp.ge.s32.totalorder %v175, 0
  %vm192 = vcmp.ge.s32.totalorder %v176, 0
  %vm193 = vcmp.ge.s32.totalorder %v177, 0
  %vm194 = vcmp.ge.s32.totalorder %v178, 0
  %vm195 = vcmp.ge.s32.totalorder %v179, 0
  %vm196 = vcmp.ge.s32.totalorder %v180, 0
  %vm197 = vmand %vm149, %vm181
  %vm198 = vmand %vm150, %vm182
  %vm199 = vmand %vm151, %vm183
  %vm200 = vmand %vm152, %vm184
  %vm201 = vmand %vm153, %vm185
  %vm202 = vmand %vm154, %vm186
  %vm203 = vmand %vm155, %vm187
  %vm204 = vmand %vm156, %vm188
  %vm205 = vmand %vm157, %vm189
  %vm206 = vmand %vm158, %vm190
  %vm207 = vmand %vm159, %vm191
  %vm208 = vmand %vm160, %vm192
  %vm209 = vmand %vm161, %vm193
  %vm210 = vmand %vm162, %vm194
  %vm211 = vmand %vm163, %vm195
  %vm212 = vmand %vm164, %vm196
  %vm213 = vcmp.lt.s32.totalorder %v165, 8
  %vm214 = vcmp.lt.s32.totalorder %v166, 8
  %vm215 = vcmp.lt.s32.totalorder %v167, 8
  %vm216 = vcmp.lt.s32.totalorder %v168, 8
  %vm217 = vcmp.lt.s32.totalorder %v169, 8
  %vm218 = vcmp.lt.s32.totalorder %v170, 8
  %vm219 = vcmp.lt.s32.totalorder %v171, 8
  %vm220 = vcmp.lt.s32.totalorder %v172, 8
  %vm221 = vcmp.lt.s32.totalorder %v173, 8
  %vm222 = vcmp.lt.s32.totalorder %v174, 8
  %vm223 = vcmp.lt.s32.totalorder %v175, 8
  %vm224 = vcmp.lt.s32.totalorder %v176, 8
  %vm225 = vcmp.lt.s32.totalorder %v177, 8
  %vm226 = vcmp.lt.s32.totalorder %v178, 8
  %vm227 = vcmp.lt.s32.totalorder %v179, 8
  %vm228 = vcmp.lt.s32.totalorder %v180, 8
  %vm229 = vmand %vm197, %vm213
  %vm230 = vmand %vm198, %vm214
  %vm231 = vmand %vm199, %vm215
  %vm232 = vmand %vm200, %vm216
  %vm233 = vmand %vm201, %vm217
  %vm234 = vmand %vm202, %vm218
  %vm235 = vmand %vm203, %vm219
  %vm236 = vmand %vm204, %vm220
  %vm237 = vmand %vm205, %vm221
  %vm238 = vmand %vm206, %vm222
  %vm239 = vmand %vm207, %vm223
  %vm240 = vmand %vm208, %vm224
  %vm241 = vmand %vm209, %vm225
  %vm242 = vmand %vm210, %vm226
  %vm243 = vmand %vm211, %vm227
  %vm244 = vmand %vm212, %vm228
  %v245 = vsel %vm229, 1, 0
  %v246 = vsel %vm230, 1, 0
  %v247 = vsel %vm231, 1, 0
  %v248 = vsel %vm232, 1, 0
  %v249 = vsel %vm233, 1, 0
  %v250 = vsel %vm234, 1, 0
  %v251 = vsel %vm235, 1, 0
  %v252 = vsel %vm236, 1, 0
  %v253 = vsel %vm237, 1, 0
  %v254 = vsel %vm238, 1, 0
  %v255 = vsel %vm239, 1, 0
  %v256 = vsel %vm240, 1, 0
  %v257 = vsel %vm241, 1, 0
  %v258 = vsel %vm242, 1, 0
  %v259 = vsel %vm243, 1, 0
  %v260 = vsel %vm244, 1, 0
  %v261 = vcvt.s32.f32 %v245
  %v262 = vcvt.s32.f32 %v246
  %v263 = vcvt.s32.f32 %v247
  %v264 = vcvt.s32.f32 %v248
  %v265 = vcvt.s32.f32 %v249
  %v266 = vcvt.s32.f32 %v250
  %v267 = vcvt.s32.f32 %v251
  %v268 = vcvt.s32.f32 %v252
  %v269 = vcvt.s32.f32 %v253
  %v270 = vcvt.s32.f32 %v254
  %v271 = vcvt.s32.f32 %v255
  %v272 = vcvt.s32.f32 %v256
  %v273 = vcvt.s32.f32 %v257
  %v274 = vcvt.s32.f32 %v258
  %v275 = vcvt.s32.f32 %v259
  %v276 = vcvt.s32.f32 %v260
  %vm277 = vcmp.ge.s32.totalorder %v53, 0
  %vm278 = vcmp.ge.s32.totalorder %v54, 0
  %vm279 = vcmp.ge.s32.totalorder %v55, 0
  %vm280 = vcmp.ge.s32.totalorder %v56, 0
  %vm281 = vcmp.ge.s32.totalorder %v57, 0
  %vm282 = vcmp.ge.s32.totalorder %v58, 0
  %vm283 = vcmp.ge.s32.totalorder %v59, 0
  %vm284 = vcmp.ge.s32.totalorder %v60, 0
  %vm285 = vcmp.ge.s32.totalorder %v61, 0
  %vm286 = vcmp.ge.s32.totalorder %v62, 0
  %vm287 = vcmp.ge.s32.totalorder %v63, 0
  %vm288 = vcmp.ge.s32.totalorder %v64, 0
  %vm289 = vcmp.ge.s32.totalorder %v65, 0
  %vm290 = vcmp.ge.s32.totalorder %v66, 0
  %vm291 = vcmp.ge.s32.totalorder %v67, 0
  %vm292 = vcmp.ge.s32.totalorder %v68, 0
  %vm293 = vmand %vm149, %vm277
  %vm294 = vmand %vm150, %vm278
  %vm295 = vmand %vm151, %vm279
  %vm296 = vmand %vm152, %vm280
  %vm297 = vmand %vm153, %vm281
  %vm298 = vmand %vm154, %vm282
  %vm299 = vmand %vm155, %vm283
  %vm300 = vmand %vm156, %vm284
  %vm301 = vmand %vm157, %vm285
  %vm302 = vmand %vm158, %vm286
  %vm303 = vmand %vm159, %vm287
  %vm304 = vmand %vm160, %vm288
  %vm305 = vmand %vm161, %vm289
  %vm306 = vmand %vm162, %vm290
  %vm307 = vmand %vm163, %vm291
  %vm308 = vmand %vm164, %vm292
  %vm309 = vcmp.lt.s32.totalorder %v53, 8
  %vm310 = vcmp.lt.s32.totalorder %v54, 8
  %vm311 = vcmp.lt.s32.totalorder %v55, 8
  %vm312 = vcmp.lt.s32.totalorder %v56, 8
  %vm313 = vcmp.lt.s32.totalorder %v57, 8
  %vm314 = vcmp.lt.s32.totalorder %v58, 8
  %vm315 = vcmp.lt.s32.totalorder %v59, 8
  %vm316 = vcmp.lt.s32.totalorder %v60, 8
  %vm317 = vcmp.lt.s32.totalorder %v61, 8
  %vm318 = vcmp.lt.s32.totalorder %v62, 8
  %vm319 = vcmp.lt.s32.totalorder %v63, 8
  %vm320 = vcmp.lt.s32.totalorder %v64, 8
  %vm321 = vcmp.lt.s32.totalorder %v65, 8
  %vm322 = vcmp.lt.s32.totalorder %v66, 8
  %vm323 = vcmp.lt.s32.totalorder %v67, 8
  %vm324 = vcmp.lt.s32.totalorder %v68, 8
  %vm325 = vmand %vm293, %vm309
  %vm326 = vmand %vm294, %vm310
  %vm327 = vmand %vm295, %vm311
  %vm328 = vmand %vm296, %vm312
  %vm329 = vmand %vm297, %vm313
  %vm330 = vmand %vm298, %vm314
  %vm331 = vmand %vm299, %vm315
  %vm332 = vmand %vm300, %vm316
  %vm333 = vmand %vm301, %vm317
  %vm334 = vmand %vm302, %vm318
  %vm335 = vmand %vm303, %vm319
  %vm336 = vmand %vm304, %vm320
  %vm337 = vmand %vm305, %vm321
  %vm338 = vmand %vm306, %vm322
  %vm339 = vmand %vm307, %vm323
  %vm340 = vmand %vm308, %vm324
  %v341 = vsel %vm325, 1, 0
  %v342 = vsel %vm326, 1, 0
  %v343 = vsel %vm327, 1, 0
  %v344 = vsel %vm328, 1, 0
  %v345 = vsel %vm329, 1, 0
  %v346 = vsel %vm330, 1, 0
  %v347 = vsel %vm331, 1, 0
  %v348 = vsel %vm332, 1, 0
  %v349 = vsel %vm333, 1, 0
  %v350 = vsel %vm334, 1, 0
  %v351 = vsel %vm335, 1, 0
  %v352 = vsel %vm336, 1, 0
  %v353 = vsel %vm337, 1, 0
  %v354 = vsel %vm338, 1, 0
  %v355 = vsel %vm339, 1, 0
  %v356 = vsel %vm340, 1, 0
  %v357 = vcvt.s32.f32 %v341
  %v358 = vcvt.s32.f32 %v342
  %v359 = vcvt.s32.f32 %v343
  %v360 = vcvt.s32.f32 %v344
  %v361 = vcvt.s32.f32 %v345
  %v362 = vcvt.s32.f32 %v346
  %v363 = vcvt.s32.f32 %v347
  %v364 = vcvt.s32.f32 %v348
  %v365 = vcvt.s32.f32 %v349
  %v366 = vcvt.s32.f32 %v350
  %v367 = vcvt.s32.f32 %v351
  %v368 = vcvt.s32.f32 %v352
  %v369 = vcvt.s32.f32 %v353
  %v370 = vcvt.s32.f32 %v354
  %v371 = vcvt.s32.f32 %v355
  %v372 = vcvt.s32.f32 %v356
  %v373 = vadd.s32 %v53, 1
  %v374 = vadd.s32 %v54, 1
  %v375 = vadd.s32 %v55, 1
  %v376 = vadd.s32 %v56, 1
  %v377 = vadd.s32 %v57, 1
  %v378 = vadd.s32 %v58, 1
  %v379 = vadd.s32 %v59, 1
  %v380 = vadd.s32 %v60, 1
  %v381 = vadd.s32 %v61, 1
  %v382 = vadd.s32 %v62, 1
  %v383 = vadd.s32 %v63, 1
  %v384 = vadd.s32 %v64, 1
  %v385 = vadd.s32 %v65, 1
  %v386 = vadd.s32 %v66, 1
  %v387 = vadd.s32 %v67, 1
  %v388 = vadd.s32 %v68, 1
  %vm389 = vcmp.ge.s32.totalorder %v373, 0
  %vm390 = vcmp.ge.s32.totalorder %v374, 0
  %vm391 = vcmp.ge.s32.totalorder %v375, 0
  %vm392 = vcmp.ge.s32.totalorder %v376, 0
  %vm393 = vcmp.ge.s32.totalorder %v377, 0
  %vm394 = vcmp.ge.s32.totalorder %v378, 0
  %vm395 = vcmp.ge.s32.totalorder %v379, 0
  %vm396 = vcmp.ge.s32.totalorder %v380, 0
  %vm397 = vcmp.ge.s32.totalorder %v381, 0
  %vm398 = vcmp.ge.s32.totalorder %v382, 0
  %vm399 = vcmp.ge.s32.totalorder %v383, 0
  %vm400 = vcmp.ge.s32.totalorder %v384, 0
  %vm401 = vcmp.ge.s32.totalorder %v385, 0
  %vm402 = vcmp.ge.s32.totalorder %v386, 0
  %vm403 = vcmp.ge.s32.totalorder %v387, 0
  %vm404 = vcmp.ge.s32.totalorder %v388, 0
  %vm405 = vmand %vm149, %vm389
  %vm406 = vmand %vm150, %vm390
  %vm407 = vmand %vm151, %vm391
  %vm408 = vmand %vm152, %vm392
  %vm409 = vmand %vm153, %vm393
  %vm410 = vmand %vm154, %vm394
  %vm411 = vmand %vm155, %vm395
  %vm412 = vmand %vm156, %vm396
  %vm413 = vmand %vm157, %vm397
  %vm414 = vmand %vm158, %vm398
  %vm415 = vmand %vm159, %vm399
  %vm416 = vmand %vm160, %vm400
  %vm417 = vmand %vm161, %vm401
  %vm418 = vmand %vm162, %vm402
  %vm419 = vmand %vm163, %vm403
  %vm420 = vmand %vm164, %vm404
  %vm421 = vcmp.lt.s32.totalorder %v373, 8
  %vm422 = vcmp.lt.s32.totalorder %v374, 8
  %vm423 = vcmp.lt.s32.totalorder %v375, 8
  %vm424 = vcmp.lt.s32.totalorder %v376, 8
  %vm425 = vcmp.lt.s32.totalorder %v377, 8
  %vm426 = vcmp.lt.s32.totalorder %v378, 8
  %vm427 = vcmp.lt.s32.totalorder %v379, 8
  %vm428 = vcmp.lt.s32.totalorder %v380, 8
  %vm429 = vcmp.lt.s32.totalorder %v381, 8
  %vm430 = vcmp.lt.s32.totalorder %v382, 8
  %vm431 = vcmp.lt.s32.totalorder %v383, 8
  %vm432 = vcmp.lt.s32.totalorder %v384, 8
  %vm433 = vcmp.lt.s32.totalorder %v385, 8
  %vm434 = vcmp.lt.s32.totalorder %v386, 8
  %vm435 = vcmp.lt.s32.totalorder %v387, 8
  %vm436 = vcmp.lt.s32.totalorder %v388, 8
  %vm437 = vmand %vm405, %vm421
  %vm438 = vmand %vm406, %vm422
  %vm439 = vmand %vm407, %vm423
  %vm440 = vmand %vm408, %vm424
  %vm441 = vmand %vm409, %vm425
  %vm442 = vmand %vm410, %vm426
  %vm443 = vmand %vm411, %vm427
  %vm444 = vmand %vm412, %vm428
  %vm445 = vmand %vm413, %vm429
  %vm446 = vmand %vm414, %vm430
  %vm447 = vmand %vm415, %vm431
  %vm448 = vmand %vm416, %vm432
  %vm449 = vmand %vm417, %vm433
  %vm450 = vmand %vm418, %vm434
  %vm451 = vmand %vm419, %vm435
  %vm452 = vmand %vm420, %vm436
  %v453 = vsel %vm437, 1, 0
  %v454 = vsel %vm438, 1, 0
  %v455 = vsel %vm439, 1, 0
  %v456 = vsel %vm440, 1, 0
  %v457 = vsel %vm441, 1, 0
  %v458 = vsel %vm442, 1, 0
  %v459 = vsel %vm443, 1, 0
  %v460 = vsel %vm444, 1, 0
  %v461 = vsel %vm445, 1, 0
  %v462 = vsel %vm446, 1, 0
  %v463 = vsel %vm447, 1, 0
  %v464 = vsel %vm448, 1, 0
  %v465 = vsel %vm449, 1, 0
  %v466 = vsel %vm450, 1, 0
  %v467 = vsel %vm451, 1, 0
  %v468 = vsel %vm452, 1, 0
  %v469 = vcvt.s32.f32 %v453
  %v470 = vcvt.s32.f32 %v454
  %v471 = vcvt.s32.f32 %v455
  %v472 = vcvt.s32.f32 %v456
  %v473 = vcvt.s32.f32 %v457
  %v474 = vcvt.s32.f32 %v458
  %v475 = vcvt.s32.f32 %v459
  %v476 = vcvt.s32.f32 %v460
  %v477 = vcvt.s32.f32 %v461
  %v478 = vcvt.s32.f32 %v462
  %v479 = vcvt.s32.f32 %v463
  %v480 = vcvt.s32.f32 %v464
  %v481 = vcvt.s32.f32 %v465
  %v482 = vcvt.s32.f32 %v466
  %v483 = vcvt.s32.f32 %v467
  %v484 = vcvt.s32.f32 %v468
  %vm485 = vcmp.ge.s32.totalorder %v85, 0
  %vm486 = vcmp.ge.s32.totalorder %v86, 0
  %vm487 = vcmp.ge.s32.totalorder %v87, 0
  %vm488 = vcmp.ge.s32.totalorder %v88, 0
  %vm489 = vcmp.ge.s32.totalorder %v89, 0
  %vm490 = vcmp.ge.s32.totalorder %v90, 0
  %vm491 = vcmp.ge.s32.totalorder %v91, 0
  %vm492 = vcmp.ge.s32.totalorder %v92, 0
  %vm493 = vcmp.ge.s32.totalorder %v93, 0
  %vm494 = vcmp.ge.s32.totalorder %v94, 0
  %vm495 = vcmp.ge.s32.totalorder %v95, 0
  %vm496 = vcmp.ge.s32.totalorder %v96, 0
  %vm497 = vcmp.ge.s32.totalorder %v97, 0
  %vm498 = vcmp.ge.s32.totalorder %v98, 0
  %vm499 = vcmp.ge.s32.totalorder %v99, 0
  %vm500 = vcmp.ge.s32.totalorder %v100, 0
  %vm501 = vcmp.lt.s32.totalorder %v85, 8
  %vm502 = vcmp.lt.s32.totalorder %v86, 8
  %vm503 = vcmp.lt.s32.totalorder %v87, 8
  %vm504 = vcmp.lt.s32.totalorder %v88, 8
  %vm505 = vcmp.lt.s32.totalorder %v89, 8
  %vm506 = vcmp.lt.s32.totalorder %v90, 8
  %vm507 = vcmp.lt.s32.totalorder %v91, 8
  %vm508 = vcmp.lt.s32.totalorder %v92, 8
  %vm509 = vcmp.lt.s32.totalorder %v93, 8
  %vm510 = vcmp.lt.s32.totalorder %v94, 8
  %vm511 = vcmp.lt.s32.totalorder %v95, 8
  %vm512 = vcmp.lt.s32.totalorder %v96, 8
  %vm513 = vcmp.lt.s32.totalorder %v97, 8
  %vm514 = vcmp.lt.s32.totalorder %v98, 8
  %vm515 = vcmp.lt.s32.totalorder %v99, 8
  %vm516 = vcmp.lt.s32.totalorder %v100, 8
  %vm517 = vmand %vm485, %vm501
  %vm518 = vmand %vm486, %vm502
  %vm519 = vmand %vm487, %vm503
  %vm520 = vmand %vm488, %vm504
  %vm521 = vmand %vm489, %vm505
  %vm522 = vmand %vm490, %vm506
  %vm523 = vmand %vm491, %vm507
  %vm524 = vmand %vm492, %vm508
  %vm525 = vmand %vm493, %vm509
  %vm526 = vmand %vm494, %vm510
  %vm527 = vmand %vm495, %vm511
  %vm528 = vmand %vm496, %vm512
  %vm529 = vmand %vm497, %vm513
  %vm530 = vmand %vm498, %vm514
  %vm531 = vmand %vm499, %vm515
  %vm532 = vmand %vm500, %vm516
  %vm533 = vmand %vm517, %vm181
  %vm534 = vmand %vm518, %vm182
  %vm535 = vmand %vm519, %vm183
  %vm536 = vmand %vm520, %vm184
  %vm537 = vmand %vm521, %vm185
  %vm538 = vmand %vm522, %vm186
  %vm539 = vmand %vm523, %vm187
  %vm540 = vmand %vm524, %vm188
  %vm541 = vmand %vm525, %vm189
  %vm542 = vmand %vm526, %vm190
  %vm543 = vmand %vm527, %vm191
  %vm544 = vmand %vm528, %vm192
  %vm545 = vmand %vm529, %vm193
  %vm546 = vmand %vm530, %vm194
  %vm547 = vmand %vm531, %vm195
  %vm548 = vmand %vm532, %vm196
  %vm549 = vmand %vm533, %vm213
  %vm550 = vmand %vm534, %vm214
  %vm551 = vmand %vm535, %vm215
  %vm552 = vmand %vm536, %vm216
  %vm553 = vmand %vm537, %vm217
  %vm554 = vmand %vm538, %vm218
  %vm555 = vmand %vm539, %vm219
  %vm556 = vmand %vm540, %vm220
  %vm557 = vmand %vm541, %vm221
  %vm558 = vmand %vm542, %vm222
  %vm559 = vmand %vm543, %vm223
  %vm560 = vmand %vm544, %vm224
  %vm561 = vmand %vm545, %vm225
  %vm562 = vmand %vm546, %vm226
  %vm563 = vmand %vm547, %vm227
  %vm564 = vmand %vm548, %vm228
  %v565 = vsel %vm549, 1, 0
  %v566 = vsel %vm550, 1, 0
  %v567 = vsel %vm551, 1, 0
  %v568 = vsel %vm552, 1, 0
  %v569 = vsel %vm553, 1, 0
  %v570 = vsel %vm554, 1, 0
  %v571 = vsel %vm555, 1, 0
  %v572 = vsel %vm556, 1, 0
  %v573 = vsel %vm557, 1, 0
  %v574 = vsel %vm558, 1, 0
  %v575 = vsel %vm559, 1, 0
  %v576 = vsel %vm560, 1, 0
  %v577 = vsel %vm561, 1, 0
  %v578 = vsel %vm562, 1, 0
  %v579 = vsel %vm563, 1, 0
  %v580 = vsel %vm564, 1, 0
  %v581 = vcvt.s32.f32 %v565
  %v582 = vcvt.s32.f32 %v566
  %v583 = vcvt.s32.f32 %v567
  %v584 = vcvt.s32.f32 %v568
  %v585 = vcvt.s32.f32 %v569
  %v586 = vcvt.s32.f32 %v570
  %v587 = vcvt.s32.f32 %v571
  %v588 = vcvt.s32.f32 %v572
  %v589 = vcvt.s32.f32 %v573
  %v590 = vcvt.s32.f32 %v574
  %v591 = vcvt.s32.f32 %v575
  %v592 = vcvt.s32.f32 %v576
  %v593 = vcvt.s32.f32 %v577
  %v594 = vcvt.s32.f32 %v578
  %v595 = vcvt.s32.f32 %v579
  %v596 = vcvt.s32.f32 %v580
  %vm597 = vmand %vm517, %vm277
  %vm598 = vmand %vm518, %vm278
  %vm599 = vmand %vm519, %vm279
  %vm600 = vmand %vm520, %vm280
  %vm601 = vmand %vm521, %vm281
  %vm602 = vmand %vm522, %vm282
  %vm603 = vmand %vm523, %vm283
  %vm604 = vmand %vm524, %vm284
  %vm605 = vmand %vm525, %vm285
  %vm606 = vmand %vm526, %vm286
  %vm607 = vmand %vm527, %vm287
  %vm608 = vmand %vm528, %vm288
  %vm609 = vmand %vm529, %vm289
  %vm610 = vmand %vm530, %vm290
  %vm611 = vmand %vm531, %vm291
  %vm612 = vmand %vm532, %vm292
  %vm613 = vmand %vm597, %vm309
  %vm614 = vmand %vm598, %vm310
  %vm615 = vmand %vm599, %vm311
  %vm616 = vmand %vm600, %vm312
  %vm617 = vmand %vm601, %vm313
  %vm618 = vmand %vm602, %vm314
  %vm619 = vmand %vm603, %vm315
  %vm620 = vmand %vm604, %vm316
  %vm621 = vmand %vm605, %vm317
  %vm622 = vmand %vm606, %vm318
  %vm623 = vmand %vm607, %vm319
  %vm624 = vmand %vm608, %vm320
  %vm625 = vmand %vm609, %vm321
  %vm626 = vmand %vm610, %vm322
  %vm627 = vmand %vm611, %vm323
  %vm628 = vmand %vm612, %vm324
  %v629 = vsel %vm613, 1, 0
  %v630 = vsel %vm614, 1, 0
  %v631 = vsel %vm615, 1, 0
  %v632 = vsel %vm616, 1, 0
  %v633 = vsel %vm617, 1, 0
  %v634 = vsel %vm618, 1, 0
  %v635 = vsel %vm619, 1, 0
  %v636 = vsel %vm620, 1, 0
  %v637 = vsel %vm621, 1, 0
  %v638 = vsel %vm622, 1, 0
  %v639 = vsel %vm623, 1, 0
  %v640 = vsel %vm624, 1, 0
  %v641 = vsel %vm625, 1, 0
  %v642 = vsel %vm626, 1, 0
  %v643 = vsel %vm627, 1, 0
  %v644 = vsel %vm628, 1, 0
  %v645 = vcvt.s32.f32 %v629
  %v646 = vcvt.s32.f32 %v630
  %v647 = vcvt.s32.f32 %v631
  %v648 = vcvt.s32.f32 %v632
  %v649 = vcvt.s32.f32 %v633
  %v650 = vcvt.s32.f32 %v634
  %v651 = vcvt.s32.f32 %v635
  %v652 = vcvt.s32.f32 %v636
  %v653 = vcvt.s32.f32 %v637
  %v654 = vcvt.s32.f32 %v638
  %v655 = vcvt.s32.f32 %v639
  %v656 = vcvt.s32.f32 %v640
  %v657 = vcvt.s32.f32 %v641
  %v658 = vcvt.s32.f32 %v642
  %v659 = vcvt.s32.f32 %v643
  %v660 = vcvt.s32.f32 %v644
  %vm661 = vmand %vm517, %vm389
  %vm662 = vmand %vm518, %vm390
  %vm663 = vmand %vm519, %vm391
  %vm664 = vmand %vm520, %vm392
  %vm665 = vmand %vm521, %vm393
  %vm666 = vmand %vm522, %vm394
  %vm667 = vmand %vm523, %vm395
  %vm668 = vmand %vm524, %vm396
  %vm669 = vmand %vm525, %vm397
  %vm670 = vmand %vm526, %vm398
  %vm671 = vmand %vm527, %vm399
  %vm672 = vmand %vm528, %vm400
  %vm673 = vmand %vm529, %vm401
  %vm674 = vmand %vm530, %vm402
  %vm675 = vmand %vm531, %vm403
  %vm676 = vmand %vm532, %vm404
  %vm677 = vmand %vm661, %vm421
  %vm678 = vmand %vm662, %vm422
  %vm679 = vmand %vm663, %vm423
  %vm680 = vmand %vm664, %vm424
  %vm681 = vmand %vm665, %vm425
  %vm682 = vmand %vm666, %vm426
  %vm683 = vmand %vm667, %vm427
  %vm684 = vmand %vm668, %vm428
  %vm685 = vmand %vm669, %vm429
  %vm686 = vmand %vm670, %vm430
  %vm687 = vmand %vm671, %vm431
  %vm688 = vmand %vm672, %vm432
  %vm689 = vmand %vm673, %vm433
  %vm690 = vmand %vm674, %vm434
  %vm691 = vmand %vm675, %vm435
  %vm692 = vmand %vm676, %vm436
  %v693 = vsel %vm677, 1, 0
  %v694 = vsel %vm678, 1, 0
  %v695 = vsel %vm679, 1, 0
  %v696 = vsel %vm680, 1, 0
  %v697 = vsel %vm681, 1, 0
  %v698 = vsel %vm682, 1, 0
  %v699 = vsel %vm683, 1, 0
  %v700 = vsel %vm684, 1, 0
  %v701 = vsel %vm685, 1, 0
  %v702 = vsel %vm686, 1, 0
  %v703 = vsel %vm687, 1, 0
  %v704 = vsel %vm688, 1, 0
  %v705 = vsel %vm689, 1, 0
  %v706 = vsel %vm690, 1, 0
  %v707 = vsel %vm691, 1, 0
  %v708 = vsel %vm692, 1, 0
  %v709 = vcvt.s32.f32 %v693
  %v710 = vcvt.s32.f32 %v694
  %v711 = vcvt.s32.f32 %v695
  %v712 = vcvt.s32.f32 %v696
  %v713 = vcvt.s32.f32 %v697
  %v714 = vcvt.s32.f32 %v698
  %v715 = vcvt.s32.f32 %v699
  %v716 = vcvt.s32.f32 %v700
  %v717 = vcvt.s32.f32 %v701
  %v718 = vcvt.s32.f32 %v702
  %v719 = vcvt.s32.f32 %v703
  %v720 = vcvt.s32.f32 %v704
  %v721 = vcvt.s32.f32 %v705
  %v722 = vcvt.s32.f32 %v706
  %v723 = vcvt.s32.f32 %v707
  %v724 = vcvt.s32.f32 %v708
  %v725 = vadd.s32 %v85, 1
  %v726 = vadd.s32 %v86, 1
  %v727 = vadd.s32 %v87, 1
  %v728 = vadd.s32 %v88, 1
  %v729 = vadd.s32 %v89, 1
  %v730 = vadd.s32 %v90, 1
  %v731 = vadd.s32 %v91, 1
  %v732 = vadd.s32 %v92, 1
  %v733 = vadd.s32 %v93, 1
  %v734 = vadd.s32 %v94, 1
  %v735 = vadd.s32 %v95, 1
  %v736 = vadd.s32 %v96, 1
  %v737 = vadd.s32 %v97, 1
  %v738 = vadd.s32 %v98, 1
  %v739 = vadd.s32 %v99, 1
  %v740 = vadd.s32 %v100, 1
  %vm741 = vcmp.ge.s32.totalorder %v725, 0
  %vm742 = vcmp.ge.s32.totalorder %v726, 0
  %vm743 = vcmp.ge.s32.totalorder %v727, 0
  %vm744 = vcmp.ge.s32.totalorder %v728, 0
  %vm745 = vcmp.ge.s32.totalorder %v729, 0
  %vm746 = vcmp.ge.s32.totalorder %v730, 0
  %vm747 = vcmp.ge.s32.totalorder %v731, 0
  %vm748 = vcmp.ge.s32.totalorder %v732, 0
  %vm749 = vcmp.ge.s32.totalorder %v733, 0
  %vm750 = vcmp.ge.s32.totalorder %v734, 0
  %vm751 = vcmp.ge.s32.totalorder %v735, 0
  %vm752 = vcmp.ge.s32.totalorder %v736, 0
  %vm753 = vcmp.ge.s32.totalorder %v737, 0
  %vm754 = vcmp.ge.s32.totalorder %v738, 0
  %vm755 = vcmp.ge.s32.totalorder %v739, 0
  %vm756 = vcmp.ge.s32.totalorder %v740, 0
  %vm757 = vcmp.lt.s32.totalorder %v725, 8
  %vm758 = vcmp.lt.s32.totalorder %v726, 8
  %vm759 = vcmp.lt.s32.totalorder %v727, 8
  %vm760 = vcmp.lt.s32.totalorder %v728, 8
  %vm761 = vcmp.lt.s32.totalorder %v729, 8
  %vm762 = vcmp.lt.s32.totalorder %v730, 8
  %vm763 = vcmp.lt.s32.totalorder %v731, 8
  %vm764 = vcmp.lt.s32.totalorder %v732, 8
  %vm765 = vcmp.lt.s32.totalorder %v733, 8
  %vm766 = vcmp.lt.s32.totalorder %v734, 8
  %vm767 = vcmp.lt.s32.totalorder %v735, 8
  %vm768 = vcmp.lt.s32.totalorder %v736, 8
  %vm769 = vcmp.lt.s32.totalorder %v737, 8
  %vm770 = vcmp.lt.s32.totalorder %v738, 8
  %vm771 = vcmp.lt.s32.totalorder %v739, 8
  %vm772 = vcmp.lt.s32.totalorder %v740, 8
  %vm773 = vmand %vm741, %vm757
  %vm774 = vmand %vm742, %vm758
  %vm775 = vmand %vm743, %vm759
  %vm776 = vmand %vm744, %vm760
  %vm777 = vmand %vm745, %vm761
  %vm778 = vmand %vm746, %vm762
  %vm779 = vmand %vm747, %vm763
  %vm780 = vmand %vm748, %vm764
  %vm781 = vmand %vm749, %vm765
  %vm782 = vmand %vm750, %vm766
  %vm783 = vmand %vm751, %vm767
  %vm784 = vmand %vm752, %vm768
  %vm785 = vmand %vm753, %vm769
  %vm786 = vmand %vm754, %vm770
  %vm787 = vmand %vm755, %vm771
  %vm788 = vmand %vm756, %vm772
  %vm789 = vmand %vm773, %vm181
  %vm790 = vmand %vm774, %vm182
  %vm791 = vmand %vm775, %vm183
  %vm792 = vmand %vm776, %vm184
  %vm793 = vmand %vm777, %vm185
  %vm794 = vmand %vm778, %vm186
  %vm795 = vmand %vm779, %vm187
  %vm796 = vmand %vm780, %vm188
  %vm797 = vmand %vm781, %vm189
  %vm798 = vmand %vm782, %vm190
  %vm799 = vmand %vm783, %vm191
  %vm800 = vmand %vm784, %vm192
  %vm801 = vmand %vm785, %vm193
  %vm802 = vmand %vm786, %vm194
  %vm803 = vmand %vm787, %vm195
  %vm804 = vmand %vm788, %vm196
  %vm805 = vmand %vm789, %vm213
  %vm806 = vmand %vm790, %vm214
  %vm807 = vmand %vm791, %vm215
  %vm808 = vmand %vm792, %vm216
  %vm809 = vmand %vm793, %vm217
  %vm810 = vmand %vm794, %vm218
  %vm811 = vmand %vm795, %vm219
  %vm812 = vmand %vm796, %vm220
  %vm813 = vmand %vm797, %vm221
  %vm814 = vmand %vm798, %vm222
  %vm815 = vmand %vm799, %vm223
  %vm816 = vmand %vm800, %vm224
  %vm817 = vmand %vm801, %vm225
  %vm818 = vmand %vm802, %vm226
  %vm819 = vmand %vm803, %vm227
  %vm820 = vmand %vm804, %vm228
  %v821 = vsel %vm805, 1, 0
  %v822 = vsel %vm806, 1, 0
  %v823 = vsel %vm807, 1, 0
  %v824 = vsel %vm808, 1, 0
  %v825 = vsel %vm809, 1, 0
  %v826 = vsel %vm810, 1, 0
  %v827 = vsel %vm811, 1, 0
  %v828 = vsel %vm812, 1, 0
  %v829 = vsel %vm813, 1, 0
  %v830 = vsel %vm814, 1, 0
  %v831 = vsel %vm815, 1, 0
  %v832 = vsel %vm816, 1, 0
  %v833 = vsel %vm817, 1, 0
  %v834 = vsel %vm818, 1, 0
  %v835 = vsel %vm819, 1, 0
  %v836 = vsel %vm820, 1, 0
  %v837 = vcvt.s32.f32 %v821
  %v838 = vcvt.s32.f32 %v822
  %v839 = vcvt.s32.f32 %v823
  %v840 = vcvt.s32.f32 %v824
  %v841 = vcvt.s32.f32 %v825
  %v842 = vcvt.s32.f32 %v826
  %v843 = vcvt.s32.f32 %v827
  %v844 = vcvt.s32.f32 %v828
  %v845 = vcvt.s32.f32 %v829
  %v846 = vcvt.s32.f32 %v830
  %v847 = vcvt.s32.f32 %v831
  %v848 = vcvt.s32.f32 %v832
  %v849 = vcvt.s32.f32 %v833
  %v850 = vcvt.s32.f32 %v834
  %v851 = vcvt.s32.f32 %v835
  %v852 = vcvt.s32.f32 %v836
  %vm853 = vmand %vm773, %vm277
  %vm854 = vmand %vm774, %vm278
  %vm855 = vmand %vm775, %vm279
  %vm856 = vmand %vm776, %vm280
  %vm857 = vmand %vm777, %vm281
  %vm858 = vmand %vm778, %vm282
  %vm859 = vmand %vm779, %vm283
  %vm860 = vmand %vm780, %vm284
  %vm861 = vmand %vm781, %vm285
  %vm862 = vmand %vm782, %vm286
  %vm863 = vmand %vm783, %vm287
  %vm864 = vmand %vm784, %vm288
  %vm865 = vmand %vm785, %vm289
  %vm866 = vmand %vm786, %vm290
  %vm867 = vmand %vm787, %vm291
  %vm868 = vmand %vm788, %vm292
  %vm869 = vmand %vm853, %vm309
  %vm870 = vmand %vm854, %vm310
  %vm871 = vmand %vm855, %vm311
  %vm872 = vmand %vm856, %vm312
  %vm873 = vmand %vm857, %vm313
  %vm874 = vmand %vm858, %vm314
  %vm875 = vmand %vm859, %vm315
  %vm876 = vmand %vm860, %vm316
  %vm877 = vmand %vm861, %vm317
  %vm878 = vmand %vm862, %vm318
  %vm879 = vmand %vm863, %vm319
  %vm880 = vmand %vm864, %vm320
  %vm881 = vmand %vm865, %vm321
  %vm882 = vmand %vm866, %vm322
  %vm883 = vmand %vm867, %vm323
  %vm884 = vmand %vm868, %vm324
  %v885 = vsel %vm869, 1, 0
  %v886 = vsel %vm870, 1, 0
  %v887 = vsel %vm871, 1, 0
  %v888 = vsel %vm872, 1, 0
  %v889 = vsel %vm873, 1, 0
  %v890 = vsel %vm874, 1, 0
  %v891 = vsel %vm875, 1, 0
  %v892 = vsel %vm876, 1, 0
  %v893 = vsel %vm877, 1, 0
  %v894 = vsel %vm878, 1, 0
  %v895 = vsel %vm879, 1, 0
  %v896 = vsel %vm880, 1, 0
  %v897 = vsel %vm881, 1, 0
  %v898 = vsel %vm882, 1, 0
  %v899 = vsel %vm883, 1, 0
  %v900 = vsel %vm884, 1, 0
  %v901 = vcvt.s32.f32 %v885
  %v902 = vcvt.s32.f32 %v886
  %v903 = vcvt.s32.f32 %v887
  %v904 = vcvt.s32.f32 %v888
  %v905 = vcvt.s32.f32 %v889
  %v906 = vcvt.s32.f32 %v890
  %v907 = vcvt.s32.f32 %v891
  %v908 = vcvt.s32.f32 %v892
  %v909 = vcvt.s32.f32 %v893
  %v910 = vcvt.s32.f32 %v894
  %v911 = vcvt.s32.f32 %v895
  %v912 = vcvt.s32.f32 %v896
  %v913 = vcvt.s32.f32 %v897
  %v914 = vcvt.s32.f32 %v898
  %v915 = vcvt.s32.f32 %v899
  %v916 = vcvt.s32.f32 %v900
  %vm917 = vmand %vm773, %vm389
  %vm918 = vmand %vm774, %vm390
  %vm919 = vmand %vm775, %vm391
  %vm920 = vmand %vm776, %vm392
  %vm921 = vmand %vm777, %vm393
  %vm922 = vmand %vm778, %vm394
  %vm923 = vmand %vm779, %vm395
  %vm924 = vmand %vm780, %vm396
  %vm925 = vmand %vm781, %vm397
  %vm926 = vmand %vm782, %vm398
  %vm927 = vmand %vm783, %vm399
  %vm928 = vmand %vm784, %vm400
  %vm929 = vmand %vm785, %vm401
  %vm930 = vmand %vm786, %vm402
  %vm931 = vmand %vm787, %vm403
  %vm932 = vmand %vm788, %vm404
  %vm933 = vmand %vm917, %vm421
  %vm934 = vmand %vm918, %vm422
  %vm935 = vmand %vm919, %vm423
  %vm936 = vmand %vm920, %vm424
  %vm937 = vmand %vm921, %vm425
  %vm938 = vmand %vm922, %vm426
  %vm939 = vmand %vm923, %vm427
  %vm940 = vmand %vm924, %vm428
  %vm941 = vmand %vm925, %vm429
  %vm942 = vmand %vm926, %vm430
  %vm943 = vmand %vm927, %vm431
  %vm944 = vmand %vm928, %vm432
  %vm945 = vmand %vm929, %vm433
  %vm946 = vmand %vm930, %vm434
  %vm947 = vmand %vm931, %vm435
  %vm948 = vmand %vm932, %vm436
  %v949 = vsel %vm933, 1, 0
  %v950 = vsel %vm934, 1, 0
  %v951 = vsel %vm935, 1, 0
  %v952 = vsel %vm936, 1, 0
  %v953 = vsel %vm937, 1, 0
  %v954 = vsel %vm938, 1, 0
  %v955 = vsel %vm939, 1, 0
  %v956 = vsel %vm940, 1, 0
  %v957 = vsel %vm941, 1, 0
  %v958 = vsel %vm942, 1, 0
  %v959 = vsel %vm943, 1, 0
  %v960 = vsel %vm944, 1, 0
  %v961 = vsel %vm945, 1, 0
  %v962 = vsel %vm946, 1, 0
  %v963 = vsel %vm947, 1, 0
  %v964 = vsel %vm948, 1, 0
  %v965 = vcvt.s32.f32 %v949
  %v966 = vcvt.s32.f32 %v950
  %v967 = vcvt.s32.f32 %v951
  %v968 = vcvt.s32.f32 %v952
  %v969 = vcvt.s32.f32 %v953
  %v970 = vcvt.s32.f32 %v954
  %v971 = vcvt.s32.f32 %v955
  %v972 = vcvt.s32.f32 %v956
  %v973 = vcvt.s32.f32 %v957
  %v974 = vcvt.s32.f32 %v958
  %v975 = vcvt.s32.f32 %v959
  %v976 = vcvt.s32.f32 %v960
  %v977 = vcvt.s32.f32 %v961
  %v978 = vcvt.s32.f32 %v962
  %v979 = vcvt.s32.f32 %v963
  %v980 = vcvt.s32.f32 %v964
  %v981 = vld [vmem:[%s0] sm:$0xf]
  %v982 = vld [vmem:[%s0 + $0x4] sm:$0xf]
  %v983 = vld [vmem:[%s0 + $0x8] sm:$0xf]
  %v984 = vld [vmem:[%s0 + $0xc] sm:$0xf]
  %v985 = vld [vmem:[%s0 + $0x10] sm:$0xf]
  %v986 = vld [vmem:[%s0 + $0x14] sm:$0xf]
  %v987 = vld [vmem:[%s0 + $0x18] sm:$0xf]
  %v988 = vld [vmem:[%s0 + $0x1c] sm:$0xf]
  %v989 = vld [vmem:[%s0 + $0x20] sm:$0xf]
  %v990 = vld [vmem:[%s0 + $0x24] sm:$0xf]
  %v991 = vld [vmem:[%s0 + $0x28] sm:$0xf]
  %v992 = vld [vmem:[%s0 + $0x2c] sm:$0xf]
  %v993 = vld [vmem:[%s0 + $0x30] sm:$0xf]
  %v994 = vld [vmem:[%s0 + $0x34] sm:$0xf]
  %v995 = vld [vmem:[%s0 + $0x38] sm:$0xf]
  %v996 = vld [vmem:[%s0 + $0x3c] sm:$0xf]
  %v997 = vld [vmem:[%s1] sm:$0xf]
  %v998 = vld [vmem:[%s1 + $0x4] sm:$0xf]
  %v999 = vld [vmem:[%s1 + $0x8] sm:$0xf]
  %v1000 = vld [vmem:[%s1 + $0xc] sm:$0xf]
  %v1001 = vld [vmem:[%s1 + $0x10] sm:$0xf]
  %v1002 = vld [vmem:[%s1 + $0x14] sm:$0xf]
  %v1003 = vld [vmem:[%s1 + $0x18] sm:$0xf]
  %v1004 = vld [vmem:[%s1 + $0x1c] sm:$0xf]
  %v1005 = vld [vmem:[%s2] sm:$0x1]
  %v1007 = vlaneseq
  %v1008 = vshrl.u32 %v1007, 7
  %v1009 = vsub.s32 0, %v1008
  %v1010 = vrot.slane %v1005, %v1009
  %v1028 = vunpack.c.l.b16 %v981
  %v1029 = vunpack.c.l.b16 %v982
  %v1030 = vunpack.c.l.b16 %v983
  %v1031 = vunpack.c.l.b16 %v984
  %v1032 = vunpack.c.l.b16 %v985
  %v1033 = vunpack.c.l.b16 %v986
  %v1034 = vunpack.c.l.b16 %v987
  %v1035 = vunpack.c.l.b16 %v988
  %v1036 = vunpack.c.l.b16 %v989
  %v1037 = vunpack.c.l.b16 %v990
  %v1038 = vunpack.c.l.b16 %v991
  %v1039 = vunpack.c.l.b16 %v992
  %v1040 = vunpack.c.l.b16 %v993
  %v1041 = vunpack.c.l.b16 %v994
  %v1042 = vunpack.c.l.b16 %v995
  %v1043 = vunpack.c.l.b16 %v996
  %v1044 = vpack.c.b16 %v1029, %v1028
  %v1045 = vpack.c.b16 %v1031, %v1030
  %v1046 = vpack.c.b16 %v1033, %v1032
  %v1047 = vpack.c.b16 %v1035, %v1034
  %v1048 = vpack.c.b16 %v1037, %v1036
  %v1049 = vpack.c.b16 %v1039, %v1038
  %v1050 = vpack.c.b16 %v1041, %v1040
  %v1051 = vpack.c.b16 %v1043, %v1042
  %v1060 = vunpack.c.l.b16 %v997
  %v1061 = vunpack.c.l.b16 %v998
  %v1062 = vunpack.c.l.b16 %v999
  %v1063 = vunpack.c.l.b16 %v1000
  %v1064 = vunpack.c.l.b16 %v1001
  %v1065 = vunpack.c.l.b16 %v1002
  %v1066 = vunpack.c.l.b16 %v1003
  %v1067 = vunpack.c.l.b16 %v1004
  %v1068 = vpack.c.b16 %v1061, %v1060
  %v1069 = vpack.c.b16 %v1063, %v1062
  %v1070 = vpack.c.b16 %v1065, %v1064
  %v1071 = vpack.c.b16 %v1067, %v1066
  %vm1076 = vcmask 523264
  %v1078 = vsel %vm1076, %v1044, 0
  %v1081 = vsel %vm1076, %v1045, 0
  %v1084 = vsel %vm1076, %v1046, 0
  %v1087 = vsel %vm1076, %v1047, 0
  %v1090 = vsel %vm1076, %v1048, 0
  %v1093 = vsel %vm1076, %v1049, 0
  %v1096 = vsel %vm1076, %v1050, 0
  %v1099 = vsel %vm1076, %v1051, 0
  %1101 = vmatprep.subr.bf16.mxu0 0
  %1102 = vmatpush1.bf16.msra.mxu0 0
  %1103 = vmatprep.subr.bf16.mxu0 0
  %1104 = vmatpush1.bf16.msra.mxu0 0
  %1105 = vmatprep.subr.bf16.mxu0 0
  %1106 = vmatpush1.bf16.msra.mxu0 0
  %1107 = vmatprep.subr.bf16.mxu0 0
  %1108 = vmatpush1.bf16.msra.mxu0 0
  %1109 = vmatprep.subr.bf16.mxu0 0
  %1110 = vmatpush1.bf16.msra.mxu0 %v1071
  %1111 = vmatprep.subr.bf16.mxu0 0
  %1112 = vmatpush1.bf16.msra.mxu0 %v1070
  %1113 = vmatprep.subr.bf16.mxu0 0
  %1114 = vmatpush1.bf16.msra.mxu0 %v1069
  %1115 = vmatprep.subr.bf16.mxu0 0
  %1116 = vmatpush1.bf16.msra.mxu0 %v1068
  %1117 = vmatprep.subr.bf16.mxu0 0
  %1118 = vmatpush2.bf16.msra.mxu0 0
  %1119 = vmatprep.subr.bf16.mxu0 0
  %1120 = vmatpush2.bf16.msra.mxu0 0
  %1121 = vmatprep.subr.bf16.mxu0 0
  %1122 = vmatpush2.bf16.msra.mxu0 0
  %1123 = vmatprep.subr.bf16.mxu0 0
  %1124 = vmatpush2.bf16.msra.mxu0 0
  %1125 = vmatprep.subr.bf16.mxu0 0
  %1126 = vmatpush2.bf16.msra.mxu0 0
  %1127 = vmatprep.subr.bf16.mxu0 0
  %1128 = vmatpush2.bf16.msra.mxu0 0
  %1129 = vmatprep.subr.bf16.mxu0 0
  %1130 = vmatpush2.bf16.msra.mxu0 0
  %1131 = vmatprep.subr.bf16.mxu0 0
  %1132 = vmatpush2.bf16.msra.mxu0 0
  %1133 = vmatprep.mubr.bf16.mxu0 0
  %1134 = vmatmul.mubr.bf16.gmra.mxu0 %v1078
  %v1135 = vpop.f32.mrf.mxu0
  %v1136 = vadd.f32 %v1010, %v1135
  %v1137 = vpop.f32.mrf.mxu0
  %v1138 = vpop.f32.mrf.mxu0
  %v1139 = vadd.f32 %v1010, %v1138
  %v1140 = vpop.f32.mrf.mxu0
  %1141 = vmatprep.mubr.bf16.mxu0 0
  %1142 = vmatmul.mubr.bf16.gmra.mxu0 %v1081
  %v1143 = vpop.f32.mrf.mxu0
  %v1144 = vadd.f32 %v1010, %v1143
  %v1145 = vpop.f32.mrf.mxu0
  %v1146 = vpop.f32.mrf.mxu0
  %v1147 = vadd.f32 %v1010, %v1146
  %v1148 = vpop.f32.mrf.mxu0
  %1149 = vmatprep.mubr.bf16.mxu0 0
  %1150 = vmatmul.mubr.bf16.gmra.mxu0 %v1084
  %v1151 = vpop.f32.mrf.mxu0
  %v1152 = vadd.f32 %v1010, %v1151
  %v1153 = vpop.f32.mrf.mxu0
  %v1154 = vpop.f32.mrf.mxu0
  %v1155 = vadd.f32 %v1010, %v1154
  %v1156 = vpop.f32.mrf.mxu0
  %1157 = vmatprep.mubr.bf16.mxu0 0
  %1158 = vmatmul.mubr.bf16.gmra.mxu0 %v1087
  %v1159 = vpop.f32.mrf.mxu0
  %v1160 = vadd.f32 %v1010, %v1159
  %v1161 = vpop.f32.mrf.mxu0
  %v1162 = vpop.f32.mrf.mxu0
  %v1163 = vadd.f32 %v1010, %v1162
  %v1164 = vpop.f32.mrf.mxu0
  %1165 = vmatprep.mubr.bf16.mxu0 0
  %1166 = vmatmul.mubr.bf16.gmra.mxu0 %v1090
  %v1167 = vpop.f32.mrf.mxu0
  %v1168 = vadd.f32 %v1010, %v1167
  %v1169 = vpop.f32.mrf.mxu0
  %v1170 = vpop.f32.mrf.mxu0
  %v1171 = vadd.f32 %v1010, %v1170
  %v1172 = vpop.f32.mrf.mxu0
  %1173 = vmatprep.mubr.bf16.mxu0 0
  %1174 = vmatmul.mubr.bf16.gmra.mxu0 %v1093
  %v1175 = vpop.f32.mrf.mxu0
  %v1176 = vadd.f32 %v1010, %v1175
  %v1177 = vpop.f32.mrf.mxu0
  %v1178 = vpop.f32.mrf.mxu0
  %v1179 = vadd.f32 %v1010, %v1178
  %v1180 = vpop.f32.mrf.mxu0
  %1181 = vmatprep.mubr.bf16.mxu0 0
  %1182 = vmatmul.mubr.bf16.gmra.mxu0 %v1096
  %v1183 = vpop.f32.mrf.mxu0
  %v1184 = vadd.f32 %v1010, %v1183
  %v1185 = vpop.f32.mrf.mxu0
  %v1186 = vpop.f32.mrf.mxu0
  %v1187 = vadd.f32 %v1010, %v1186
  %v1188 = vpop.f32.mrf.mxu0
  %1189 = vmatprep.mubr.bf16.mxu0 0
  %1190 = vmatmul.mubr.bf16.gmra.mxu0 %v1099
  %v1191 = vpop.f32.mrf.mxu0
  %v1192 = vadd.f32 %v1010, %v1191
  %v1193 = vpop.f32.mrf.mxu0
  %v1194 = vpop.f32.mrf.mxu0
  %v1195 = vadd.f32 %v1010, %v1194
  %v1196 = vpop.f32.mrf.mxu0
  %1197 = vdwg.mxu0
  %v1198 = vmax.f32 %v1136, 0.0
  %v1199 = vmax.f32 %v1139, 0.0
  %v1200 = vmax.f32 %v1144, 0.0
  %v1201 = vmax.f32 %v1147, 0.0
  %v1202 = vmax.f32 %v1152, 0.0
  %v1203 = vmax.f32 %v1155, 0.0
  %v1204 = vmax.f32 %v1160, 0.0
  %v1205 = vmax.f32 %v1163, 0.0
  %v1206 = vmax.f32 %v1168, 0.0
  %v1207 = vmax.f32 %v1171, 0.0
  %v1208 = vmax.f32 %v1176, 0.0
  %v1209 = vmax.f32 %v1179, 0.0
  %v1210 = vmax.f32 %v1184, 0.0
  %v1211 = vmax.f32 %v1187, 0.0
  %v1212 = vmax.f32 %v1192, 0.0
  %v1213 = vmax.f32 %v1195, 0.0
  %vm1230 = vcmask 1046528
  %v1231 = vrot.slane %v261, 1
  %v1232 = vrot.slane %v262, 1
  %v1233 = vsel %vm1230, %v1231, %v1232
  %v1234 = vrot.slane %v263, 1
  %v1235 = vsel %vm1230, %v1232, %v1234
  %v1236 = vrot.slane %v264, 1
  %v1237 = vsel %vm1230, %v1234, %v1236
  %v1238 = vrot.slane %v265, 1
  %v1239 = vsel %vm1230, %v1236, %v1238
  %v1240 = vrot.slane %v266, 1
  %v1241 = vsel %vm1230, %v1238, %v1240
  %v1242 = vrot.slane %v267, 1
  %v1243 = vsel %vm1230, %v1240, %v1242
  %v1244 = vrot.slane %v268, 1
  %v1245 = vsel %vm1230, %v1242, %v1244
  %v1246 = vrot.slane %v269, 1
  %v1247 = vsel %vm1230, %v1244, %v1246
  %v1248 = vrot.slane %v270, 1
  %v1249 = vsel %vm1230, %v1246, %v1248
  %v1250 = vrot.slane %v271, 1
  %v1251 = vsel %vm1230, %v1248, %v1250
  %v1252 = vrot.slane %v272, 1
  %v1253 = vsel %vm1230, %v1250, %v1252
  %v1254 = vrot.slane %v273, 1
  %v1255 = vsel %vm1230, %v1252, %v1254
  %v1256 = vrot.slane %v274, 1
  %v1257 = vsel %vm1230, %v1254, %v1256
  %v1258 = vrot.slane %v275, 1
  %v1259 = vsel %vm1230, %v1256, %v1258
  %v1260 = vrot.slane %v276, 1
  %v1261 = vsel %vm1230, %v1258, %v1260
  %v1279 = vmul.f32 %v1231, 0.0
  %v1280 = vmul.f32 %v1233, 0.0
  %v1281 = vmul.f32 %v1198, %v1235
  %v1282 = vmul.f32 %v1199, %v1237
  %v1283 = vmul.f32 %v1200, %v1239
  %v1284 = vmul.f32 %v1201, %v1241
  %v1285 = vmul.f32 %v1202, %v1243
  %v1286 = vmul.f32 %v1203, %v1245
  %v1287 = vmul.f32 %v1204, %v1247
  %v1288 = vmul.f32 %v1205, %v1249
  %v1289 = vmul.f32 %v1206, %v1251
  %v1290 = vmul.f32 %v1207, %v1253
  %v1291 = vmul.f32 %v1208, %v1255
  %v1292 = vmul.f32 %v1209, %v1257
  %v1293 = vmul.f32 %v1210, %v1259
  %v1294 = vmul.f32 %v1211, %v1261
  %v1295 = vmul.f32 %v1212, %v1260
  %v1296 = vpack.c.bf16 %v1280, %v1279
  %v1297 = vpack.c.bf16 %v1282, %v1281
  %v1298 = vpack.c.bf16 %v1284, %v1283
  %v1299 = vpack.c.bf16 %v1286, %v1285
  %v1300 = vpack.c.bf16 %v1288, %v1287
  %v1301 = vpack.c.bf16 %v1290, %v1289
  %v1302 = vpack.c.bf16 %v1292, %v1291
  %v1303 = vpack.c.bf16 %v1294, %v1293
  %v1304 = vpack.c.bf16 %v1295, %v1295
  %v1305 = vld [vmem:[%s3] sm:$0xf]
  %v1306 = vld [vmem:[%s3 + $0x4] sm:$0xf]
  %v1307 = vmul.f32 %v357, 0.0
  %v1308 = vmul.f32 %v1198, %v358
  %v1309 = vmul.f32 %v1199, %v359
  %v1310 = vmul.f32 %v1200, %v360
  %v1311 = vmul.f32 %v1201, %v361
  %v1312 = vmul.f32 %v1202, %v362
  %v1313 = vmul.f32 %v1203, %v363
  %v1314 = vmul.f32 %v1204, %v364
  %v1315 = vmul.f32 %v1205, %v365
  %v1316 = vmul.f32 %v1206, %v366
  %v1317 = vmul.f32 %v1207, %v367
  %v1318 = vmul.f32 %v1208, %v368
  %v1319 = vmul.f32 %v1209, %v369
  %v1320 = vmul.f32 %v1210, %v370
  %v1321 = vmul.f32 %v1211, %v371
  %v1322 = vmul.f32 %v1212, %v372
  %v1323 = vpack.c.bf16 %v1308, %v1307
  %v1324 = vpack.c.bf16 %v1310, %v1309
  %v1325 = vpack.c.bf16 %v1312, %v1311
  %v1326 = vpack.c.bf16 %v1314, %v1313
  %v1327 = vpack.c.bf16 %v1316, %v1315
  %v1328 = vpack.c.bf16 %v1318, %v1317
  %v1329 = vpack.c.bf16 %v1320, %v1319
  %v1330 = vpack.c.bf16 %v1322, %v1321
  %s1331 = scalar_lea.vmem %s3, 8
  %v1332 = vld [vmem:[%s1331] sm:$0xf]
  %v1333 = vld [vmem:[%s1331 + $0x4] sm:$0xf]
  %v1336 = vunpack.c.l.b16 %v1332
  %v1337 = vunpack.c.l.b16 %v1333
  %v1338 = vpack.c.b16 %v1337, %v1336
  %vm1340 = vcmask 130048
  %v1342 = vsel %vm1340, %v1323, 0
  %v1345 = vsel %vm1340, %v1324, 0
  %v1348 = vsel %vm1340, %v1325, 0
  %v1351 = vsel %vm1340, %v1326, 0
  %v1354 = vsel %vm1340, %v1327, 0
  %v1357 = vsel %vm1340, %v1328, 0
  %v1360 = vsel %vm1340, %v1329, 0
  %v1363 = vsel %vm1340, %v1330, 0
  %1365 = vmatprep.subr.bf16.mxu0 0
  %1366 = vmatpush1.bf16.msra.mxu0 0
  %1367 = vmatprep.subr.bf16.mxu0 0
  %1368 = vmatpush1.bf16.msra.mxu0 0
  %1369 = vmatprep.subr.bf16.mxu0 0
  %1370 = vmatpush1.bf16.msra.mxu0 0
  %1371 = vmatprep.subr.bf16.mxu0 0
  %1372 = vmatpush1.bf16.msra.mxu0 0
  %1373 = vmatprep.subr.bf16.mxu0 0
  %1374 = vmatpush1.bf16.msra.mxu0 0
  %1375 = vmatprep.subr.bf16.mxu0 0
  %1376 = vmatpush1.bf16.msra.mxu0 0
  %1377 = vmatprep.subr.bf16.mxu0 0
  %1378 = vmatpush1.bf16.msra.mxu0 0
  %1379 = vmatprep.subr.bf16.mxu0 0
  %1380 = vmatpush1.bf16.msra.mxu0 %v1338
  %1381 = vmatprep.subr.bf16.mxu0 0
  %1382 = vmatpush2.bf16.msra.mxu0 0
  %1383 = vmatprep.subr.bf16.mxu0 0
  %1384 = vmatpush2.bf16.msra.mxu0 0
  %1385 = vmatprep.subr.bf16.mxu0 0
  %1386 = vmatpush2.bf16.msra.mxu0 0
  %1387 = vmatprep.subr.bf16.mxu0 0
  %1388 = vmatpush2.bf16.msra.mxu0 0
  %1389 = vmatprep.subr.bf16.mxu0 0
  %1390 = vmatpush2.bf16.msra.mxu0 0
  %1391 = vmatprep.subr.bf16.mxu0 0
  %1392 = vmatpush2.bf16.msra.mxu0 0
  %1393 = vmatprep.subr.bf16.mxu0 0
  %1394 = vmatpush2.bf16.msra.mxu0 0
  %1395 = vmatprep.subr.bf16.mxu0 0
  %1396 = vmatpush2.bf16.msra.mxu0 0
  %1397 = vmatprep.mubr.bf16.mxu0 0
  %1398 = vmatmul.mubr.bf16.gmra.mxu0 %v1342
  %v1399 = vpop.f32.mrf.mxu0
  %v1400 = vadd.f32 0.0, %v1399
  %v1401 = vpop.f32.mrf.mxu0
  %v1402 = vpop.f32.mrf.mxu0
  %v1403 = vadd.f32 0.0, %v1402
  %v1404 = vpop.f32.mrf.mxu0
  %1405 = vmatprep.mubr.bf16.mxu0 0
  %1406 = vmatmul.mubr.bf16.gmra.mxu0 %v1345
  %v1407 = vpop.f32.mrf.mxu0
  %v1408 = vadd.f32 0.0, %v1407
  %v1409 = vpop.f32.mrf.mxu0
  %v1410 = vpop.f32.mrf.mxu0
  %v1411 = vadd.f32 0.0, %v1410
  %v1412 = vpop.f32.mrf.mxu0
  %1413 = vmatprep.mubr.bf16.mxu0 0
  %1414 = vmatmul.mubr.bf16.gmra.mxu0 %v1348
  %v1415 = vpop.f32.mrf.mxu0
  %v1416 = vadd.f32 0.0, %v1415
  %v1417 = vpop.f32.mrf.mxu0
  %v1418 = vpop.f32.mrf.mxu0
  %v1419 = vadd.f32 0.0, %v1418
  %v1420 = vpop.f32.mrf.mxu0
  %1421 = vmatprep.mubr.bf16.mxu0 0
  %1422 = vmatmul.mubr.bf16.gmra.mxu0 %v1351
  %v1423 = vpop.f32.mrf.mxu0
  %v1424 = vadd.f32 0.0, %v1423
  %v1425 = vpop.f32.mrf.mxu0
  %v1426 = vpop.f32.mrf.mxu0
  %v1427 = vadd.f32 0.0, %v1426
  %v1428 = vpop.f32.mrf.mxu0
  %1429 = vmatprep.mubr.bf16.mxu0 0
  %1430 = vmatmul.mubr.bf16.gmra.mxu0 %v1354
  %v1431 = vpop.f32.mrf.mxu0
  %v1432 = vadd.f32 0.0, %v1431
  %v1433 = vpop.f32.mrf.mxu0
  %v1434 = vpop.f32.mrf.mxu0
  %v1435 = vadd.f32 0.0, %v1434
  %v1436 = vpop.f32.mrf.mxu0
  %1437 = vmatprep.mubr.bf16.mxu0 0
  %1438 = vmatmul.mubr.bf16.gmra.mxu0 %v1357
  %v1439 = vpop.f32.mrf.mxu0
  %v1440 = vadd.f32 0.0, %v1439
  %v1441 = vpop.f32.mrf.mxu0
  %v1442 = vpop.f32.mrf.mxu0
  %v1443 = vadd.f32 0.0, %v1442
  %v1444 = vpop.f32.mrf.mxu0
  %1445 = vmatprep.mubr.bf16.mxu0 0
  %1446 = vmatmul.mubr.bf16.gmra.mxu0 %v1360
  %v1447 = vpop.f32.mrf.mxu0
  %v1448 = vadd.f32 0.0, %v1447
  %v1449 = vpop.f32.mrf.mxu0
  %v1450 = vpop.f32.mrf.mxu0
  %v1451 = vadd.f32 0.0, %v1450
  %v1452 = vpop.f32.mrf.mxu0
  %1453 = vmatprep.mubr.bf16.mxu0 0
  %1454 = vmatmul.mubr.bf16.gmra.mxu0 %v1363
  %v1455 = vpop.f32.mrf.mxu0
  %v1456 = vadd.f32 0.0, %v1455
  %v1457 = vpop.f32.mrf.mxu0
  %v1458 = vpop.f32.mrf.mxu0
  %v1459 = vadd.f32 0.0, %v1458
  %v1460 = vpop.f32.mrf.mxu0
  %1461 = vdwg.mxu0
  %vm1462 = vsmask.f32 4352
  %v1464 = vshrl.u32 %v1296, 16
  %v1466 = vrot.slane %v1464, 3
  %v1467 = vshll.u32 %v1296, 16
  %v1469 = vrot.slane %v1467, 4
  %v1470 = vor.u32 %v1466, %v1469
  %v1472 = vshrl.u32 %v1297, 16
  %v1474 = vrot.slane %v1472, 3
  %v1475 = vshll.u32 %v1297, 16
  %v1477 = vrot.slane %v1475, 4
  %v1478 = vor.u32 %v1474, %v1477
  %v1479 = vsel %vm1462, %v1470, %v1478
  %v1481 = vshrl.u32 %v1298, 16
  %v1483 = vrot.slane %v1481, 3
  %v1484 = vshll.u32 %v1298, 16
  %v1486 = vrot.slane %v1484, 4
  %v1487 = vor.u32 %v1483, %v1486
  %v1488 = vsel %vm1462, %v1478, %v1487
  %v1490 = vshrl.u32 %v1299, 16
  %v1492 = vrot.slane %v1490, 3
  %v1493 = vshll.u32 %v1299, 16
  %v1495 = vrot.slane %v1493, 4
  %v1496 = vor.u32 %v1492, %v1495
  %v1497 = vsel %vm1462, %v1487, %v1496
  %v1499 = vshrl.u32 %v1300, 16
  %v1501 = vrot.slane %v1499, 3
  %v1502 = vshll.u32 %v1300, 16
  %v1504 = vrot.slane %v1502, 4
  %v1505 = vor.u32 %v1501, %v1504
  %v1506 = vsel %vm1462, %v1496, %v1505
  %v1508 = vshrl.u32 %v1301, 16
  %v1510 = vrot.slane %v1508, 3
  %v1511 = vshll.u32 %v1301, 16
  %v1513 = vrot.slane %v1511, 4
  %v1514 = vor.u32 %v1510, %v1513
  %v1515 = vsel %vm1462, %v1505, %v1514
  %v1517 = vshrl.u32 %v1302, 16
  %v1519 = vrot.slane %v1517, 3
  %v1520 = vshll.u32 %v1302, 16
  %v1522 = vrot.slane %v1520, 4
  %v1523 = vor.u32 %v1519, %v1522
  %v1524 = vsel %vm1462, %v1514, %v1523
  %v1526 = vshrl.u32 %v1303, 16
  %v1528 = vrot.slane %v1526, 3
  %v1529 = vshll.u32 %v1303, 16
  %v1531 = vrot.slane %v1529, 4
  %v1532 = vor.u32 %v1528, %v1531
  %v1533 = vsel %vm1462, %v1523, %v1532
  %v1535 = vshrl.u32 %v1304, 16
  %v1537 = vrot.slane %v1535, 3
  %v1538 = vshll.u32 %v1304, 16
  %v1540 = vrot.slane %v1538, 4
  %v1541 = vor.u32 %v1537, %v1540
  %v1542 = vsel %vm1462, %v1532, %v1541
  %v1545 = vunpack.c.l.b16 %v1305
  %v1546 = vunpack.c.l.b16 %v1306
  %v1547 = vpack.c.b16 %v1546, %v1545
  %v1550 = vsel %vm1340, %v1479, 0
  %v1553 = vsel %vm1340, %v1488, 0
  %v1556 = vsel %vm1340, %v1497, 0
  %v1559 = vsel %vm1340, %v1506, 0
  %v1562 = vsel %vm1340, %v1515, 0
  %v1565 = vsel %vm1340, %v1524, 0
  %v1568 = vsel %vm1340, %v1533, 0
  %v1571 = vsel %vm1340, %v1542, 0
  %1573 = vmatprep.subr.bf16.mxu0 0
  %1574 = vmatpush1.bf16.msra.mxu0 0
  %1575 = vmatprep.subr.bf16.mxu0 0
  %1576 = vmatpush1.bf16.msra.mxu0 0
  %1577 = vmatprep.subr.bf16.mxu0 0
  %1578 = vmatpush1.bf16.msra.mxu0 0
  %1579 = vmatprep.subr.bf16.mxu0 0
  %1580 = vmatpush1.bf16.msra.mxu0 0
  %1581 = vmatprep.subr.bf16.mxu0 0
  %1582 = vmatpush1.bf16.msra.mxu0 0
  %1583 = vmatprep.subr.bf16.mxu0 0
  %1584 = vmatpush1.bf16.msra.mxu0 0
  %1585 = vmatprep.subr.bf16.mxu0 0
  %1586 = vmatpush1.bf16.msra.mxu0 0
  %1587 = vmatprep.subr.bf16.mxu0 0
  %1588 = vmatpush1.bf16.msra.mxu0 %v1547
  %1589 = vmatprep.subr.bf16.mxu0 0
  %1590 = vmatpush2.bf16.msra.mxu0 0
  %1591 = vmatprep.subr.bf16.mxu0 0
  %1592 = vmatpush2.bf16.msra.mxu0 0
  %1593 = vmatprep.subr.bf16.mxu0 0
  %1594 = vmatpush2.bf16.msra.mxu0 0
  %1595 = vmatprep.subr.bf16.mxu0 0
  %1596 = vmatpush2.bf16.msra.mxu0 0
  %1597 = vmatprep.subr.bf16.mxu0 0
  %1598 = vmatpush2.bf16.msra.mxu0 0
  %1599 = vmatprep.subr.bf16.mxu0 0
  %1600 = vmatpush2.bf16.msra.mxu0 0
  %1601 = vmatprep.subr.bf16.mxu0 0
  %1602 = vmatpush2.bf16.msra.mxu0 0
  %1603 = vmatprep.subr.bf16.mxu0 0
  %1604 = vmatpush2.bf16.msra.mxu0 0
  %1605 = vmatprep.mubr.bf16.mxu0 0
  %1606 = vmatmul.mubr.bf16.gmra.mxu0 %v1550
  %v1607 = vpop.f32.mrf.mxu0
  %v1608 = vadd.f32 %v1400, %v1607
  %v1609 = vpop.f32.mrf.mxu0
  %v1610 = vpop.f32.mrf.mxu0
  %v1611 = vadd.f32 %v1403, %v1610
  %v1612 = vpop.f32.mrf.mxu0
  %1613 = vmatprep.mubr.bf16.mxu0 0
  %1614 = vmatmul.mubr.bf16.gmra.mxu0 %v1553
  %v1615 = vpop.f32.mrf.mxu0
  %v1616 = vadd.f32 %v1408, %v1615
  %v1617 = vpop.f32.mrf.mxu0
  %v1618 = vpop.f32.mrf.mxu0
  %v1619 = vadd.f32 %v1411, %v1618
  %v1620 = vpop.f32.mrf.mxu0
  %1621 = vmatprep.mubr.bf16.mxu0 0
  %1622 = vmatmul.mubr.bf16.gmra.mxu0 %v1556
  %v1623 = vpop.f32.mrf.mxu0
  %v1624 = vadd.f32 %v1416, %v1623
  %v1625 = vpop.f32.mrf.mxu0
  %v1626 = vpop.f32.mrf.mxu0
  %v1627 = vadd.f32 %v1419, %v1626
  %v1628 = vpop.f32.mrf.mxu0
  %1629 = vmatprep.mubr.bf16.mxu0 0
  %1630 = vmatmul.mubr.bf16.gmra.mxu0 %v1559
  %v1631 = vpop.f32.mrf.mxu0
  %v1632 = vadd.f32 %v1424, %v1631
  %v1633 = vpop.f32.mrf.mxu0
  %v1634 = vpop.f32.mrf.mxu0
  %v1635 = vadd.f32 %v1427, %v1634
  %v1636 = vpop.f32.mrf.mxu0
  %1637 = vmatprep.mubr.bf16.mxu0 0
  %1638 = vmatmul.mubr.bf16.gmra.mxu0 %v1562
  %v1639 = vpop.f32.mrf.mxu0
  %v1640 = vadd.f32 %v1432, %v1639
  %v1641 = vpop.f32.mrf.mxu0
  %v1642 = vpop.f32.mrf.mxu0
  %v1643 = vadd.f32 %v1435, %v1642
  %v1644 = vpop.f32.mrf.mxu0
  %1645 = vmatprep.mubr.bf16.mxu0 0
  %1646 = vmatmul.mubr.bf16.gmra.mxu0 %v1565
  %v1647 = vpop.f32.mrf.mxu0
  %v1648 = vadd.f32 %v1440, %v1647
  %v1649 = vpop.f32.mrf.mxu0
  %v1650 = vpop.f32.mrf.mxu0
  %v1651 = vadd.f32 %v1443, %v1650
  %v1652 = vpop.f32.mrf.mxu0
  %1653 = vmatprep.mubr.bf16.mxu0 0
  %1654 = vmatmul.mubr.bf16.gmra.mxu0 %v1568
  %v1655 = vpop.f32.mrf.mxu0
  %v1656 = vadd.f32 %v1448, %v1655
  %v1657 = vpop.f32.mrf.mxu0
  %v1658 = vpop.f32.mrf.mxu0
  %v1659 = vadd.f32 %v1451, %v1658
  %v1660 = vpop.f32.mrf.mxu0
  %1661 = vmatprep.mubr.bf16.mxu0 0
  %1662 = vmatmul.mubr.bf16.gmra.mxu0 %v1571
  %v1663 = vpop.f32.mrf.mxu0
  %v1664 = vadd.f32 %v1456, %v1663
  %v1665 = vpop.f32.mrf.mxu0
  %v1666 = vpop.f32.mrf.mxu0
  %v1667 = vadd.f32 %v1459, %v1666
  %v1668 = vpop.f32.mrf.mxu0
  %1669 = vdwg.mxu0
  %vm1686 = vcmask 1040384
  %v1687 = vrot.slane %v469, 7
  %v1688 = vrot.slane %v470, 7
  %v1689 = vsel %vm1686, %v1687, %v1688
  %v1690 = vrot.slane %v471, 7
  %v1691 = vsel %vm1686, %v1688, %v1690
  %v1692 = vrot.slane %v472, 7
  %v1693 = vsel %vm1686, %v1690, %v1692
  %v1694 = vrot.slane %v473, 7
  %v1695 = vsel %vm1686, %v1692, %v1694
  %v1696 = vrot.slane %v474, 7
  %v1697 = vsel %vm1686, %v1694, %v1696
  %v1698 = vrot.slane %v475, 7
  %v1699 = vsel %vm1686, %v1696, %v1698
  %v1700 = vrot.slane %v476, 7
  %v1701 = vsel %vm1686, %v1698, %v1700
  %v1702 = vrot.slane %v477, 7
  %v1703 = vsel %vm1686, %v1700, %v1702
  %v1704 = vrot.slane %v478, 7
  %v1705 = vsel %vm1686, %v1702, %v1704
  %v1706 = vrot.slane %v479, 7
  %v1707 = vsel %vm1686, %v1704, %v1706
  %v1708 = vrot.slane %v480, 7
  %v1709 = vsel %vm1686, %v1706, %v1708
  %v1710 = vrot.slane %v481, 7
  %v1711 = vsel %vm1686, %v1708, %v1710
  %v1712 = vrot.slane %v482, 7
  %v1713 = vsel %vm1686, %v1710, %v1712
  %v1714 = vrot.slane %v483, 7
  %v1715 = vsel %vm1686, %v1712, %v1714
  %v1716 = vrot.slane %v484, 7
  %v1717 = vsel %vm1686, %v1714, %v1716
  %v1735 = vmul.f32 %v1687, 0.0
  %v1736 = vmul.f32 %v1198, %v1689
  %v1737 = vmul.f32 %v1199, %v1691
  %v1738 = vmul.f32 %v1200, %v1693
  %v1739 = vmul.f32 %v1201, %v1695
  %v1740 = vmul.f32 %v1202, %v1697
  %v1741 = vmul.f32 %v1203, %v1699
  %v1742 = vmul.f32 %v1204, %v1701
  %v1743 = vmul.f32 %v1205, %v1703
  %v1744 = vmul.f32 %v1206, %v1705
  %v1745 = vmul.f32 %v1207, %v1707
  %v1746 = vmul.f32 %v1208, %v1709
  %v1747 = vmul.f32 %v1209, %v1711
  %v1748 = vmul.f32 %v1210, %v1713
  %v1749 = vmul.f32 %v1211, %v1715
  %v1750 = vmul.f32 %v1212, %v1717
  %v1751 = vmul.f32 %v1213, %v1716
  %v1752 = vpack.c.bf16 %v1736, %v1735
  %v1753 = vpack.c.bf16 %v1738, %v1737
  %v1754 = vpack.c.bf16 %v1740, %v1739
  %v1755 = vpack.c.bf16 %v1742, %v1741
  %v1756 = vpack.c.bf16 %v1744, %v1743
  %v1757 = vpack.c.bf16 %v1746, %v1745
  %v1758 = vpack.c.bf16 %v1748, %v1747
  %v1759 = vpack.c.bf16 %v1750, %v1749
  %v1760 = vpack.c.bf16 %v1751, %v1751
  %s1761 = scalar_lea.vmem %s3, 16
  %v1762 = vld [vmem:[%s1761] sm:$0xf]
  %v1763 = vld [vmem:[%s1761 + $0x4] sm:$0xf]
  %vm1764 = vsmask.f32 7424
  %v1766 = vshrl.u32 %v1752, 16
  %v1768 = vshll.u32 %v1752, 16
  %v1770 = vrot.slane %v1768, 1
  %v1771 = vor.u32 %v1766, %v1770
  %v1773 = vshll.u32 %v1753, 16
  %v1775 = vrot.slane %v1773, 1
  %v1776 = vsel %vm1764, %v1771, %v1775
  %v1777 = vshrl.u32 %v1753, 16
  %v1779 = vor.u32 %v1777, %v1775
  %v1781 = vshll.u32 %v1754, 16
  %v1783 = vrot.slane %v1781, 1
  %v1784 = vsel %vm1764, %v1779, %v1783
  %v1785 = vshrl.u32 %v1754, 16
  %v1787 = vor.u32 %v1785, %v1783
  %v1789 = vshll.u32 %v1755, 16
  %v1791 = vrot.slane %v1789, 1
  %v1792 = vsel %vm1764, %v1787, %v1791
  %v1793 = vshrl.u32 %v1755, 16
  %v1795 = vor.u32 %v1793, %v1791
  %v1797 = vshll.u32 %v1756, 16
  %v1799 = vrot.slane %v1797, 1
  %v1800 = vsel %vm1764, %v1795, %v1799
  %v1801 = vshrl.u32 %v1756, 16
  %v1803 = vor.u32 %v1801, %v1799
  %v1805 = vshll.u32 %v1757, 16
  %v1807 = vrot.slane %v1805, 1
  %v1808 = vsel %vm1764, %v1803, %v1807
  %v1809 = vshrl.u32 %v1757, 16
  %v1811 = vor.u32 %v1809, %v1807
  %v1813 = vshll.u32 %v1758, 16
  %v1815 = vrot.slane %v1813, 1
  %v1816 = vsel %vm1764, %v1811, %v1815
  %v1817 = vshrl.u32 %v1758, 16
  %v1819 = vor.u32 %v1817, %v1815
  %v1821 = vshll.u32 %v1759, 16
  %v1823 = vrot.slane %v1821, 1
  %v1824 = vsel %vm1764, %v1819, %v1823
  %v1825 = vshrl.u32 %v1759, 16
  %v1827 = vor.u32 %v1825, %v1823
  %v1829 = vshll.u32 %v1760, 16
  %v1831 = vrot.slane %v1829, 1
  %v1832 = vsel %vm1764, %v1827, %v1831
  %v1835 = vunpack.c.l.b16 %v1762
  %v1836 = vunpack.c.l.b16 %v1763
  %v1837 = vpack.c.b16 %v1836, %v1835
  %v1840 = vsel %vm1340, %v1776, 0
  %v1843 = vsel %vm1340, %v1784, 0
  %v1846 = vsel %vm1340, %v1792, 0
  %v1849 = vsel %vm1340, %v1800, 0
  %v1852 = vsel %vm1340, %v1808, 0
  %v1855 = vsel %vm1340, %v1816, 0
  %v1858 = vsel %vm1340, %v1824, 0
  %v1861 = vsel %vm1340, %v1832, 0
  %1863 = vmatprep.subr.bf16.mxu0 0
  %1864 = vmatpush1.bf16.msra.mxu0 0
  %1865 = vmatprep.subr.bf16.mxu0 0
  %1866 = vmatpush1.bf16.msra.mxu0 0
  %1867 = vmatprep.subr.bf16.mxu0 0
  %1868 = vmatpush1.bf16.msra.mxu0 0
  %1869 = vmatprep.subr.bf16.mxu0 0
  %1870 = vmatpush1.bf16.msra.mxu0 0
  %1871 = vmatprep.subr.bf16.mxu0 0
  %1872 = vmatpush1.bf16.msra.mxu0 0
  %1873 = vmatprep.subr.bf16.mxu0 0
  %1874 = vmatpush1.bf16.msra.mxu0 0
  %1875 = vmatprep.subr.bf16.mxu0 0
  %1876 = vmatpush1.bf16.msra.mxu0 0
  %1877 = vmatprep.subr.bf16.mxu0 0
  %1878 = vmatpush1.bf16.msra.mxu0 %v1837
  %1879 = vmatprep.subr.bf16.mxu0 0
  %1880 = vmatpush2.bf16.msra.mxu0 0
  %1881 = vmatprep.subr.bf16.mxu0 0
  %1882 = vmatpush2.bf16.msra.mxu0 0
  %1883 = vmatprep.subr.bf16.mxu0 0
  %1884 = vmatpush2.bf16.msra.mxu0 0
  %1885 = vmatprep.subr.bf16.mxu0 0
  %1886 = vmatpush2.bf16.msra.mxu0 0
  %1887 = vmatprep.subr.bf16.mxu0 0
  %1888 = vmatpush2.bf16.msra.mxu0 0
  %1889 = vmatprep.subr.bf16.mxu0 0
  %1890 = vmatpush2.bf16.msra.mxu0 0
  %1891 = vmatprep.subr.bf16.mxu0 0
  %1892 = vmatpush2.bf16.msra.mxu0 0
  %1893 = vmatprep.subr.bf16.mxu0 0
  %1894 = vmatpush2.bf16.msra.mxu0 0
  %1895 = vmatprep.mubr.bf16.mxu0 0
  %1896 = vmatmul.mubr.bf16.gmra.mxu0 %v1840
  %v1897 = vpop.f32.mrf.mxu0
  %v1898 = vadd.f32 0.0, %v1897
  %v1899 = vpop.f32.mrf.mxu0
  %v1900 = vpop.f32.mrf.mxu0
  %v1901 = vadd.f32 0.0, %v1900
  %v1902 = vpop.f32.mrf.mxu0
  %1903 = vmatprep.mubr.bf16.mxu0 0
  %1904 = vmatmul.mubr.bf16.gmra.mxu0 %v1843
  %v1905 = vpop.f32.mrf.mxu0
  %v1906 = vadd.f32 0.0, %v1905
  %v1907 = vpop.f32.mrf.mxu0
  %v1908 = vpop.f32.mrf.mxu0
  %v1909 = vadd.f32 0.0, %v1908
  %v1910 = vpop.f32.mrf.mxu0
  %1911 = vmatprep.mubr.bf16.mxu0 0
  %1912 = vmatmul.mubr.bf16.gmra.mxu0 %v1846
  %v1913 = vpop.f32.mrf.mxu0
  %v1914 = vadd.f32 0.0, %v1913
  %v1915 = vpop.f32.mrf.mxu0
  %v1916 = vpop.f32.mrf.mxu0
  %v1917 = vadd.f32 0.0, %v1916
  %v1918 = vpop.f32.mrf.mxu0
  %1919 = vmatprep.mubr.bf16.mxu0 0
  %1920 = vmatmul.mubr.bf16.gmra.mxu0 %v1849
  %v1921 = vpop.f32.mrf.mxu0
  %v1922 = vadd.f32 0.0, %v1921
  %v1923 = vpop.f32.mrf.mxu0
  %v1924 = vpop.f32.mrf.mxu0
  %v1925 = vadd.f32 0.0, %v1924
  %v1926 = vpop.f32.mrf.mxu0
  %1927 = vmatprep.mubr.bf16.mxu0 0
  %1928 = vmatmul.mubr.bf16.gmra.mxu0 %v1852
  %v1929 = vpop.f32.mrf.mxu0
  %v1930 = vadd.f32 0.0, %v1929
  %v1931 = vpop.f32.mrf.mxu0
  %v1932 = vpop.f32.mrf.mxu0
  %v1933 = vadd.f32 0.0, %v1932
  %v1934 = vpop.f32.mrf.mxu0
  %1935 = vmatprep.mubr.bf16.mxu0 0
  %1936 = vmatmul.mubr.bf16.gmra.mxu0 %v1855
  %v1937 = vpop.f32.mrf.mxu0
  %v1938 = vadd.f32 0.0, %v1937
  %v1939 = vpop.f32.mrf.mxu0
  %v1940 = vpop.f32.mrf.mxu0
  %v1941 = vadd.f32 0.0, %v1940
  %v1942 = vpop.f32.mrf.mxu0
  %1943 = vmatprep.mubr.bf16.mxu0 0
  %1944 = vmatmul.mubr.bf16.gmra.mxu0 %v1858
  %v1945 = vpop.f32.mrf.mxu0
  %v1946 = vadd.f32 0.0, %v1945
  %v1947 = vpop.f32.mrf.mxu0
  %v1948 = vpop.f32.mrf.mxu0
  %v1949 = vadd.f32 0.0, %v1948
  %v1950 = vpop.f32.mrf.mxu0
  %1951 = vmatprep.mubr.bf16.mxu0 0
  %1952 = vmatmul.mubr.bf16.gmra.mxu0 %v1861
  %v1953 = vpop.f32.mrf.mxu0
  %v1954 = vadd.f32 0.0, %v1953
  %v1955 = vpop.f32.mrf.mxu0
  %v1956 = vpop.f32.mrf.mxu0
  %v1957 = vadd.f32 0.0, %v1956
  %v1958 = vpop.f32.mrf.mxu0
  %1959 = vdwg.mxu0
  %v1960 = vadd.f32 %v1608, %v1898
  %v1961 = vadd.f32 %v1611, %v1901
  %v1962 = vadd.f32 %v1616, %v1906
  %v1963 = vadd.f32 %v1619, %v1909
  %v1964 = vadd.f32 %v1624, %v1914
  %v1965 = vadd.f32 %v1627, %v1917
  %v1966 = vadd.f32 %v1632, %v1922
  %v1967 = vadd.f32 %v1635, %v1925
  %v1968 = vadd.f32 %v1640, %v1930
  %v1969 = vadd.f32 %v1643, %v1933
  %v1970 = vadd.f32 %v1648, %v1938
  %v1971 = vadd.f32 %v1651, %v1941
  %v1972 = vadd.f32 %v1656, %v1946
  %v1973 = vadd.f32 %v1659, %v1949
  %v1974 = vadd.f32 %v1664, %v1954
  %v1975 = vadd.f32 %v1667, %v1957
  %v1992 = vrot.slane %v581, 1
  %v1993 = vrot.slane %v582, 1
  %v1994 = vsel %vm1230, %v1992, %v1993
  %v1995 = vrot.slane %v583, 1
  %v1996 = vsel %vm1230, %v1993, %v1995
  %v1997 = vrot.slane %v584, 1
  %v1998 = vsel %vm1230, %v1995, %v1997
  %v1999 = vrot.slane %v585, 1
  %v2000 = vsel %vm1230, %v1997, %v1999
  %v2001 = vrot.slane %v586, 1
  %v2002 = vsel %vm1230, %v1999, %v2001
  %v2003 = vrot.slane %v587, 1
  %v2004 = vsel %vm1230, %v2001, %v2003
  %v2005 = vrot.slane %v588, 1
  %v2006 = vsel %vm1230, %v2003, %v2005
  %v2007 = vrot.slane %v589, 1
  %v2008 = vsel %vm1230, %v2005, %v2007
  %v2009 = vrot.slane %v590, 1
  %v2010 = vsel %vm1230, %v2007, %v2009
  %v2011 = vrot.slane %v591, 1
  %v2012 = vsel %vm1230, %v2009, %v2011
  %v2013 = vrot.slane %v592, 1
  %v2014 = vsel %vm1230, %v2011, %v2013
  %v2015 = vrot.slane %v593, 1
  %v2016 = vsel %vm1230, %v2013, %v2015
  %v2017 = vrot.slane %v594, 1
  %v2018 = vsel %vm1230, %v2015, %v2017
  %v2019 = vrot.slane %v595, 1
  %v2020 = vsel %vm1230, %v2017, %v2019
  %v2021 = vrot.slane %v596, 1
  %v2022 = vsel %vm1230, %v2019, %v2021
  %v2040 = vmul.f32 %v1992, 0.0
  %v2041 = vmul.f32 %v1198, %v1994
  %v2042 = vmul.f32 %v1199, %v1996
  %v2043 = vmul.f32 %v1200, %v1998
  %v2044 = vmul.f32 %v1201, %v2000
  %v2045 = vmul.f32 %v1202, %v2002
  %v2046 = vmul.f32 %v1203, %v2004
  %v2047 = vmul.f32 %v1204, %v2006
  %v2048 = vmul.f32 %v1205, %v2008
  %v2049 = vmul.f32 %v1206, %v2010
  %v2050 = vmul.f32 %v1207, %v2012
  %v2051 = vmul.f32 %v1208, %v2014
  %v2052 = vmul.f32 %v1209, %v2016
  %v2053 = vmul.f32 %v1210, %v2018
  %v2054 = vmul.f32 %v1211, %v2020
  %v2055 = vmul.f32 %v1212, %v2022
  %v2056 = vmul.f32 %v1213, %v2021
  %v2057 = vpack.c.bf16 %v2041, %v2040
  %v2058 = vpack.c.bf16 %v2043, %v2042
  %v2059 = vpack.c.bf16 %v2045, %v2044
  %v2060 = vpack.c.bf16 %v2047, %v2046
  %v2061 = vpack.c.bf16 %v2049, %v2048
  %v2062 = vpack.c.bf16 %v2051, %v2050
  %v2063 = vpack.c.bf16 %v2053, %v2052
  %v2064 = vpack.c.bf16 %v2055, %v2054
  %v2065 = vpack.c.bf16 %v2056, %v2056
  %s2066 = scalar_lea.vmem %s3, 24
  %v2067 = vld [vmem:[%s2066] sm:$0xf]
  %v2068 = vld [vmem:[%s2066 + $0x4] sm:$0xf]
  %v2070 = vshrl.u32 %v2057, 16
  %v2072 = vrot.slane %v2070, 3
  %v2073 = vshll.u32 %v2057, 16
  %v2075 = vrot.slane %v2073, 4
  %v2076 = vor.u32 %v2072, %v2075
  %v2078 = vshrl.u32 %v2058, 16
  %v2080 = vrot.slane %v2078, 3
  %v2081 = vshll.u32 %v2058, 16
  %v2083 = vrot.slane %v2081, 4
  %v2084 = vor.u32 %v2080, %v2083
  %v2085 = vsel %vm1462, %v2076, %v2084
  %v2087 = vshrl.u32 %v2059, 16
  %v2089 = vrot.slane %v2087, 3
  %v2090 = vshll.u32 %v2059, 16
  %v2092 = vrot.slane %v2090, 4
  %v2093 = vor.u32 %v2089, %v2092
  %v2094 = vsel %vm1462, %v2084, %v2093
  %v2096 = vshrl.u32 %v2060, 16
  %v2098 = vrot.slane %v2096, 3
  %v2099 = vshll.u32 %v2060, 16
  %v2101 = vrot.slane %v2099, 4
  %v2102 = vor.u32 %v2098, %v2101
  %v2103 = vsel %vm1462, %v2093, %v2102
  %v2105 = vshrl.u32 %v2061, 16
  %v2107 = vrot.slane %v2105, 3
  %v2108 = vshll.u32 %v2061, 16
  %v2110 = vrot.slane %v2108, 4
  %v2111 = vor.u32 %v2107, %v2110
  %v2112 = vsel %vm1462, %v2102, %v2111
  %v2114 = vshrl.u32 %v2062, 16
  %v2116 = vrot.slane %v2114, 3
  %v2117 = vshll.u32 %v2062, 16
  %v2119 = vrot.slane %v2117, 4
  %v2120 = vor.u32 %v2116, %v2119
  %v2121 = vsel %vm1462, %v2111, %v2120
  %v2123 = vshrl.u32 %v2063, 16
  %v2125 = vrot.slane %v2123, 3
  %v2126 = vshll.u32 %v2063, 16
  %v2128 = vrot.slane %v2126, 4
  %v2129 = vor.u32 %v2125, %v2128
  %v2130 = vsel %vm1462, %v2120, %v2129
  %v2132 = vshrl.u32 %v2064, 16
  %v2134 = vrot.slane %v2132, 3
  %v2135 = vshll.u32 %v2064, 16
  %v2137 = vrot.slane %v2135, 4
  %v2138 = vor.u32 %v2134, %v2137
  %v2139 = vsel %vm1462, %v2129, %v2138
  %v2141 = vshrl.u32 %v2065, 16
  %v2143 = vrot.slane %v2141, 3
  %v2144 = vshll.u32 %v2065, 16
  %v2146 = vrot.slane %v2144, 4
  %v2147 = vor.u32 %v2143, %v2146
  %v2148 = vsel %vm1462, %v2138, %v2147
  %v2151 = vunpack.c.l.b16 %v2067
  %v2152 = vunpack.c.l.b16 %v2068
  %v2153 = vpack.c.b16 %v2152, %v2151
  %v2156 = vsel %vm1340, %v2085, 0
  %v2159 = vsel %vm1340, %v2094, 0
  %v2162 = vsel %vm1340, %v2103, 0
  %v2165 = vsel %vm1340, %v2112, 0
  %v2168 = vsel %vm1340, %v2121, 0
  %v2171 = vsel %vm1340, %v2130, 0
  %v2174 = vsel %vm1340, %v2139, 0
  %v2177 = vsel %vm1340, %v2148, 0
  %2179 = vmatprep.subr.bf16.mxu0 0
  %2180 = vmatpush1.bf16.msra.mxu0 0
  %2181 = vmatprep.subr.bf16.mxu0 0
  %2182 = vmatpush1.bf16.msra.mxu0 0
  %2183 = vmatprep.subr.bf16.mxu0 0
  %2184 = vmatpush1.bf16.msra.mxu0 0
  %2185 = vmatprep.subr.bf16.mxu0 0
  %2186 = vmatpush1.bf16.msra.mxu0 0
  %2187 = vmatprep.subr.bf16.mxu0 0
  %2188 = vmatpush1.bf16.msra.mxu0 0
  %2189 = vmatprep.subr.bf16.mxu0 0
  %2190 = vmatpush1.bf16.msra.mxu0 0
  %2191 = vmatprep.subr.bf16.mxu0 0
  %2192 = vmatpush1.bf16.msra.mxu0 0
  %2193 = vmatprep.subr.bf16.mxu0 0
  %2194 = vmatpush1.bf16.msra.mxu0 %v2153
  %2195 = vmatprep.subr.bf16.mxu0 0
  %2196 = vmatpush2.bf16.msra.mxu0 0
  %2197 = vmatprep.subr.bf16.mxu0 0
  %2198 = vmatpush2.bf16.msra.mxu0 0
  %2199 = vmatprep.subr.bf16.mxu0 0
  %2200 = vmatpush2.bf16.msra.mxu0 0
  %2201 = vmatprep.subr.bf16.mxu0 0
  %2202 = vmatpush2.bf16.msra.mxu0 0
  %2203 = vmatprep.subr.bf16.mxu0 0
  %2204 = vmatpush2.bf16.msra.mxu0 0
  %2205 = vmatprep.subr.bf16.mxu0 0
  %2206 = vmatpush2.bf16.msra.mxu0 0
  %2207 = vmatprep.subr.bf16.mxu0 0
  %2208 = vmatpush2.bf16.msra.mxu0 0
  %2209 = vmatprep.subr.bf16.mxu0 0
  %2210 = vmatpush2.bf16.msra.mxu0 0
  %2211 = vmatprep.mubr.bf16.mxu0 0
  %2212 = vmatmul.mubr.bf16.gmra.mxu0 %v2156
  %v2213 = vpop.f32.mrf.mxu0
  %v2214 = vadd.f32 0.0, %v2213
  %v2215 = vpop.f32.mrf.mxu0
  %v2216 = vpop.f32.mrf.mxu0
  %v2217 = vadd.f32 0.0, %v2216
  %v2218 = vpop.f32.mrf.mxu0
  %2219 = vmatprep.mubr.bf16.mxu0 0
  %2220 = vmatmul.mubr.bf16.gmra.mxu0 %v2159
  %v2221 = vpop.f32.mrf.mxu0
  %v2222 = vadd.f32 0.0, %v2221
  %v2223 = vpop.f32.mrf.mxu0
  %v2224 = vpop.f32.mrf.mxu0
  %v2225 = vadd.f32 0.0, %v2224
  %v2226 = vpop.f32.mrf.mxu0
  %2227 = vmatprep.mubr.bf16.mxu0 0
  %2228 = vmatmul.mubr.bf16.gmra.mxu0 %v2162
  %v2229 = vpop.f32.mrf.mxu0
  %v2230 = vadd.f32 0.0, %v2229
  %v2231 = vpop.f32.mrf.mxu0
  %v2232 = vpop.f32.mrf.mxu0
  %v2233 = vadd.f32 0.0, %v2232
  %v2234 = vpop.f32.mrf.mxu0
  %2235 = vmatprep.mubr.bf16.mxu0 0
  %2236 = vmatmul.mubr.bf16.gmra.mxu0 %v2165
  %v2237 = vpop.f32.mrf.mxu0
  %v2238 = vadd.f32 0.0, %v2237
  %v2239 = vpop.f32.mrf.mxu0
  %v2240 = vpop.f32.mrf.mxu0
  %v2241 = vadd.f32 0.0, %v2240
  %v2242 = vpop.f32.mrf.mxu0
  %2243 = vmatprep.mubr.bf16.mxu0 0
  %2244 = vmatmul.mubr.bf16.gmra.mxu0 %v2168
  %v2245 = vpop.f32.mrf.mxu0
  %v2246 = vadd.f32 0.0, %v2245
  %v2247 = vpop.f32.mrf.mxu0
  %v2248 = vpop.f32.mrf.mxu0
  %v2249 = vadd.f32 0.0, %v2248
  %v2250 = vpop.f32.mrf.mxu0
  %2251 = vmatprep.mubr.bf16.mxu0 0
  %2252 = vmatmul.mubr.bf16.gmra.mxu0 %v2171
  %v2253 = vpop.f32.mrf.mxu0
  %v2254 = vadd.f32 0.0, %v2253
  %v2255 = vpop.f32.mrf.mxu0
  %v2256 = vpop.f32.mrf.mxu0
  %v2257 = vadd.f32 0.0, %v2256
  %v2258 = vpop.f32.mrf.mxu0
  %2259 = vmatprep.mubr.bf16.mxu0 0
  %2260 = vmatmul.mubr.bf16.gmra.mxu0 %v2174
  %v2261 = vpop.f32.mrf.mxu0
  %v2262 = vadd.f32 0.0, %v2261
  %v2263 = vpop.f32.mrf.mxu0
  %v2264 = vpop.f32.mrf.mxu0
  %v2265 = vadd.f32 0.0, %v2264
  %v2266 = vpop.f32.mrf.mxu0
  %2267 = vmatprep.mubr.bf16.mxu0 0
  %2268 = vmatmul.mubr.bf16.gmra.mxu0 %v2177
  %v2269 = vpop.f32.mrf.mxu0
  %v2270 = vadd.f32 0.0, %v2269
  %v2271 = vpop.f32.mrf.mxu0
  %v2272 = vpop.f32.mrf.mxu0
  %v2273 = vadd.f32 0.0, %v2272
  %v2274 = vpop.f32.mrf.mxu0
  %2275 = vdwg.mxu0
  %v2276 = vadd.f32 %v1960, %v2214
  %v2277 = vadd.f32 %v1961, %v2217
  %v2278 = vadd.f32 %v1962, %v2222
  %v2279 = vadd.f32 %v1963, %v2225
  %v2280 = vadd.f32 %v1964, %v2230
  %v2281 = vadd.f32 %v1965, %v2233
  %v2282 = vadd.f32 %v1966, %v2238
  %v2283 = vadd.f32 %v1967, %v2241
  %v2284 = vadd.f32 %v1968, %v2246
  %v2285 = vadd.f32 %v1969, %v2249
  %v2286 = vadd.f32 %v1970, %v2254
  %v2287 = vadd.f32 %v1971, %v2257
  %v2288 = vadd.f32 %v1972, %v2262
  %v2289 = vadd.f32 %v1973, %v2265
  %v2290 = vadd.f32 %v1974, %v2270
  %v2291 = vadd.f32 %v1975, %v2273
  %v2292 = vmul.f32 %v1198, %v645
  %v2293 = vmul.f32 %v1199, %v646
  %v2294 = vmul.f32 %v1200, %v647
  %v2295 = vmul.f32 %v1201, %v648
  %v2296 = vmul.f32 %v1202, %v649
  %v2297 = vmul.f32 %v1203, %v650
  %v2298 = vmul.f32 %v1204, %v651
  %v2299 = vmul.f32 %v1205, %v652
  %v2300 = vmul.f32 %v1206, %v653
  %v2301 = vmul.f32 %v1207, %v654
  %v2302 = vmul.f32 %v1208, %v655
  %v2303 = vmul.f32 %v1209, %v656
  %v2304 = vmul.f32 %v1210, %v657
  %v2305 = vmul.f32 %v1211, %v658
  %v2306 = vmul.f32 %v1212, %v659
  %v2307 = vmul.f32 %v1213, %v660
  %v2308 = vpack.c.bf16 %v2293, %v2292
  %v2309 = vpack.c.bf16 %v2295, %v2294
  %v2310 = vpack.c.bf16 %v2297, %v2296
  %v2311 = vpack.c.bf16 %v2299, %v2298
  %v2312 = vpack.c.bf16 %v2301, %v2300
  %v2313 = vpack.c.bf16 %v2303, %v2302
  %v2314 = vpack.c.bf16 %v2305, %v2304
  %v2315 = vpack.c.bf16 %v2307, %v2306
  %s2316 = scalar_lea.vmem %s3, 32
  %v2317 = vld [vmem:[%s2316] sm:$0xf]
  %v2318 = vld [vmem:[%s2316 + $0x4] sm:$0xf]
  %v2321 = vunpack.c.l.b16 %v2317
  %v2322 = vunpack.c.l.b16 %v2318
  %v2323 = vpack.c.b16 %v2322, %v2321
  %v2326 = vsel %vm1340, %v2308, 0
  %v2329 = vsel %vm1340, %v2309, 0
  %v2332 = vsel %vm1340, %v2310, 0
  %v2335 = vsel %vm1340, %v2311, 0
  %v2338 = vsel %vm1340, %v2312, 0
  %v2341 = vsel %vm1340, %v2313, 0
  %v2344 = vsel %vm1340, %v2314, 0
  %v2347 = vsel %vm1340, %v2315, 0
  %2349 = vmatprep.subr.bf16.mxu0 0
  %2350 = vmatpush1.bf16.msra.mxu0 0
  %2351 = vmatprep.subr.bf16.mxu0 0
  %2352 = vmatpush1.bf16.msra.mxu0 0
  %2353 = vmatprep.subr.bf16.mxu0 0
  %2354 = vmatpush1.bf16.msra.mxu0 0
  %2355 = vmatprep.subr.bf16.mxu0 0
  %2356 = vmatpush1.bf16.msra.mxu0 0
  %2357 = vmatprep.subr.bf16.mxu0 0
  %2358 = vmatpush1.bf16.msra.mxu0 0
  %2359 = vmatprep.subr.bf16.mxu0 0
  %2360 = vmatpush1.bf16.msra.mxu0 0
  %2361 = vmatprep.subr.bf16.mxu0 0
  %2362 = vmatpush1.bf16.msra.mxu0 0
  %2363 = vmatprep.subr.bf16.mxu0 0
  %2364 = vmatpush1.bf16.msra.mxu0 %v2323
  %2365 = vmatprep.subr.bf16.mxu0 0
  %2366 = vmatpush2.bf16.msra.mxu0 0
  %2367 = vmatprep.subr.bf16.mxu0 0
  %2368 = vmatpush2.bf16.msra.mxu0 0
  %2369 = vmatprep.subr.bf16.mxu0 0
  %2370 = vmatpush2.bf16.msra.mxu0 0
  %2371 = vmatprep.subr.bf16.mxu0 0
  %2372 = vmatpush2.bf16.msra.mxu0 0
  %2373 = vmatprep.subr.bf16.mxu0 0
  %2374 = vmatpush2.bf16.msra.mxu0 0
  %2375 = vmatprep.subr.bf16.mxu0 0
  %2376 = vmatpush2.bf16.msra.mxu0 0
  %2377 = vmatprep.subr.bf16.mxu0 0
  %2378 = vmatpush2.bf16.msra.mxu0 0
  %2379 = vmatprep.subr.bf16.mxu0 0
  %2380 = vmatpush2.bf16.msra.mxu0 0
  %2381 = vmatprep.mubr.bf16.mxu0 0
  %2382 = vmatmul.mubr.bf16.gmra.mxu0 %v2326
  %v2383 = vpop.f32.mrf.mxu0
  %v2384 = vadd.f32 0.0, %v2383
  %v2385 = vpop.f32.mrf.mxu0
  %v2386 = vpop.f32.mrf.mxu0
  %v2387 = vadd.f32 0.0, %v2386
  %v2388 = vpop.f32.mrf.mxu0
  %2389 = vmatprep.mubr.bf16.mxu0 0
  %2390 = vmatmul.mubr.bf16.gmra.mxu0 %v2329
  %v2391 = vpop.f32.mrf.mxu0
  %v2392 = vadd.f32 0.0, %v2391
  %v2393 = vpop.f32.mrf.mxu0
  %v2394 = vpop.f32.mrf.mxu0
  %v2395 = vadd.f32 0.0, %v2394
  %v2396 = vpop.f32.mrf.mxu0
  %2397 = vmatprep.mubr.bf16.mxu0 0
  %2398 = vmatmul.mubr.bf16.gmra.mxu0 %v2332
  %v2399 = vpop.f32.mrf.mxu0
  %v2400 = vadd.f32 0.0, %v2399
  %v2401 = vpop.f32.mrf.mxu0
  %v2402 = vpop.f32.mrf.mxu0
  %v2403 = vadd.f32 0.0, %v2402
  %v2404 = vpop.f32.mrf.mxu0
  %2405 = vmatprep.mubr.bf16.mxu0 0
  %2406 = vmatmul.mubr.bf16.gmra.mxu0 %v2335
  %v2407 = vpop.f32.mrf.mxu0
  %v2408 = vadd.f32 0.0, %v2407
  %v2409 = vpop.f32.mrf.mxu0
  %v2410 = vpop.f32.mrf.mxu0
  %v2411 = vadd.f32 0.0, %v2410
  %v2412 = vpop.f32.mrf.mxu0
  %2413 = vmatprep.mubr.bf16.mxu0 0
  %2414 = vmatmul.mubr.bf16.gmra.mxu0 %v2338
  %v2415 = vpop.f32.mrf.mxu0
  %v2416 = vadd.f32 0.0, %v2415
  %v2417 = vpop.f32.mrf.mxu0
  %v2418 = vpop.f32.mrf.mxu0
  %v2419 = vadd.f32 0.0, %v2418
  %v2420 = vpop.f32.mrf.mxu0
  %2421 = vmatprep.mubr.bf16.mxu0 0
  %2422 = vmatmul.mubr.bf16.gmra.mxu0 %v2341
  %v2423 = vpop.f32.mrf.mxu0
  %v2424 = vadd.f32 0.0, %v2423
  %v2425 = vpop.f32.mrf.mxu0
  %v2426 = vpop.f32.mrf.mxu0
  %v2427 = vadd.f32 0.0, %v2426
  %v2428 = vpop.f32.mrf.mxu0
  %2429 = vmatprep.mubr.bf16.mxu0 0
  %2430 = vmatmul.mubr.bf16.gmra.mxu0 %v2344
  %v2431 = vpop.f32.mrf.mxu0
  %v2432 = vadd.f32 0.0, %v2431
  %v2433 = vpop.f32.mrf.mxu0
  %v2434 = vpop.f32.mrf.mxu0
  %v2435 = vadd.f32 0.0, %v2434
  %v2436 = vpop.f32.mrf.mxu0
  %2437 = vmatprep.mubr.bf16.mxu0 0
  %2438 = vmatmul.mubr.bf16.gmra.mxu0 %v2347
  %v2439 = vpop.f32.mrf.mxu0
  %v2440 = vadd.f32 0.0, %v2439
  %v2441 = vpop.f32.mrf.mxu0
  %v2442 = vpop.f32.mrf.mxu0
  %v2443 = vadd.f32 0.0, %v2442
  %v2444 = vpop.f32.mrf.mxu0
  %2445 = vdwg.mxu0
  %v2446 = vadd.f32 %v2276, %v2384
  %v2447 = vadd.f32 %v2277, %v2387
  %v2448 = vadd.f32 %v2278, %v2392
  %v2449 = vadd.f32 %v2279, %v2395
  %v2450 = vadd.f32 %v2280, %v2400
  %v2451 = vadd.f32 %v2281, %v2403
  %v2452 = vadd.f32 %v2282, %v2408
  %v2453 = vadd.f32 %v2283, %v2411
  %v2454 = vadd.f32 %v2284, %v2416
  %v2455 = vadd.f32 %v2285, %v2419
  %v2456 = vadd.f32 %v2286, %v2424
  %v2457 = vadd.f32 %v2287, %v2427
  %v2458 = vadd.f32 %v2288, %v2432
  %v2459 = vadd.f32 %v2289, %v2435
  %v2460 = vadd.f32 %v2290, %v2440
  %v2461 = vadd.f32 %v2291, %v2443
  %v2478 = vrot.slane %v709, 7
  %v2479 = vrot.slane %v710, 7
  %v2480 = vsel %vm1686, %v2478, %v2479
  %v2481 = vrot.slane %v711, 7
  %v2482 = vsel %vm1686, %v2479, %v2481
  %v2483 = vrot.slane %v712, 7
  %v2484 = vsel %vm1686, %v2481, %v2483
  %v2485 = vrot.slane %v713, 7
  %v2486 = vsel %vm1686, %v2483, %v2485
  %v2487 = vrot.slane %v714, 7
  %v2488 = vsel %vm1686, %v2485, %v2487
  %v2489 = vrot.slane %v715, 7
  %v2490 = vsel %vm1686, %v2487, %v2489
  %v2491 = vrot.slane %v716, 7
  %v2492 = vsel %vm1686, %v2489, %v2491
  %v2493 = vrot.slane %v717, 7
  %v2494 = vsel %vm1686, %v2491, %v2493
  %v2495 = vrot.slane %v718, 7
  %v2496 = vsel %vm1686, %v2493, %v2495
  %v2497 = vrot.slane %v719, 7
  %v2498 = vsel %vm1686, %v2495, %v2497
  %v2499 = vrot.slane %v720, 7
  %v2500 = vsel %vm1686, %v2497, %v2499
  %v2501 = vrot.slane %v721, 7
  %v2502 = vsel %vm1686, %v2499, %v2501
  %v2503 = vrot.slane %v722, 7
  %v2504 = vsel %vm1686, %v2501, %v2503
  %v2505 = vrot.slane %v723, 7
  %v2506 = vsel %vm1686, %v2503, %v2505
  %v2507 = vrot.slane %v724, 7
  %v2508 = vsel %vm1686, %v2505, %v2507
  %v2526 = vmul.f32 %v1198, %v2478
  %v2527 = vmul.f32 %v1199, %v2480
  %v2528 = vmul.f32 %v1200, %v2482
  %v2529 = vmul.f32 %v1201, %v2484
  %v2530 = vmul.f32 %v1202, %v2486
  %v2531 = vmul.f32 %v1203, %v2488
  %v2532 = vmul.f32 %v1204, %v2490
  %v2533 = vmul.f32 %v1205, %v2492
  %v2534 = vmul.f32 %v1206, %v2494
  %v2535 = vmul.f32 %v1207, %v2496
  %v2536 = vmul.f32 %v1208, %v2498
  %v2537 = vmul.f32 %v1209, %v2500
  %v2538 = vmul.f32 %v1210, %v2502
  %v2539 = vmul.f32 %v1211, %v2504
  %v2540 = vmul.f32 %v1212, %v2506
  %v2541 = vmul.f32 %v1213, %v2508
  %v2542 = vmul.f32 %v2507, 0.0
  %v2543 = vpack.c.bf16 %v2527, %v2526
  %v2544 = vpack.c.bf16 %v2529, %v2528
  %v2545 = vpack.c.bf16 %v2531, %v2530
  %v2546 = vpack.c.bf16 %v2533, %v2532
  %v2547 = vpack.c.bf16 %v2535, %v2534
  %v2548 = vpack.c.bf16 %v2537, %v2536
  %v2549 = vpack.c.bf16 %v2539, %v2538
  %v2550 = vpack.c.bf16 %v2541, %v2540
  %v2551 = vpack.c.bf16 %v2542, %v2542
  %s2552 = scalar_lea.vmem %s3, 40
  %v2553 = vld [vmem:[%s2552] sm:$0xf]
  %v2554 = vld [vmem:[%s2552 + $0x4] sm:$0xf]
  %v2556 = vshrl.u32 %v2543, 16
  %v2558 = vshll.u32 %v2543, 16
  %v2560 = vrot.slane %v2558, 1
  %v2561 = vor.u32 %v2556, %v2560
  %v2563 = vshll.u32 %v2544, 16
  %v2565 = vrot.slane %v2563, 1
  %v2566 = vsel %vm1764, %v2561, %v2565
  %v2567 = vshrl.u32 %v2544, 16
  %v2569 = vor.u32 %v2567, %v2565
  %v2571 = vshll.u32 %v2545, 16
  %v2573 = vrot.slane %v2571, 1
  %v2574 = vsel %vm1764, %v2569, %v2573
  %v2575 = vshrl.u32 %v2545, 16
  %v2577 = vor.u32 %v2575, %v2573
  %v2579 = vshll.u32 %v2546, 16
  %v2581 = vrot.slane %v2579, 1
  %v2582 = vsel %vm1764, %v2577, %v2581
  %v2583 = vshrl.u32 %v2546, 16
  %v2585 = vor.u32 %v2583, %v2581
  %v2587 = vshll.u32 %v2547, 16
  %v2589 = vrot.slane %v2587, 1
  %v2590 = vsel %vm1764, %v2585, %v2589
  %v2591 = vshrl.u32 %v2547, 16
  %v2593 = vor.u32 %v2591, %v2589
  %v2595 = vshll.u32 %v2548, 16
  %v2597 = vrot.slane %v2595, 1
  %v2598 = vsel %vm1764, %v2593, %v2597
  %v2599 = vshrl.u32 %v2548, 16
  %v2601 = vor.u32 %v2599, %v2597
  %v2603 = vshll.u32 %v2549, 16
  %v2605 = vrot.slane %v2603, 1
  %v2606 = vsel %vm1764, %v2601, %v2605
  %v2607 = vshrl.u32 %v2549, 16
  %v2609 = vor.u32 %v2607, %v2605
  %v2611 = vshll.u32 %v2550, 16
  %v2613 = vrot.slane %v2611, 1
  %v2614 = vsel %vm1764, %v2609, %v2613
  %v2615 = vshrl.u32 %v2550, 16
  %v2617 = vor.u32 %v2615, %v2613
  %v2619 = vshll.u32 %v2551, 16
  %v2621 = vrot.slane %v2619, 1
  %v2622 = vsel %vm1764, %v2617, %v2621
  %v2625 = vunpack.c.l.b16 %v2553
  %v2626 = vunpack.c.l.b16 %v2554
  %v2627 = vpack.c.b16 %v2626, %v2625
  %v2630 = vsel %vm1340, %v2566, 0
  %v2633 = vsel %vm1340, %v2574, 0
  %v2636 = vsel %vm1340, %v2582, 0
  %v2639 = vsel %vm1340, %v2590, 0
  %v2642 = vsel %vm1340, %v2598, 0
  %v2645 = vsel %vm1340, %v2606, 0
  %v2648 = vsel %vm1340, %v2614, 0
  %v2651 = vsel %vm1340, %v2622, 0
  %2653 = vmatprep.subr.bf16.mxu0 0
  %2654 = vmatpush1.bf16.msra.mxu0 0
  %2655 = vmatprep.subr.bf16.mxu0 0
  %2656 = vmatpush1.bf16.msra.mxu0 0
  %2657 = vmatprep.subr.bf16.mxu0 0
  %2658 = vmatpush1.bf16.msra.mxu0 0
  %2659 = vmatprep.subr.bf16.mxu0 0
  %2660 = vmatpush1.bf16.msra.mxu0 0
  %2661 = vmatprep.subr.bf16.mxu0 0
  %2662 = vmatpush1.bf16.msra.mxu0 0
  %2663 = vmatprep.subr.bf16.mxu0 0
  %2664 = vmatpush1.bf16.msra.mxu0 0
  %2665 = vmatprep.subr.bf16.mxu0 0
  %2666 = vmatpush1.bf16.msra.mxu0 0
  %2667 = vmatprep.subr.bf16.mxu0 0
  %2668 = vmatpush1.bf16.msra.mxu0 %v2627
  %2669 = vmatprep.subr.bf16.mxu0 0
  %2670 = vmatpush2.bf16.msra.mxu0 0
  %2671 = vmatprep.subr.bf16.mxu0 0
  %2672 = vmatpush2.bf16.msra.mxu0 0
  %2673 = vmatprep.subr.bf16.mxu0 0
  %2674 = vmatpush2.bf16.msra.mxu0 0
  %2675 = vmatprep.subr.bf16.mxu0 0
  %2676 = vmatpush2.bf16.msra.mxu0 0
  %2677 = vmatprep.subr.bf16.mxu0 0
  %2678 = vmatpush2.bf16.msra.mxu0 0
  %2679 = vmatprep.subr.bf16.mxu0 0
  %2680 = vmatpush2.bf16.msra.mxu0 0
  %2681 = vmatprep.subr.bf16.mxu0 0
  %2682 = vmatpush2.bf16.msra.mxu0 0
  %2683 = vmatprep.subr.bf16.mxu0 0
  %2684 = vmatpush2.bf16.msra.mxu0 0
  %2685 = vmatprep.mubr.bf16.mxu0 0
  %2686 = vmatmul.mubr.bf16.gmra.mxu0 %v2630
  %v2687 = vpop.f32.mrf.mxu0
  %v2688 = vadd.f32 0.0, %v2687
  %v2689 = vpop.f32.mrf.mxu0
  %v2690 = vpop.f32.mrf.mxu0
  %v2691 = vadd.f32 0.0, %v2690
  %v2692 = vpop.f32.mrf.mxu0
  %2693 = vmatprep.mubr.bf16.mxu0 0
  %2694 = vmatmul.mubr.bf16.gmra.mxu0 %v2633
  %v2695 = vpop.f32.mrf.mxu0
  %v2696 = vadd.f32 0.0, %v2695
  %v2697 = vpop.f32.mrf.mxu0
  %v2698 = vpop.f32.mrf.mxu0
  %v2699 = vadd.f32 0.0, %v2698
  %v2700 = vpop.f32.mrf.mxu0
  %2701 = vmatprep.mubr.bf16.mxu0 0
  %2702 = vmatmul.mubr.bf16.gmra.mxu0 %v2636
  %v2703 = vpop.f32.mrf.mxu0
  %v2704 = vadd.f32 0.0, %v2703
  %v2705 = vpop.f32.mrf.mxu0
  %v2706 = vpop.f32.mrf.mxu0
  %v2707 = vadd.f32 0.0, %v2706
  %v2708 = vpop.f32.mrf.mxu0
  %2709 = vmatprep.mubr.bf16.mxu0 0
  %2710 = vmatmul.mubr.bf16.gmra.mxu0 %v2639
  %v2711 = vpop.f32.mrf.mxu0
  %v2712 = vadd.f32 0.0, %v2711
  %v2713 = vpop.f32.mrf.mxu0
  %v2714 = vpop.f32.mrf.mxu0
  %v2715 = vadd.f32 0.0, %v2714
  %v2716 = vpop.f32.mrf.mxu0
  %2717 = vmatprep.mubr.bf16.mxu0 0
  %2718 = vmatmul.mubr.bf16.gmra.mxu0 %v2642
  %v2719 = vpop.f32.mrf.mxu0
  %v2720 = vadd.f32 0.0, %v2719
  %v2721 = vpop.f32.mrf.mxu0
  %v2722 = vpop.f32.mrf.mxu0
  %v2723 = vadd.f32 0.0, %v2722
  %v2724 = vpop.f32.mrf.mxu0
  %2725 = vmatprep.mubr.bf16.mxu0 0
  %2726 = vmatmul.mubr.bf16.gmra.mxu0 %v2645
  %v2727 = vpop.f32.mrf.mxu0
  %v2728 = vadd.f32 0.0, %v2727
  %v2729 = vpop.f32.mrf.mxu0
  %v2730 = vpop.f32.mrf.mxu0
  %v2731 = vadd.f32 0.0, %v2730
  %v2732 = vpop.f32.mrf.mxu0
  %2733 = vmatprep.mubr.bf16.mxu0 0
  %2734 = vmatmul.mubr.bf16.gmra.mxu0 %v2648
  %v2735 = vpop.f32.mrf.mxu0
  %v2736 = vadd.f32 0.0, %v2735
  %v2737 = vpop.f32.mrf.mxu0
  %v2738 = vpop.f32.mrf.mxu0
  %v2739 = vadd.f32 0.0, %v2738
  %v2740 = vpop.f32.mrf.mxu0
  %2741 = vmatprep.mubr.bf16.mxu0 0
  %2742 = vmatmul.mubr.bf16.gmra.mxu0 %v2651
  %v2743 = vpop.f32.mrf.mxu0
  %v2744 = vadd.f32 0.0, %v2743
  %v2745 = vpop.f32.mrf.mxu0
  %v2746 = vpop.f32.mrf.mxu0
  %v2747 = vadd.f32 0.0, %v2746
  %v2748 = vpop.f32.mrf.mxu0
  %2749 = vdwg.mxu0
  %v2750 = vadd.f32 %v2446, %v2688
  %v2751 = vadd.f32 %v2447, %v2691
  %v2752 = vadd.f32 %v2448, %v2696
  %v2753 = vadd.f32 %v2449, %v2699
  %v2754 = vadd.f32 %v2450, %v2704
  %v2755 = vadd.f32 %v2451, %v2707
  %v2756 = vadd.f32 %v2452, %v2712
  %v2757 = vadd.f32 %v2453, %v2715
  %v2758 = vadd.f32 %v2454, %v2720
  %v2759 = vadd.f32 %v2455, %v2723
  %v2760 = vadd.f32 %v2456, %v2728
  %v2761 = vadd.f32 %v2457, %v2731
  %v2762 = vadd.f32 %v2458, %v2736
  %v2763 = vadd.f32 %v2459, %v2739
  %v2764 = vadd.f32 %v2460, %v2744
  %v2765 = vadd.f32 %v2461, %v2747
  %v2782 = vrot.slane %v837, 1
  %v2783 = vrot.slane %v838, 1
  %v2784 = vsel %vm1230, %v2782, %v2783
  %v2785 = vrot.slane %v839, 1
  %v2786 = vsel %vm1230, %v2783, %v2785
  %v2787 = vrot.slane %v840, 1
  %v2788 = vsel %vm1230, %v2785, %v2787
  %v2789 = vrot.slane %v841, 1
  %v2790 = vsel %vm1230, %v2787, %v2789
  %v2791 = vrot.slane %v842, 1
  %v2792 = vsel %vm1230, %v2789, %v2791
  %v2793 = vrot.slane %v843, 1
  %v2794 = vsel %vm1230, %v2791, %v2793
  %v2795 = vrot.slane %v844, 1
  %v2796 = vsel %vm1230, %v2793, %v2795
  %v2797 = vrot.slane %v845, 1
  %v2798 = vsel %vm1230, %v2795, %v2797
  %v2799 = vrot.slane %v846, 1
  %v2800 = vsel %vm1230, %v2797, %v2799
  %v2801 = vrot.slane %v847, 1
  %v2802 = vsel %vm1230, %v2799, %v2801
  %v2803 = vrot.slane %v848, 1
  %v2804 = vsel %vm1230, %v2801, %v2803
  %v2805 = vrot.slane %v849, 1
  %v2806 = vsel %vm1230, %v2803, %v2805
  %v2807 = vrot.slane %v850, 1
  %v2808 = vsel %vm1230, %v2805, %v2807
  %v2809 = vrot.slane %v851, 1
  %v2810 = vsel %vm1230, %v2807, %v2809
  %v2811 = vrot.slane %v852, 1
  %v2812 = vsel %vm1230, %v2809, %v2811
  %v2830 = vmul.f32 %v1198, %v2782
  %v2831 = vmul.f32 %v1199, %v2784
  %v2832 = vmul.f32 %v1200, %v2786
  %v2833 = vmul.f32 %v1201, %v2788
  %v2834 = vmul.f32 %v1202, %v2790
  %v2835 = vmul.f32 %v1203, %v2792
  %v2836 = vmul.f32 %v1204, %v2794
  %v2837 = vmul.f32 %v1205, %v2796
  %v2838 = vmul.f32 %v1206, %v2798
  %v2839 = vmul.f32 %v1207, %v2800
  %v2840 = vmul.f32 %v1208, %v2802
  %v2841 = vmul.f32 %v1209, %v2804
  %v2842 = vmul.f32 %v1210, %v2806
  %v2843 = vmul.f32 %v1211, %v2808
  %v2844 = vmul.f32 %v1212, %v2810
  %v2845 = vmul.f32 %v1213, %v2812
  %v2846 = vmul.f32 %v2811, 0.0
  %v2847 = vpack.c.bf16 %v2831, %v2830
  %v2848 = vpack.c.bf16 %v2833, %v2832
  %v2849 = vpack.c.bf16 %v2835, %v2834
  %v2850 = vpack.c.bf16 %v2837, %v2836
  %v2851 = vpack.c.bf16 %v2839, %v2838
  %v2852 = vpack.c.bf16 %v2841, %v2840
  %v2853 = vpack.c.bf16 %v2843, %v2842
  %v2854 = vpack.c.bf16 %v2845, %v2844
  %v2855 = vpack.c.bf16 %v2846, %v2846
  %s2856 = scalar_lea.vmem %s3, 48
  %v2857 = vld [vmem:[%s2856] sm:$0xf]
  %v2858 = vld [vmem:[%s2856 + $0x4] sm:$0xf]
  %v2860 = vshrl.u32 %v2847, 16
  %v2862 = vrot.slane %v2860, 3
  %v2863 = vshll.u32 %v2847, 16
  %v2865 = vrot.slane %v2863, 4
  %v2866 = vor.u32 %v2862, %v2865
  %v2868 = vshrl.u32 %v2848, 16
  %v2870 = vrot.slane %v2868, 3
  %v2871 = vshll.u32 %v2848, 16
  %v2873 = vrot.slane %v2871, 4
  %v2874 = vor.u32 %v2870, %v2873
  %v2875 = vsel %vm1462, %v2866, %v2874
  %v2877 = vshrl.u32 %v2849, 16
  %v2879 = vrot.slane %v2877, 3
  %v2880 = vshll.u32 %v2849, 16
  %v2882 = vrot.slane %v2880, 4
  %v2883 = vor.u32 %v2879, %v2882
  %v2884 = vsel %vm1462, %v2874, %v2883
  %v2886 = vshrl.u32 %v2850, 16
  %v2888 = vrot.slane %v2886, 3
  %v2889 = vshll.u32 %v2850, 16
  %v2891 = vrot.slane %v2889, 4
  %v2892 = vor.u32 %v2888, %v2891
  %v2893 = vsel %vm1462, %v2883, %v2892
  %v2895 = vshrl.u32 %v2851, 16
  %v2897 = vrot.slane %v2895, 3
  %v2898 = vshll.u32 %v2851, 16
  %v2900 = vrot.slane %v2898, 4
  %v2901 = vor.u32 %v2897, %v2900
  %v2902 = vsel %vm1462, %v2892, %v2901
  %v2904 = vshrl.u32 %v2852, 16
  %v2906 = vrot.slane %v2904, 3
  %v2907 = vshll.u32 %v2852, 16
  %v2909 = vrot.slane %v2907, 4
  %v2910 = vor.u32 %v2906, %v2909
  %v2911 = vsel %vm1462, %v2901, %v2910
  %v2913 = vshrl.u32 %v2853, 16
  %v2915 = vrot.slane %v2913, 3
  %v2916 = vshll.u32 %v2853, 16
  %v2918 = vrot.slane %v2916, 4
  %v2919 = vor.u32 %v2915, %v2918
  %v2920 = vsel %vm1462, %v2910, %v2919
  %v2922 = vshrl.u32 %v2854, 16
  %v2924 = vrot.slane %v2922, 3
  %v2925 = vshll.u32 %v2854, 16
  %v2927 = vrot.slane %v2925, 4
  %v2928 = vor.u32 %v2924, %v2927
  %v2929 = vsel %vm1462, %v2919, %v2928
  %v2931 = vshrl.u32 %v2855, 16
  %v2933 = vrot.slane %v2931, 3
  %v2934 = vshll.u32 %v2855, 16
  %v2936 = vrot.slane %v2934, 4
  %v2937 = vor.u32 %v2933, %v2936
  %v2938 = vsel %vm1462, %v2928, %v2937
  %v2941 = vunpack.c.l.b16 %v2857
  %v2942 = vunpack.c.l.b16 %v2858
  %v2943 = vpack.c.b16 %v2942, %v2941
  %v2946 = vsel %vm1340, %v2875, 0
  %v2949 = vsel %vm1340, %v2884, 0
  %v2952 = vsel %vm1340, %v2893, 0
  %v2955 = vsel %vm1340, %v2902, 0
  %v2958 = vsel %vm1340, %v2911, 0
  %v2961 = vsel %vm1340, %v2920, 0
  %v2964 = vsel %vm1340, %v2929, 0
  %v2967 = vsel %vm1340, %v2938, 0
  %2969 = vmatprep.subr.bf16.mxu0 0
  %2970 = vmatpush1.bf16.msra.mxu0 0
  %2971 = vmatprep.subr.bf16.mxu0 0
  %2972 = vmatpush1.bf16.msra.mxu0 0
  %2973 = vmatprep.subr.bf16.mxu0 0
  %2974 = vmatpush1.bf16.msra.mxu0 0
  %2975 = vmatprep.subr.bf16.mxu0 0
  %2976 = vmatpush1.bf16.msra.mxu0 0
  %2977 = vmatprep.subr.bf16.mxu0 0
  %2978 = vmatpush1.bf16.msra.mxu0 0
  %2979 = vmatprep.subr.bf16.mxu0 0
  %2980 = vmatpush1.bf16.msra.mxu0 0
  %2981 = vmatprep.subr.bf16.mxu0 0
  %2982 = vmatpush1.bf16.msra.mxu0 0
  %2983 = vmatprep.subr.bf16.mxu0 0
  %2984 = vmatpush1.bf16.msra.mxu0 %v2943
  %2985 = vmatprep.subr.bf16.mxu0 0
  %2986 = vmatpush2.bf16.msra.mxu0 0
  %2987 = vmatprep.subr.bf16.mxu0 0
  %2988 = vmatpush2.bf16.msra.mxu0 0
  %2989 = vmatprep.subr.bf16.mxu0 0
  %2990 = vmatpush2.bf16.msra.mxu0 0
  %2991 = vmatprep.subr.bf16.mxu0 0
  %2992 = vmatpush2.bf16.msra.mxu0 0
  %2993 = vmatprep.subr.bf16.mxu0 0
  %2994 = vmatpush2.bf16.msra.mxu0 0
  %2995 = vmatprep.subr.bf16.mxu0 0
  %2996 = vmatpush2.bf16.msra.mxu0 0
  %2997 = vmatprep.subr.bf16.mxu0 0
  %2998 = vmatpush2.bf16.msra.mxu0 0
  %2999 = vmatprep.subr.bf16.mxu0 0
  %3000 = vmatpush2.bf16.msra.mxu0 0
  %3001 = vmatprep.mubr.bf16.mxu0 0
  %3002 = vmatmul.mubr.bf16.gmra.mxu0 %v2946
  %v3003 = vpop.f32.mrf.mxu0
  %v3004 = vadd.f32 0.0, %v3003
  %v3005 = vpop.f32.mrf.mxu0
  %v3006 = vpop.f32.mrf.mxu0
  %v3007 = vadd.f32 0.0, %v3006
  %v3008 = vpop.f32.mrf.mxu0
  %3009 = vmatprep.mubr.bf16.mxu0 0
  %3010 = vmatmul.mubr.bf16.gmra.mxu0 %v2949
  %v3011 = vpop.f32.mrf.mxu0
  %v3012 = vadd.f32 0.0, %v3011
  %v3013 = vpop.f32.mrf.mxu0
  %v3014 = vpop.f32.mrf.mxu0
  %v3015 = vadd.f32 0.0, %v3014
  %v3016 = vpop.f32.mrf.mxu0
  %3017 = vmatprep.mubr.bf16.mxu0 0
  %3018 = vmatmul.mubr.bf16.gmra.mxu0 %v2952
  %v3019 = vpop.f32.mrf.mxu0
  %v3020 = vadd.f32 0.0, %v3019
  %v3021 = vpop.f32.mrf.mxu0
  %v3022 = vpop.f32.mrf.mxu0
  %v3023 = vadd.f32 0.0, %v3022
  %v3024 = vpop.f32.mrf.mxu0
  %3025 = vmatprep.mubr.bf16.mxu0 0
  %3026 = vmatmul.mubr.bf16.gmra.mxu0 %v2955
  %v3027 = vpop.f32.mrf.mxu0
  %v3028 = vadd.f32 0.0, %v3027
  %v3029 = vpop.f32.mrf.mxu0
  %v3030 = vpop.f32.mrf.mxu0
  %v3031 = vadd.f32 0.0, %v3030
  %v3032 = vpop.f32.mrf.mxu0
  %3033 = vmatprep.mubr.bf16.mxu0 0
  %3034 = vmatmul.mubr.bf16.gmra.mxu0 %v2958
  %v3035 = vpop.f32.mrf.mxu0
  %v3036 = vadd.f32 0.0, %v3035
  %v3037 = vpop.f32.mrf.mxu0
  %v3038 = vpop.f32.mrf.mxu0
  %v3039 = vadd.f32 0.0, %v3038
  %v3040 = vpop.f32.mrf.mxu0
  %3041 = vmatprep.mubr.bf16.mxu0 0
  %3042 = vmatmul.mubr.bf16.gmra.mxu0 %v2961
  %v3043 = vpop.f32.mrf.mxu0
  %v3044 = vadd.f32 0.0, %v3043
  %v3045 = vpop.f32.mrf.mxu0
  %v3046 = vpop.f32.mrf.mxu0
  %v3047 = vadd.f32 0.0, %v3046
  %v3048 = vpop.f32.mrf.mxu0
  %3049 = vmatprep.mubr.bf16.mxu0 0
  %3050 = vmatmul.mubr.bf16.gmra.mxu0 %v2964
  %v3051 = vpop.f32.mrf.mxu0
  %v3052 = vadd.f32 0.0, %v3051
  %v3053 = vpop.f32.mrf.mxu0
  %v3054 = vpop.f32.mrf.mxu0
  %v3055 = vadd.f32 0.0, %v3054
  %v3056 = vpop.f32.mrf.mxu0
  %3057 = vmatprep.mubr.bf16.mxu0 0
  %3058 = vmatmul.mubr.bf16.gmra.mxu0 %v2967
  %v3059 = vpop.f32.mrf.mxu0
  %v3060 = vadd.f32 0.0, %v3059
  %v3061 = vpop.f32.mrf.mxu0
  %v3062 = vpop.f32.mrf.mxu0
  %v3063 = vadd.f32 0.0, %v3062
  %v3064 = vpop.f32.mrf.mxu0
  %3065 = vdwg.mxu0
  %v3066 = vadd.f32 %v2750, %v3004
  %v3067 = vadd.f32 %v2751, %v3007
  %v3068 = vadd.f32 %v2752, %v3012
  %v3069 = vadd.f32 %v2753, %v3015
  %v3070 = vadd.f32 %v2754, %v3020
  %v3071 = vadd.f32 %v2755, %v3023
  %v3072 = vadd.f32 %v2756, %v3028
  %v3073 = vadd.f32 %v2757, %v3031
  %v3074 = vadd.f32 %v2758, %v3036
  %v3075 = vadd.f32 %v2759, %v3039
  %v3076 = vadd.f32 %v2760, %v3044
  %v3077 = vadd.f32 %v2761, %v3047
  %v3078 = vadd.f32 %v2762, %v3052
  %v3079 = vadd.f32 %v2763, %v3055
  %v3080 = vadd.f32 %v2764, %v3060
  %v3081 = vadd.f32 %v2765, %v3063
  %v3082 = vmul.f32 %v1199, %v901
  %v3083 = vmul.f32 %v1200, %v902
  %v3084 = vmul.f32 %v1201, %v903
  %v3085 = vmul.f32 %v1202, %v904
  %v3086 = vmul.f32 %v1203, %v905
  %v3087 = vmul.f32 %v1204, %v906
  %v3088 = vmul.f32 %v1205, %v907
  %v3089 = vmul.f32 %v1206, %v908
  %v3090 = vmul.f32 %v1207, %v909
  %v3091 = vmul.f32 %v1208, %v910
  %v3092 = vmul.f32 %v1209, %v911
  %v3093 = vmul.f32 %v1210, %v912
  %v3094 = vmul.f32 %v1211, %v913
  %v3095 = vmul.f32 %v1212, %v914
  %v3096 = vmul.f32 %v1213, %v915
  %v3097 = vmul.f32 %v916, 0.0
  %v3098 = vpack.c.bf16 %v3083, %v3082
  %v3099 = vpack.c.bf16 %v3085, %v3084
  %v3100 = vpack.c.bf16 %v3087, %v3086
  %v3101 = vpack.c.bf16 %v3089, %v3088
  %v3102 = vpack.c.bf16 %v3091, %v3090
  %v3103 = vpack.c.bf16 %v3093, %v3092
  %v3104 = vpack.c.bf16 %v3095, %v3094
  %v3105 = vpack.c.bf16 %v3097, %v3096
  %s3106 = scalar_lea.vmem %s3, 56
  %v3107 = vld [vmem:[%s3106] sm:$0xf]
  %v3108 = vld [vmem:[%s3106 + $0x4] sm:$0xf]
  %v3111 = vunpack.c.l.b16 %v3107
  %v3112 = vunpack.c.l.b16 %v3108
  %v3113 = vpack.c.b16 %v3112, %v3111
  %v3116 = vsel %vm1340, %v3098, 0
  %v3119 = vsel %vm1340, %v3099, 0
  %v3122 = vsel %vm1340, %v3100, 0
  %v3125 = vsel %vm1340, %v3101, 0
  %v3128 = vsel %vm1340, %v3102, 0
  %v3131 = vsel %vm1340, %v3103, 0
  %v3134 = vsel %vm1340, %v3104, 0
  %v3137 = vsel %vm1340, %v3105, 0
  %3139 = vmatprep.subr.bf16.mxu0 0
  %3140 = vmatpush1.bf16.msra.mxu0 0
  %3141 = vmatprep.subr.bf16.mxu0 0
  %3142 = vmatpush1.bf16.msra.mxu0 0
  %3143 = vmatprep.subr.bf16.mxu0 0
  %3144 = vmatpush1.bf16.msra.mxu0 0
  %3145 = vmatprep.subr.bf16.mxu0 0
  %3146 = vmatpush1.bf16.msra.mxu0 0
  %3147 = vmatprep.subr.bf16.mxu0 0
  %3148 = vmatpush1.bf16.msra.mxu0 0
  %3149 = vmatprep.subr.bf16.mxu0 0
  %3150 = vmatpush1.bf16.msra.mxu0 0
  %3151 = vmatprep.subr.bf16.mxu0 0
  %3152 = vmatpush1.bf16.msra.mxu0 0
  %3153 = vmatprep.subr.bf16.mxu0 0
  %3154 = vmatpush1.bf16.msra.mxu0 %v3113
  %3155 = vmatprep.subr.bf16.mxu0 0
  %3156 = vmatpush2.bf16.msra.mxu0 0
  %3157 = vmatprep.subr.bf16.mxu0 0
  %3158 = vmatpush2.bf16.msra.mxu0 0
  %3159 = vmatprep.subr.bf16.mxu0 0
  %3160 = vmatpush2.bf16.msra.mxu0 0
  %3161 = vmatprep.subr.bf16.mxu0 0
  %3162 = vmatpush2.bf16.msra.mxu0 0
  %3163 = vmatprep.subr.bf16.mxu0 0
  %3164 = vmatpush2.bf16.msra.mxu0 0
  %3165 = vmatprep.subr.bf16.mxu0 0
  %3166 = vmatpush2.bf16.msra.mxu0 0
  %3167 = vmatprep.subr.bf16.mxu0 0
  %3168 = vmatpush2.bf16.msra.mxu0 0
  %3169 = vmatprep.subr.bf16.mxu0 0
  %3170 = vmatpush2.bf16.msra.mxu0 0
  %3171 = vmatprep.mubr.bf16.mxu0 0
  %3172 = vmatmul.mubr.bf16.gmra.mxu0 %v3116
  %v3173 = vpop.f32.mrf.mxu0
  %v3174 = vadd.f32 0.0, %v3173
  %v3175 = vpop.f32.mrf.mxu0
  %v3176 = vpop.f32.mrf.mxu0
  %v3177 = vadd.f32 0.0, %v3176
  %v3178 = vpop.f32.mrf.mxu0
  %3179 = vmatprep.mubr.bf16.mxu0 0
  %3180 = vmatmul.mubr.bf16.gmra.mxu0 %v3119
  %v3181 = vpop.f32.mrf.mxu0
  %v3182 = vadd.f32 0.0, %v3181
  %v3183 = vpop.f32.mrf.mxu0
  %v3184 = vpop.f32.mrf.mxu0
  %v3185 = vadd.f32 0.0, %v3184
  %v3186 = vpop.f32.mrf.mxu0
  %3187 = vmatprep.mubr.bf16.mxu0 0
  %3188 = vmatmul.mubr.bf16.gmra.mxu0 %v3122
  %v3189 = vpop.f32.mrf.mxu0
  %v3190 = vadd.f32 0.0, %v3189
  %v3191 = vpop.f32.mrf.mxu0
  %v3192 = vpop.f32.mrf.mxu0
  %v3193 = vadd.f32 0.0, %v3192
  %v3194 = vpop.f32.mrf.mxu0
  %3195 = vmatprep.mubr.bf16.mxu0 0
  %3196 = vmatmul.mubr.bf16.gmra.mxu0 %v3125
  %v3197 = vpop.f32.mrf.mxu0
  %v3198 = vadd.f32 0.0, %v3197
  %v3199 = vpop.f32.mrf.mxu0
  %v3200 = vpop.f32.mrf.mxu0
  %v3201 = vadd.f32 0.0, %v3200
  %v3202 = vpop.f32.mrf.mxu0
  %3203 = vmatprep.mubr.bf16.mxu0 0
  %3204 = vmatmul.mubr.bf16.gmra.mxu0 %v3128
  %v3205 = vpop.f32.mrf.mxu0
  %v3206 = vadd.f32 0.0, %v3205
  %v3207 = vpop.f32.mrf.mxu0
  %v3208 = vpop.f32.mrf.mxu0
  %v3209 = vadd.f32 0.0, %v3208
  %v3210 = vpop.f32.mrf.mxu0
  %3211 = vmatprep.mubr.bf16.mxu0 0
  %3212 = vmatmul.mubr.bf16.gmra.mxu0 %v3131
  %v3213 = vpop.f32.mrf.mxu0
  %v3214 = vadd.f32 0.0, %v3213
  %v3215 = vpop.f32.mrf.mxu0
  %v3216 = vpop.f32.mrf.mxu0
  %v3217 = vadd.f32 0.0, %v3216
  %v3218 = vpop.f32.mrf.mxu0
  %3219 = vmatprep.mubr.bf16.mxu0 0
  %3220 = vmatmul.mubr.bf16.gmra.mxu0 %v3134
  %v3221 = vpop.f32.mrf.mxu0
  %v3222 = vadd.f32 0.0, %v3221
  %v3223 = vpop.f32.mrf.mxu0
  %v3224 = vpop.f32.mrf.mxu0
  %v3225 = vadd.f32 0.0, %v3224
  %v3226 = vpop.f32.mrf.mxu0
  %3227 = vmatprep.mubr.bf16.mxu0 0
  %3228 = vmatmul.mubr.bf16.gmra.mxu0 %v3137
  %v3229 = vpop.f32.mrf.mxu0
  %v3230 = vadd.f32 0.0, %v3229
  %v3231 = vpop.f32.mrf.mxu0
  %v3232 = vpop.f32.mrf.mxu0
  %v3233 = vadd.f32 0.0, %v3232
  %v3234 = vpop.f32.mrf.mxu0
  %3235 = vdwg.mxu0
  %v3236 = vadd.f32 %v3066, %v3174
  %v3237 = vadd.f32 %v3067, %v3177
  %v3238 = vadd.f32 %v3068, %v3182
  %v3239 = vadd.f32 %v3069, %v3185
  %v3240 = vadd.f32 %v3070, %v3190
  %v3241 = vadd.f32 %v3071, %v3193
  %v3242 = vadd.f32 %v3072, %v3198
  %v3243 = vadd.f32 %v3073, %v3201
  %v3244 = vadd.f32 %v3074, %v3206
  %v3245 = vadd.f32 %v3075, %v3209
  %v3246 = vadd.f32 %v3076, %v3214
  %v3247 = vadd.f32 %v3077, %v3217
  %v3248 = vadd.f32 %v3078, %v3222
  %v3249 = vadd.f32 %v3079, %v3225
  %v3250 = vadd.f32 %v3080, %v3230
  %v3251 = vadd.f32 %v3081, %v3233
  %v3268 = vrot.slane %v965, 7
  %v3269 = vrot.slane %v966, 7
  %v3270 = vsel %vm1686, %v3268, %v3269
  %v3271 = vrot.slane %v967, 7
  %v3272 = vsel %vm1686, %v3269, %v3271
  %v3273 = vrot.slane %v968, 7
  %v3274 = vsel %vm1686, %v3271, %v3273
  %v3275 = vrot.slane %v969, 7
  %v3276 = vsel %vm1686, %v3273, %v3275
  %v3277 = vrot.slane %v970, 7
  %v3278 = vsel %vm1686, %v3275, %v3277
  %v3279 = vrot.slane %v971, 7
  %v3280 = vsel %vm1686, %v3277, %v3279
  %v3281 = vrot.slane %v972, 7
  %v3282 = vsel %vm1686, %v3279, %v3281
  %v3283 = vrot.slane %v973, 7
  %v3284 = vsel %vm1686, %v3281, %v3283
  %v3285 = vrot.slane %v974, 7
  %v3286 = vsel %vm1686, %v3283, %v3285
  %v3287 = vrot.slane %v975, 7
  %v3288 = vsel %vm1686, %v3285, %v3287
  %v3289 = vrot.slane %v976, 7
  %v3290 = vsel %vm1686, %v3287, %v3289
  %v3291 = vrot.slane %v977, 7
  %v3292 = vsel %vm1686, %v3289, %v3291
  %v3293 = vrot.slane %v978, 7
  %v3294 = vsel %vm1686, %v3291, %v3293
  %v3295 = vrot.slane %v979, 7
  %v3296 = vsel %vm1686, %v3293, %v3295
  %v3297 = vrot.slane %v980, 7
  %v3298 = vsel %vm1686, %v3295, %v3297
  %v3316 = vmul.f32 %v1199, %v3268
  %v3317 = vmul.f32 %v1200, %v3270
  %v3318 = vmul.f32 %v1201, %v3272
  %v3319 = vmul.f32 %v1202, %v3274
  %v3320 = vmul.f32 %v1203, %v3276
  %v3321 = vmul.f32 %v1204, %v3278
  %v3322 = vmul.f32 %v1205, %v3280
  %v3323 = vmul.f32 %v1206, %v3282
  %v3324 = vmul.f32 %v1207, %v3284
  %v3325 = vmul.f32 %v1208, %v3286
  %v3326 = vmul.f32 %v1209, %v3288
  %v3327 = vmul.f32 %v1210, %v3290
  %v3328 = vmul.f32 %v1211, %v3292
  %v3329 = vmul.f32 %v1212, %v3294
  %v3330 = vmul.f32 %v1213, %v3296
  %v3331 = vmul.f32 %v3298, 0.0
  %v3332 = vmul.f32 %v3297, 0.0
  %v3333 = vpack.c.bf16 %v3317, %v3316
  %v3334 = vpack.c.bf16 %v3319, %v3318
  %v3335 = vpack.c.bf16 %v3321, %v3320
  %v3336 = vpack.c.bf16 %v3323, %v3322
  %v3337 = vpack.c.bf16 %v3325, %v3324
  %v3338 = vpack.c.bf16 %v3327, %v3326
  %v3339 = vpack.c.bf16 %v3329, %v3328
  %v3340 = vpack.c.bf16 %v3331, %v3330
  %v3341 = vpack.c.bf16 %v3332, %v3332
  %s3342 = scalar_lea.vmem %s3, 64
  %v3343 = vld [vmem:[%s3342] sm:$0xf]
  %v3344 = vld [vmem:[%s3342 + $0x4] sm:$0xf]
  %v3346 = vshrl.u32 %v3333, 16
  %v3348 = vshll.u32 %v3333, 16
  %v3350 = vrot.slane %v3348, 1
  %v3351 = vor.u32 %v3346, %v3350
  %v3353 = vshll.u32 %v3334, 16
  %v3355 = vrot.slane %v3353, 1
  %v3356 = vsel %vm1764, %v3351, %v3355
  %v3357 = vshrl.u32 %v3334, 16
  %v3359 = vor.u32 %v3357, %v3355
  %v3361 = vshll.u32 %v3335, 16
  %v3363 = vrot.slane %v3361, 1
  %v3364 = vsel %vm1764, %v3359, %v3363
  %v3365 = vshrl.u32 %v3335, 16
  %v3367 = vor.u32 %v3365, %v3363
  %v3369 = vshll.u32 %v3336, 16
  %v3371 = vrot.slane %v3369, 1
  %v3372 = vsel %vm1764, %v3367, %v3371
  %v3373 = vshrl.u32 %v3336, 16
  %v3375 = vor.u32 %v3373, %v3371
  %v3377 = vshll.u32 %v3337, 16
  %v3379 = vrot.slane %v3377, 1
  %v3380 = vsel %vm1764, %v3375, %v3379
  %v3381 = vshrl.u32 %v3337, 16
  %v3383 = vor.u32 %v3381, %v3379
  %v3385 = vshll.u32 %v3338, 16
  %v3387 = vrot.slane %v3385, 1
  %v3388 = vsel %vm1764, %v3383, %v3387
  %v3389 = vshrl.u32 %v3338, 16
  %v3391 = vor.u32 %v3389, %v3387
  %v3393 = vshll.u32 %v3339, 16
  %v3395 = vrot.slane %v3393, 1
  %v3396 = vsel %vm1764, %v3391, %v3395
  %v3397 = vshrl.u32 %v3339, 16
  %v3399 = vor.u32 %v3397, %v3395
  %v3401 = vshll.u32 %v3340, 16
  %v3403 = vrot.slane %v3401, 1
  %v3404 = vsel %vm1764, %v3399, %v3403
  %v3405 = vshrl.u32 %v3340, 16
  %v3407 = vor.u32 %v3405, %v3403
  %v3409 = vshll.u32 %v3341, 16
  %v3411 = vrot.slane %v3409, 1
  %v3412 = vsel %vm1764, %v3407, %v3411
  %v3415 = vunpack.c.l.b16 %v3343
  %v3416 = vunpack.c.l.b16 %v3344
  %v3417 = vpack.c.b16 %v3416, %v3415
  %v3420 = vsel %vm1340, %v3356, 0
  %v3423 = vsel %vm1340, %v3364, 0
  %v3426 = vsel %vm1340, %v3372, 0
  %v3429 = vsel %vm1340, %v3380, 0
  %v3432 = vsel %vm1340, %v3388, 0
  %v3435 = vsel %vm1340, %v3396, 0
  %v3438 = vsel %vm1340, %v3404, 0
  %v3441 = vsel %vm1340, %v3412, 0
  %3443 = vmatprep.subr.bf16.mxu0 0
  %3444 = vmatpush1.bf16.msra.mxu0 0
  %3445 = vmatprep.subr.bf16.mxu0 0
  %3446 = vmatpush1.bf16.msra.mxu0 0
  %3447 = vmatprep.subr.bf16.mxu0 0
  %3448 = vmatpush1.bf16.msra.mxu0 0
  %3449 = vmatprep.subr.bf16.mxu0 0
  %3450 = vmatpush1.bf16.msra.mxu0 0
  %3451 = vmatprep.subr.bf16.mxu0 0
  %3452 = vmatpush1.bf16.msra.mxu0 0
  %3453 = vmatprep.subr.bf16.mxu0 0
  %3454 = vmatpush1.bf16.msra.mxu0 0
  %3455 = vmatprep.subr.bf16.mxu0 0
  %3456 = vmatpush1.bf16.msra.mxu0 0
  %3457 = vmatprep.subr.bf16.mxu0 0
  %3458 = vmatpush1.bf16.msra.mxu0 %v3417
  %3459 = vmatprep.subr.bf16.mxu0 0
  %3460 = vmatpush2.bf16.msra.mxu0 0
  %3461 = vmatprep.subr.bf16.mxu0 0
  %3462 = vmatpush2.bf16.msra.mxu0 0
  %3463 = vmatprep.subr.bf16.mxu0 0
  %3464 = vmatpush2.bf16.msra.mxu0 0
  %3465 = vmatprep.subr.bf16.mxu0 0
  %3466 = vmatpush2.bf16.msra.mxu0 0
  %3467 = vmatprep.subr.bf16.mxu0 0
  %3468 = vmatpush2.bf16.msra.mxu0 0
  %3469 = vmatprep.subr.bf16.mxu0 0
  %3470 = vmatpush2.bf16.msra.mxu0 0
  %3471 = vmatprep.subr.bf16.mxu0 0
  %3472 = vmatpush2.bf16.msra.mxu0 0
  %3473 = vmatprep.subr.bf16.mxu0 0
  %3474 = vmatpush2.bf16.msra.mxu0 0
  %3475 = vmatprep.mubr.bf16.mxu0 0
  %3476 = vmatmul.mubr.bf16.gmra.mxu0 %v3420
  %v3477 = vpop.f32.mrf.mxu0
  %v3478 = vadd.f32 0.0, %v3477
  %v3479 = vpop.f32.mrf.mxu0
  %v3480 = vpop.f32.mrf.mxu0
  %v3481 = vadd.f32 0.0, %v3480
  %v3482 = vpop.f32.mrf.mxu0
  %3483 = vmatprep.mubr.bf16.mxu0 0
  %3484 = vmatmul.mubr.bf16.gmra.mxu0 %v3423
  %v3485 = vpop.f32.mrf.mxu0
  %v3486 = vadd.f32 0.0, %v3485
  %v3487 = vpop.f32.mrf.mxu0
  %v3488 = vpop.f32.mrf.mxu0
  %v3489 = vadd.f32 0.0, %v3488
  %v3490 = vpop.f32.mrf.mxu0
  %3491 = vmatprep.mubr.bf16.mxu0 0
  %3492 = vmatmul.mubr.bf16.gmra.mxu0 %v3426
  %v3493 = vpop.f32.mrf.mxu0
  %v3494 = vadd.f32 0.0, %v3493
  %v3495 = vpop.f32.mrf.mxu0
  %v3496 = vpop.f32.mrf.mxu0
  %v3497 = vadd.f32 0.0, %v3496
  %v3498 = vpop.f32.mrf.mxu0
  %3499 = vmatprep.mubr.bf16.mxu0 0
  %3500 = vmatmul.mubr.bf16.gmra.mxu0 %v3429
  %v3501 = vpop.f32.mrf.mxu0
  %v3502 = vadd.f32 0.0, %v3501
  %v3503 = vpop.f32.mrf.mxu0
  %v3504 = vpop.f32.mrf.mxu0
  %v3505 = vadd.f32 0.0, %v3504
  %v3506 = vpop.f32.mrf.mxu0
  %3507 = vmatprep.mubr.bf16.mxu0 0
  %3508 = vmatmul.mubr.bf16.gmra.mxu0 %v3432
  %v3509 = vpop.f32.mrf.mxu0
  %v3510 = vadd.f32 0.0, %v3509
  %v3511 = vpop.f32.mrf.mxu0
  %v3512 = vpop.f32.mrf.mxu0
  %v3513 = vadd.f32 0.0, %v3512
  %v3514 = vpop.f32.mrf.mxu0
  %3515 = vmatprep.mubr.bf16.mxu0 0
  %3516 = vmatmul.mubr.bf16.gmra.mxu0 %v3435
  %v3517 = vpop.f32.mrf.mxu0
  %v3518 = vadd.f32 0.0, %v3517
  %v3519 = vpop.f32.mrf.mxu0
  %v3520 = vpop.f32.mrf.mxu0
  %v3521 = vadd.f32 0.0, %v3520
  %v3522 = vpop.f32.mrf.mxu0
  %3523 = vmatprep.mubr.bf16.mxu0 0
  %3524 = vmatmul.mubr.bf16.gmra.mxu0 %v3438
  %v3525 = vpop.f32.mrf.mxu0
  %v3526 = vadd.f32 0.0, %v3525
  %v3527 = vpop.f32.mrf.mxu0
  %v3528 = vpop.f32.mrf.mxu0
  %v3529 = vadd.f32 0.0, %v3528
  %v3530 = vpop.f32.mrf.mxu0
  %3531 = vmatprep.mubr.bf16.mxu0 0
  %3532 = vmatmul.mubr.bf16.gmra.mxu0 %v3441
  %v3533 = vpop.f32.mrf.mxu0
  %v3534 = vadd.f32 0.0, %v3533
  %v3535 = vpop.f32.mrf.mxu0
  %v3536 = vpop.f32.mrf.mxu0
  %v3537 = vadd.f32 0.0, %v3536
  %v3538 = vpop.f32.mrf.mxu0
  %3539 = vdwg.mxu0
  %v3540 = vadd.f32 %v3236, %v3478
  %v3541 = vadd.f32 %v3237, %v3481
  %v3542 = vadd.f32 %v3238, %v3486
  %v3543 = vadd.f32 %v3239, %v3489
  %v3544 = vadd.f32 %v3240, %v3494
  %v3545 = vadd.f32 %v3241, %v3497
  %v3546 = vadd.f32 %v3242, %v3502
  %v3547 = vadd.f32 %v3243, %v3505
  %v3548 = vadd.f32 %v3244, %v3510
  %v3549 = vadd.f32 %v3245, %v3513
  %v3550 = vadd.f32 %v3246, %v3518
  %v3551 = vadd.f32 %v3247, %v3521
  %v3552 = vadd.f32 %v3248, %v3526
  %v3553 = vadd.f32 %v3249, %v3529
  %v3554 = vadd.f32 %v3250, %v3534
  %v3555 = vadd.f32 %v3251, %v3537
  %v3556 = vld [vmem:[%s4] sm:$0x1]
  %v3558 = vlaneseq
  %v3559 = vshrl.u32 %v3558, 7
  %v3560 = vsub.s32 0, %v3559
  %v3561 = vrot.slane %v3556, %v3560
  %v3563 = vadd.f32 %v3540, %v3561
  %v3564 = vadd.f32 %v3541, %v3561
  %v3565 = vadd.f32 %v3542, %v3561
  %v3566 = vadd.f32 %v3543, %v3561
  %v3567 = vadd.f32 %v3544, %v3561
  %v3568 = vadd.f32 %v3545, %v3561
  %v3569 = vadd.f32 %v3546, %v3561
  %v3570 = vadd.f32 %v3547, %v3561
  %v3571 = vadd.f32 %v3548, %v3561
  %v3572 = vadd.f32 %v3549, %v3561
  %v3573 = vadd.f32 %v3550, %v3561
  %v3574 = vadd.f32 %v3551, %v3561
  %v3575 = vadd.f32 %v3552, %v3561
  %v3576 = vadd.f32 %v3553, %v3561
  %v3577 = vadd.f32 %v3554, %v3561
  %v3578 = vadd.f32 %v3555, %v3561
  %v3579 = vmax.f32 %v3563, 0.0
  %v3580 = vmax.f32 %v3564, 0.0
  %v3581 = vmax.f32 %v3565, 0.0
  %v3582 = vmax.f32 %v3566, 0.0
  %v3583 = vmax.f32 %v3567, 0.0
  %v3584 = vmax.f32 %v3568, 0.0
  %v3585 = vmax.f32 %v3569, 0.0
  %v3586 = vmax.f32 %v3570, 0.0
  %v3587 = vmax.f32 %v3571, 0.0
  %v3588 = vmax.f32 %v3572, 0.0
  %v3589 = vmax.f32 %v3573, 0.0
  %v3590 = vmax.f32 %v3574, 0.0
  %v3591 = vmax.f32 %v3575, 0.0
  %v3592 = vmax.f32 %v3576, 0.0
  %v3593 = vmax.f32 %v3577, 0.0
  %v3594 = vmax.f32 %v3578, 0.0
  %v3595 = vmul.f32 %v3579, %v1235
  %v3596 = vmul.f32 %v3580, %v1237
  %v3597 = vmul.f32 %v3581, %v1239
  %v3598 = vmul.f32 %v3582, %v1241
  %v3599 = vmul.f32 %v3583, %v1243
  %v3600 = vmul.f32 %v3584, %v1245
  %v3601 = vmul.f32 %v3585, %v1247
  %v3602 = vmul.f32 %v3586, %v1249
  %v3603 = vmul.f32 %v3587, %v1251
  %v3604 = vmul.f32 %v3588, %v1253
  %v3605 = vmul.f32 %v3589, %v1255
  %v3606 = vmul.f32 %v3590, %v1257
  %v3607 = vmul.f32 %v3591, %v1259
  %v3608 = vmul.f32 %v3592, %v1261
  %v3609 = vmul.f32 %v3593, %v1260
  %v3610 = vpack.c.bf16 %v3596, %v3595
  %v3611 = vpack.c.bf16 %v3598, %v3597
  %v3612 = vpack.c.bf16 %v3600, %v3599
  %v3613 = vpack.c.bf16 %v3602, %v3601
  %v3614 = vpack.c.bf16 %v3604, %v3603
  %v3615 = vpack.c.bf16 %v3606, %v3605
  %v3616 = vpack.c.bf16 %v3608, %v3607
  %v3617 = vpack.c.bf16 %v3609, %v3609
  %v3618 = vld [vmem:[%s5] sm:$0xf]
  %v3619 = vld [vmem:[%s5 + $0x4] sm:$0xf]
  %v3620 = vld [vmem:[%s5 + $0x8] sm:$0xf]
  %v3621 = vld [vmem:[%s5 + $0xc] sm:$0xf]
  %v3622 = vld [vmem:[%s5 + $0x10] sm:$0xf]
  %v3623 = vld [vmem:[%s5 + $0x14] sm:$0xf]
  %v3624 = vld [vmem:[%s5 + $0x18] sm:$0xf]
  %v3625 = vld [vmem:[%s5 + $0x1c] sm:$0xf]
  %v3626 = vmul.f32 %v3579, %v358
  %v3627 = vmul.f32 %v3580, %v359
  %v3628 = vmul.f32 %v3581, %v360
  %v3629 = vmul.f32 %v3582, %v361
  %v3630 = vmul.f32 %v3583, %v362
  %v3631 = vmul.f32 %v3584, %v363
  %v3632 = vmul.f32 %v3585, %v364
  %v3633 = vmul.f32 %v3586, %v365
  %v3634 = vmul.f32 %v3587, %v366
  %v3635 = vmul.f32 %v3588, %v367
  %v3636 = vmul.f32 %v3589, %v368
  %v3637 = vmul.f32 %v3590, %v369
  %v3638 = vmul.f32 %v3591, %v370
  %v3639 = vmul.f32 %v3592, %v371
  %v3640 = vmul.f32 %v3593, %v372
  %v3641 = vpack.c.bf16 %v3626, %v1307
  %v3642 = vpack.c.bf16 %v3628, %v3627
  %v3643 = vpack.c.bf16 %v3630, %v3629
  %v3644 = vpack.c.bf16 %v3632, %v3631
  %v3645 = vpack.c.bf16 %v3634, %v3633
  %v3646 = vpack.c.bf16 %v3636, %v3635
  %v3647 = vpack.c.bf16 %v3638, %v3637
  %v3648 = vpack.c.bf16 %v3640, %v3639
  %s3649 = scalar_lea.vmem %s5, 32
  %v3650 = vld [vmem:[%s3649] sm:$0xf]
  %v3651 = vld [vmem:[%s3649 + $0x4] sm:$0xf]
  %v3652 = vld [vmem:[%s3649 + $0x8] sm:$0xf]
  %v3653 = vld [vmem:[%s3649 + $0xc] sm:$0xf]
  %v3654 = vld [vmem:[%s3649 + $0x10] sm:$0xf]
  %v3655 = vld [vmem:[%s3649 + $0x14] sm:$0xf]
  %v3656 = vld [vmem:[%s3649 + $0x18] sm:$0xf]
  %v3657 = vld [vmem:[%s3649 + $0x1c] sm:$0xf]
  %v3666 = vunpack.c.l.b16 %v3650
  %v3667 = vunpack.c.l.b16 %v3651
  %v3668 = vunpack.c.l.b16 %v3652
  %v3669 = vunpack.c.l.b16 %v3653
  %v3670 = vunpack.c.l.b16 %v3654
  %v3671 = vunpack.c.l.b16 %v3655
  %v3672 = vunpack.c.l.b16 %v3656
  %v3673 = vunpack.c.l.b16 %v3657
  %v3674 = vpack.c.b16 %v3667, %v3666
  %v3675 = vpack.c.b16 %v3669, %v3668
  %v3676 = vpack.c.b16 %v3671, %v3670
  %v3677 = vpack.c.b16 %v3673, %v3672
  %v3683 = vsel %vm1076, %v3641, 0
  %v3686 = vsel %vm1076, %v3642, 0
  %v3689 = vsel %vm1076, %v3643, 0
  %v3692 = vsel %vm1076, %v3644, 0
  %v3695 = vsel %vm1076, %v3645, 0
  %v3698 = vsel %vm1076, %v3646, 0
  %v3701 = vsel %vm1076, %v3647, 0
  %v3704 = vsel %vm1076, %v3648, 0
  %3706 = vmatprep.subr.bf16.mxu0 0
  %3707 = vmatpush1.bf16.msra.mxu0 0
  %3708 = vmatprep.subr.bf16.mxu0 0
  %3709 = vmatpush1.bf16.msra.mxu0 0
  %3710 = vmatprep.subr.bf16.mxu0 0
  %3711 = vmatpush1.bf16.msra.mxu0 0
  %3712 = vmatprep.subr.bf16.mxu0 0
  %3713 = vmatpush1.bf16.msra.mxu0 0
  %3714 = vmatprep.subr.bf16.mxu0 0
  %3715 = vmatpush1.bf16.msra.mxu0 %v3677
  %3716 = vmatprep.subr.bf16.mxu0 0
  %3717 = vmatpush1.bf16.msra.mxu0 %v3676
  %3718 = vmatprep.subr.bf16.mxu0 0
  %3719 = vmatpush1.bf16.msra.mxu0 %v3675
  %3720 = vmatprep.subr.bf16.mxu0 0
  %3721 = vmatpush1.bf16.msra.mxu0 %v3674
  %3722 = vmatprep.subr.bf16.mxu0 0
  %3723 = vmatpush2.bf16.msra.mxu0 0
  %3724 = vmatprep.subr.bf16.mxu0 0
  %3725 = vmatpush2.bf16.msra.mxu0 0
  %3726 = vmatprep.subr.bf16.mxu0 0
  %3727 = vmatpush2.bf16.msra.mxu0 0
  %3728 = vmatprep.subr.bf16.mxu0 0
  %3729 = vmatpush2.bf16.msra.mxu0 0
  %3730 = vmatprep.subr.bf16.mxu0 0
  %3731 = vmatpush2.bf16.msra.mxu0 0
  %3732 = vmatprep.subr.bf16.mxu0 0
  %3733 = vmatpush2.bf16.msra.mxu0 0
  %3734 = vmatprep.subr.bf16.mxu0 0
  %3735 = vmatpush2.bf16.msra.mxu0 0
  %3736 = vmatprep.subr.bf16.mxu0 0
  %3737 = vmatpush2.bf16.msra.mxu0 0
  %3738 = vmatprep.mubr.bf16.mxu0 0
  %3739 = vmatmul.mubr.bf16.gmra.mxu0 %v3683
  %v3740 = vpop.f32.mrf.mxu0
  %v3741 = vadd.f32 0.0, %v3740
  %v3742 = vpop.f32.mrf.mxu0
  %v3743 = vpop.f32.mrf.mxu0
  %v3744 = vadd.f32 0.0, %v3743
  %v3745 = vpop.f32.mrf.mxu0
  %3746 = vmatprep.mubr.bf16.mxu0 0
  %3747 = vmatmul.mubr.bf16.gmra.mxu0 %v3686
  %v3748 = vpop.f32.mrf.mxu0
  %v3749 = vadd.f32 0.0, %v3748
  %v3750 = vpop.f32.mrf.mxu0
  %v3751 = vpop.f32.mrf.mxu0
  %v3752 = vadd.f32 0.0, %v3751
  %v3753 = vpop.f32.mrf.mxu0
  %3754 = vmatprep.mubr.bf16.mxu0 0
  %3755 = vmatmul.mubr.bf16.gmra.mxu0 %v3689
  %v3756 = vpop.f32.mrf.mxu0
  %v3757 = vadd.f32 0.0, %v3756
  %v3758 = vpop.f32.mrf.mxu0
  %v3759 = vpop.f32.mrf.mxu0
  %v3760 = vadd.f32 0.0, %v3759
  %v3761 = vpop.f32.mrf.mxu0
  %3762 = vmatprep.mubr.bf16.mxu0 0
  %3763 = vmatmul.mubr.bf16.gmra.mxu0 %v3692
  %v3764 = vpop.f32.mrf.mxu0
  %v3765 = vadd.f32 0.0, %v3764
  %v3766 = vpop.f32.mrf.mxu0
  %v3767 = vpop.f32.mrf.mxu0
  %v3768 = vadd.f32 0.0, %v3767
  %v3769 = vpop.f32.mrf.mxu0
  %3770 = vmatprep.mubr.bf16.mxu0 0
  %3771 = vmatmul.mubr.bf16.gmra.mxu0 %v3695
  %v3772 = vpop.f32.mrf.mxu0
  %v3773 = vadd.f32 0.0, %v3772
  %v3774 = vpop.f32.mrf.mxu0
  %v3775 = vpop.f32.mrf.mxu0
  %v3776 = vadd.f32 0.0, %v3775
  %v3777 = vpop.f32.mrf.mxu0
  %3778 = vmatprep.mubr.bf16.mxu0 0
  %3779 = vmatmul.mubr.bf16.gmra.mxu0 %v3698
  %v3780 = vpop.f32.mrf.mxu0
  %v3781 = vadd.f32 0.0, %v3780
  %v3782 = vpop.f32.mrf.mxu0
  %v3783 = vpop.f32.mrf.mxu0
  %v3784 = vadd.f32 0.0, %v3783
  %v3785 = vpop.f32.mrf.mxu0
  %3786 = vmatprep.mubr.bf16.mxu0 0
  %3787 = vmatmul.mubr.bf16.gmra.mxu0 %v3701
  %v3788 = vpop.f32.mrf.mxu0
  %v3789 = vadd.f32 0.0, %v3788
  %v3790 = vpop.f32.mrf.mxu0
  %v3791 = vpop.f32.mrf.mxu0
  %v3792 = vadd.f32 0.0, %v3791
  %v3793 = vpop.f32.mrf.mxu0
  %3794 = vmatprep.mubr.bf16.mxu0 0
  %3795 = vmatmul.mubr.bf16.gmra.mxu0 %v3704
  %v3796 = vpop.f32.mrf.mxu0
  %v3797 = vadd.f32 0.0, %v3796
  %v3798 = vpop.f32.mrf.mxu0
  %v3799 = vpop.f32.mrf.mxu0
  %v3800 = vadd.f32 0.0, %v3799
  %v3801 = vpop.f32.mrf.mxu0
  %3802 = vdwg.mxu0
  %v3804 = vshrl.u32 %v3610, 16
  %v3806 = vrot.slane %v3804, 3
  %v3807 = vshll.u32 %v3610, 16
  %v3809 = vrot.slane %v3807, 4
  %v3810 = vor.u32 %v3806, %v3809
  %v3811 = vsel %vm1462, %v1470, %v3810
  %v3813 = vshrl.u32 %v3611, 16
  %v3815 = vrot.slane %v3813, 3
  %v3816 = vshll.u32 %v3611, 16
  %v3818 = vrot.slane %v3816, 4
  %v3819 = vor.u32 %v3815, %v3818
  %v3820 = vsel %vm1462, %v3810, %v3819
  %v3822 = vshrl.u32 %v3612, 16
  %v3824 = vrot.slane %v3822, 3
  %v3825 = vshll.u32 %v3612, 16
  %v3827 = vrot.slane %v3825, 4
  %v3828 = vor.u32 %v3824, %v3827
  %v3829 = vsel %vm1462, %v3819, %v3828
  %v3831 = vshrl.u32 %v3613, 16
  %v3833 = vrot.slane %v3831, 3
  %v3834 = vshll.u32 %v3613, 16
  %v3836 = vrot.slane %v3834, 4
  %v3837 = vor.u32 %v3833, %v3836
  %v3838 = vsel %vm1462, %v3828, %v3837
  %v3840 = vshrl.u32 %v3614, 16
  %v3842 = vrot.slane %v3840, 3
  %v3843 = vshll.u32 %v3614, 16
  %v3845 = vrot.slane %v3843, 4
  %v3846 = vor.u32 %v3842, %v3845
  %v3847 = vsel %vm1462, %v3837, %v3846
  %v3849 = vshrl.u32 %v3615, 16
  %v3851 = vrot.slane %v3849, 3
  %v3852 = vshll.u32 %v3615, 16
  %v3854 = vrot.slane %v3852, 4
  %v3855 = vor.u32 %v3851, %v3854
  %v3856 = vsel %vm1462, %v3846, %v3855
  %v3858 = vshrl.u32 %v3616, 16
  %v3860 = vrot.slane %v3858, 3
  %v3861 = vshll.u32 %v3616, 16
  %v3863 = vrot.slane %v3861, 4
  %v3864 = vor.u32 %v3860, %v3863
  %v3865 = vsel %vm1462, %v3855, %v3864
  %v3867 = vshrl.u32 %v3617, 16
  %v3869 = vrot.slane %v3867, 3
  %v3870 = vshll.u32 %v3617, 16
  %v3872 = vrot.slane %v3870, 4
  %v3873 = vor.u32 %v3869, %v3872
  %v3874 = vsel %vm1462, %v3864, %v3873
  %v3883 = vunpack.c.l.b16 %v3618
  %v3884 = vunpack.c.l.b16 %v3619
  %v3885 = vunpack.c.l.b16 %v3620
  %v3886 = vunpack.c.l.b16 %v3621
  %v3887 = vunpack.c.l.b16 %v3622
  %v3888 = vunpack.c.l.b16 %v3623
  %v3889 = vunpack.c.l.b16 %v3624
  %v3890 = vunpack.c.l.b16 %v3625
  %v3891 = vpack.c.b16 %v3884, %v3883
  %v3892 = vpack.c.b16 %v3886, %v3885
  %v3893 = vpack.c.b16 %v3888, %v3887
  %v3894 = vpack.c.b16 %v3890, %v3889
  %v3900 = vsel %vm1076, %v3811, 0
  %v3903 = vsel %vm1076, %v3820, 0
  %v3906 = vsel %vm1076, %v3829, 0
  %v3909 = vsel %vm1076, %v3838, 0
  %v3912 = vsel %vm1076, %v3847, 0
  %v3915 = vsel %vm1076, %v3856, 0
  %v3918 = vsel %vm1076, %v3865, 0
  %v3921 = vsel %vm1076, %v3874, 0
  %3923 = vmatprep.subr.bf16.mxu0 0
  %3924 = vmatpush1.bf16.msra.mxu0 0
  %3925 = vmatprep.subr.bf16.mxu0 0
  %3926 = vmatpush1.bf16.msra.mxu0 0
  %3927 = vmatprep.subr.bf16.mxu0 0
  %3928 = vmatpush1.bf16.msra.mxu0 0
  %3929 = vmatprep.subr.bf16.mxu0 0
  %3930 = vmatpush1.bf16.msra.mxu0 0
  %3931 = vmatprep.subr.bf16.mxu0 0
  %3932 = vmatpush1.bf16.msra.mxu0 %v3894
  %3933 = vmatprep.subr.bf16.mxu0 0
  %3934 = vmatpush1.bf16.msra.mxu0 %v3893
  %3935 = vmatprep.subr.bf16.mxu0 0
  %3936 = vmatpush1.bf16.msra.mxu0 %v3892
  %3937 = vmatprep.subr.bf16.mxu0 0
  %3938 = vmatpush1.bf16.msra.mxu0 %v3891
  %3939 = vmatprep.subr.bf16.mxu0 0
  %3940 = vmatpush2.bf16.msra.mxu0 0
  %3941 = vmatprep.subr.bf16.mxu0 0
  %3942 = vmatpush2.bf16.msra.mxu0 0
  %3943 = vmatprep.subr.bf16.mxu0 0
  %3944 = vmatpush2.bf16.msra.mxu0 0
  %3945 = vmatprep.subr.bf16.mxu0 0
  %3946 = vmatpush2.bf16.msra.mxu0 0
  %3947 = vmatprep.subr.bf16.mxu0 0
  %3948 = vmatpush2.bf16.msra.mxu0 0
  %3949 = vmatprep.subr.bf16.mxu0 0
  %3950 = vmatpush2.bf16.msra.mxu0 0
  %3951 = vmatprep.subr.bf16.mxu0 0
  %3952 = vmatpush2.bf16.msra.mxu0 0
  %3953 = vmatprep.subr.bf16.mxu0 0
  %3954 = vmatpush2.bf16.msra.mxu0 0
  %3955 = vmatprep.mubr.bf16.mxu0 0
  %3956 = vmatmul.mubr.bf16.gmra.mxu0 %v3900
  %v3957 = vpop.f32.mrf.mxu0
  %v3958 = vadd.f32 %v3741, %v3957
  %v3959 = vpop.f32.mrf.mxu0
  %v3960 = vpop.f32.mrf.mxu0
  %v3961 = vadd.f32 %v3744, %v3960
  %v3962 = vpop.f32.mrf.mxu0
  %3963 = vmatprep.mubr.bf16.mxu0 0
  %3964 = vmatmul.mubr.bf16.gmra.mxu0 %v3903
  %v3965 = vpop.f32.mrf.mxu0
  %v3966 = vadd.f32 %v3749, %v3965
  %v3967 = vpop.f32.mrf.mxu0
  %v3968 = vpop.f32.mrf.mxu0
  %v3969 = vadd.f32 %v3752, %v3968
  %v3970 = vpop.f32.mrf.mxu0
  %3971 = vmatprep.mubr.bf16.mxu0 0
  %3972 = vmatmul.mubr.bf16.gmra.mxu0 %v3906
  %v3973 = vpop.f32.mrf.mxu0
  %v3974 = vadd.f32 %v3757, %v3973
  %v3975 = vpop.f32.mrf.mxu0
  %v3976 = vpop.f32.mrf.mxu0
  %v3977 = vadd.f32 %v3760, %v3976
  %v3978 = vpop.f32.mrf.mxu0
  %3979 = vmatprep.mubr.bf16.mxu0 0
  %3980 = vmatmul.mubr.bf16.gmra.mxu0 %v3909
  %v3981 = vpop.f32.mrf.mxu0
  %v3982 = vadd.f32 %v3765, %v3981
  %v3983 = vpop.f32.mrf.mxu0
  %v3984 = vpop.f32.mrf.mxu0
  %v3985 = vadd.f32 %v3768, %v3984
  %v3986 = vpop.f32.mrf.mxu0
  %3987 = vmatprep.mubr.bf16.mxu0 0
  %3988 = vmatmul.mubr.bf16.gmra.mxu0 %v3912
  %v3989 = vpop.f32.mrf.mxu0
  %v3990 = vadd.f32 %v3773, %v3989
  %v3991 = vpop.f32.mrf.mxu0
  %v3992 = vpop.f32.mrf.mxu0
  %v3993 = vadd.f32 %v3776, %v3992
  %v3994 = vpop.f32.mrf.mxu0
  %3995 = vmatprep.mubr.bf16.mxu0 0
  %3996 = vmatmul.mubr.bf16.gmra.mxu0 %v3915
  %v3997 = vpop.f32.mrf.mxu0
  %v3998 = vadd.f32 %v3781, %v3997
  %v3999 = vpop.f32.mrf.mxu0
  %v4000 = vpop.f32.mrf.mxu0
  %v4001 = vadd.f32 %v3784, %v4000
  %v4002 = vpop.f32.mrf.mxu0
  %4003 = vmatprep.mubr.bf16.mxu0 0
  %4004 = vmatmul.mubr.bf16.gmra.mxu0 %v3918
  %v4005 = vpop.f32.mrf.mxu0
  %v4006 = vadd.f32 %v3789, %v4005
  %v4007 = vpop.f32.mrf.mxu0
  %v4008 = vpop.f32.mrf.mxu0
  %v4009 = vadd.f32 %v3792, %v4008
  %v4010 = vpop.f32.mrf.mxu0
  %4011 = vmatprep.mubr.bf16.mxu0 0
  %4012 = vmatmul.mubr.bf16.gmra.mxu0 %v3921
  %v4013 = vpop.f32.mrf.mxu0
  %v4014 = vadd.f32 %v3797, %v4013
  %v4015 = vpop.f32.mrf.mxu0
  %v4016 = vpop.f32.mrf.mxu0
  %v4017 = vadd.f32 %v3800, %v4016
  %v4018 = vpop.f32.mrf.mxu0
  %4019 = vdwg.mxu0
  %v4020 = vmul.f32 %v3579, %v1689
  %v4021 = vmul.f32 %v3580, %v1691
  %v4022 = vmul.f32 %v3581, %v1693
  %v4023 = vmul.f32 %v3582, %v1695
  %v4024 = vmul.f32 %v3583, %v1697
  %v4025 = vmul.f32 %v3584, %v1699
  %v4026 = vmul.f32 %v3585, %v1701
  %v4027 = vmul.f32 %v3586, %v1703
  %v4028 = vmul.f32 %v3587, %v1705
  %v4029 = vmul.f32 %v3588, %v1707
  %v4030 = vmul.f32 %v3589, %v1709
  %v4031 = vmul.f32 %v3590, %v1711
  %v4032 = vmul.f32 %v3591, %v1713
  %v4033 = vmul.f32 %v3592, %v1715
  %v4034 = vmul.f32 %v3593, %v1717
  %v4035 = vmul.f32 %v3594, %v1716
  %v4036 = vpack.c.bf16 %v4020, %v1735
  %v4037 = vpack.c.bf16 %v4022, %v4021
  %v4038 = vpack.c.bf16 %v4024, %v4023
  %v4039 = vpack.c.bf16 %v4026, %v4025
  %v4040 = vpack.c.bf16 %v4028, %v4027
  %v4041 = vpack.c.bf16 %v4030, %v4029
  %v4042 = vpack.c.bf16 %v4032, %v4031
  %v4043 = vpack.c.bf16 %v4034, %v4033
  %v4044 = vpack.c.bf16 %v4035, %v4035
  %s4045 = scalar_lea.vmem %s5, 64
  %v4046 = vld [vmem:[%s4045] sm:$0xf]
  %v4047 = vld [vmem:[%s4045 + $0x4] sm:$0xf]
  %v4048 = vld [vmem:[%s4045 + $0x8] sm:$0xf]
  %v4049 = vld [vmem:[%s4045 + $0xc] sm:$0xf]
  %v4050 = vld [vmem:[%s4045 + $0x10] sm:$0xf]
  %v4051 = vld [vmem:[%s4045 + $0x14] sm:$0xf]
  %v4052 = vld [vmem:[%s4045 + $0x18] sm:$0xf]
  %v4053 = vld [vmem:[%s4045 + $0x1c] sm:$0xf]
  %v4055 = vshrl.u32 %v4036, 16
  %v4057 = vshll.u32 %v4036, 16
  %v4059 = vrot.slane %v4057, 1
  %v4060 = vor.u32 %v4055, %v4059
  %v4062 = vshll.u32 %v4037, 16
  %v4064 = vrot.slane %v4062, 1
  %v4065 = vsel %vm1764, %v4060, %v4064
  %v4066 = vshrl.u32 %v4037, 16
  %v4068 = vor.u32 %v4066, %v4064
  %v4070 = vshll.u32 %v4038, 16
  %v4072 = vrot.slane %v4070, 1
  %v4073 = vsel %vm1764, %v4068, %v4072
  %v4074 = vshrl.u32 %v4038, 16
  %v4076 = vor.u32 %v4074, %v4072
  %v4078 = vshll.u32 %v4039, 16
  %v4080 = vrot.slane %v4078, 1
  %v4081 = vsel %vm1764, %v4076, %v4080
  %v4082 = vshrl.u32 %v4039, 16
  %v4084 = vor.u32 %v4082, %v4080
  %v4086 = vshll.u32 %v4040, 16
  %v4088 = vrot.slane %v4086, 1
  %v4089 = vsel %vm1764, %v4084, %v4088
  %v4090 = vshrl.u32 %v4040, 16
  %v4092 = vor.u32 %v4090, %v4088
  %v4094 = vshll.u32 %v4041, 16
  %v4096 = vrot.slane %v4094, 1
  %v4097 = vsel %vm1764, %v4092, %v4096
  %v4098 = vshrl.u32 %v4041, 16
  %v4100 = vor.u32 %v4098, %v4096
  %v4102 = vshll.u32 %v4042, 16
  %v4104 = vrot.slane %v4102, 1
  %v4105 = vsel %vm1764, %v4100, %v4104
  %v4106 = vshrl.u32 %v4042, 16
  %v4108 = vor.u32 %v4106, %v4104
  %v4110 = vshll.u32 %v4043, 16
  %v4112 = vrot.slane %v4110, 1
  %v4113 = vsel %vm1764, %v4108, %v4112
  %v4114 = vshrl.u32 %v4043, 16
  %v4116 = vor.u32 %v4114, %v4112
  %v4118 = vshll.u32 %v4044, 16
  %v4120 = vrot.slane %v4118, 1
  %v4121 = vsel %vm1764, %v4116, %v4120
  %v4130 = vunpack.c.l.b16 %v4046
  %v4131 = vunpack.c.l.b16 %v4047
  %v4132 = vunpack.c.l.b16 %v4048
  %v4133 = vunpack.c.l.b16 %v4049
  %v4134 = vunpack.c.l.b16 %v4050
  %v4135 = vunpack.c.l.b16 %v4051
  %v4136 = vunpack.c.l.b16 %v4052
  %v4137 = vunpack.c.l.b16 %v4053
  %v4138 = vpack.c.b16 %v4131, %v4130
  %v4139 = vpack.c.b16 %v4133, %v4132
  %v4140 = vpack.c.b16 %v4135, %v4134
  %v4141 = vpack.c.b16 %v4137, %v4136
  %v4147 = vsel %vm1076, %v4065, 0
  %v4150 = vsel %vm1076, %v4073, 0
  %v4153 = vsel %vm1076, %v4081, 0
  %v4156 = vsel %vm1076, %v4089, 0
  %v4159 = vsel %vm1076, %v4097, 0
  %v4162 = vsel %vm1076, %v4105, 0
  %v4165 = vsel %vm1076, %v4113, 0
  %v4168 = vsel %vm1076, %v4121, 0
  %4170 = vmatprep.subr.bf16.mxu0 0
  %4171 = vmatpush1.bf16.msra.mxu0 0
  %4172 = vmatprep.subr.bf16.mxu0 0
  %4173 = vmatpush1.bf16.msra.mxu0 0
  %4174 = vmatprep.subr.bf16.mxu0 0
  %4175 = vmatpush1.bf16.msra.mxu0 0
  %4176 = vmatprep.subr.bf16.mxu0 0
  %4177 = vmatpush1.bf16.msra.mxu0 0
  %4178 = vmatprep.subr.bf16.mxu0 0
  %4179 = vmatpush1.bf16.msra.mxu0 %v4141
  %4180 = vmatprep.subr.bf16.mxu0 0
  %4181 = vmatpush1.bf16.msra.mxu0 %v4140
  %4182 = vmatprep.subr.bf16.mxu0 0
  %4183 = vmatpush1.bf16.msra.mxu0 %v4139
  %4184 = vmatprep.subr.bf16.mxu0 0
  %4185 = vmatpush1.bf16.msra.mxu0 %v4138
  %4186 = vmatprep.subr.bf16.mxu0 0
  %4187 = vmatpush2.bf16.msra.mxu0 0
  %4188 = vmatprep.subr.bf16.mxu0 0
  %4189 = vmatpush2.bf16.msra.mxu0 0
  %4190 = vmatprep.subr.bf16.mxu0 0
  %4191 = vmatpush2.bf16.msra.mxu0 0
  %4192 = vmatprep.subr.bf16.mxu0 0
  %4193 = vmatpush2.bf16.msra.mxu0 0
  %4194 = vmatprep.subr.bf16.mxu0 0
  %4195 = vmatpush2.bf16.msra.mxu0 0
  %4196 = vmatprep.subr.bf16.mxu0 0
  %4197 = vmatpush2.bf16.msra.mxu0 0
  %4198 = vmatprep.subr.bf16.mxu0 0
  %4199 = vmatpush2.bf16.msra.mxu0 0
  %4200 = vmatprep.subr.bf16.mxu0 0
  %4201 = vmatpush2.bf16.msra.mxu0 0
  %4202 = vmatprep.mubr.bf16.mxu0 0
  %4203 = vmatmul.mubr.bf16.gmra.mxu0 %v4147
  %v4204 = vpop.f32.mrf.mxu0
  %v4205 = vadd.f32 0.0, %v4204
  %v4206 = vpop.f32.mrf.mxu0
  %v4207 = vpop.f32.mrf.mxu0
  %v4208 = vadd.f32 0.0, %v4207
  %v4209 = vpop.f32.mrf.mxu0
  %4210 = vmatprep.mubr.bf16.mxu0 0
  %4211 = vmatmul.mubr.bf16.gmra.mxu0 %v4150
  %v4212 = vpop.f32.mrf.mxu0
  %v4213 = vadd.f32 0.0, %v4212
  %v4214 = vpop.f32.mrf.mxu0
  %v4215 = vpop.f32.mrf.mxu0
  %v4216 = vadd.f32 0.0, %v4215
  %v4217 = vpop.f32.mrf.mxu0
  %4218 = vmatprep.mubr.bf16.mxu0 0
  %4219 = vmatmul.mubr.bf16.gmra.mxu0 %v4153
  %v4220 = vpop.f32.mrf.mxu0
  %v4221 = vadd.f32 0.0, %v4220
  %v4222 = vpop.f32.mrf.mxu0
  %v4223 = vpop.f32.mrf.mxu0
  %v4224 = vadd.f32 0.0, %v4223
  %v4225 = vpop.f32.mrf.mxu0
  %4226 = vmatprep.mubr.bf16.mxu0 0
  %4227 = vmatmul.mubr.bf16.gmra.mxu0 %v4156
  %v4228 = vpop.f32.mrf.mxu0
  %v4229 = vadd.f32 0.0, %v4228
  %v4230 = vpop.f32.mrf.mxu0
  %v4231 = vpop.f32.mrf.mxu0
  %v4232 = vadd.f32 0.0, %v4231
  %v4233 = vpop.f32.mrf.mxu0
  %4234 = vmatprep.mubr.bf16.mxu0 0
  %4235 = vmatmul.mubr.bf16.gmra.mxu0 %v4159
  %v4236 = vpop.f32.mrf.mxu0
  %v4237 = vadd.f32 0.0, %v4236
  %v4238 = vpop.f32.mrf.mxu0
  %v4239 = vpop.f32.mrf.mxu0
  %v4240 = vadd.f32 0.0, %v4239
  %v4241 = vpop.f32.mrf.mxu0
  %4242 = vmatprep.mubr.bf16.mxu0 0
  %4243 = vmatmul.mubr.bf16.gmra.mxu0 %v4162
  %v4244 = vpop.f32.mrf.mxu0
  %v4245 = vadd.f32 0.0, %v4244
  %v4246 = vpop.f32.mrf.mxu0
  %v4247 = vpop.f32.mrf.mxu0
  %v4248 = vadd.f32 0.0, %v4247
  %v4249 = vpop.f32.mrf.mxu0
  %4250 = vmatprep.mubr.bf16.mxu0 0
  %4251 = vmatmul.mubr.bf16.gmra.mxu0 %v4165
  %v4252 = vpop.f32.mrf.mxu0
  %v4253 = vadd.f32 0.0, %v4252
  %v4254 = vpop.f32.mrf.mxu0
  %v4255 = vpop.f32.mrf.mxu0
  %v4256 = vadd.f32 0.0, %v4255
  %v4257 = vpop.f32.mrf.mxu0
  %4258 = vmatprep.mubr.bf16.mxu0 0
  %4259 = vmatmul.mubr.bf16.gmra.mxu0 %v4168
  %v4260 = vpop.f32.mrf.mxu0
  %v4261 = vadd.f32 0.0, %v4260
  %v4262 = vpop.f32.mrf.mxu0
  %v4263 = vpop.f32.mrf.mxu0
  %v4264 = vadd.f32 0.0, %v4263
  %v4265 = vpop.f32.mrf.mxu0
  %4266 = vdwg.mxu0
  %v4267 = vadd.f32 %v3958, %v4205
  %v4268 = vadd.f32 %v3961, %v4208
  %v4269 = vadd.f32 %v3966, %v4213
  %v4270 = vadd.f32 %v3969, %v4216
  %v4271 = vadd.f32 %v3974, %v4221
  %v4272 = vadd.f32 %v3977, %v4224
  %v4273 = vadd.f32 %v3982, %v4229
  %v4274 = vadd.f32 %v3985, %v4232
  %v4275 = vadd.f32 %v3990, %v4237
  %v4276 = vadd.f32 %v3993, %v4240
  %v4277 = vadd.f32 %v3998, %v4245
  %v4278 = vadd.f32 %v4001, %v4248
  %v4279 = vadd.f32 %v4006, %v4253
  %v4280 = vadd.f32 %v4009, %v4256
  %v4281 = vadd.f32 %v4014, %v4261
  %v4282 = vadd.f32 %v4017, %v4264
  %v4283 = vmul.f32 %v3579, %v1994
  %v4284 = vmul.f32 %v3580, %v1996
  %v4285 = vmul.f32 %v3581, %v1998
  %v4286 = vmul.f32 %v3582, %v2000
  %v4287 = vmul.f32 %v3583, %v2002
  %v4288 = vmul.f32 %v3584, %v2004
  %v4289 = vmul.f32 %v3585, %v2006
  %v4290 = vmul.f32 %v3586, %v2008
  %v4291 = vmul.f32 %v3587, %v2010
  %v4292 = vmul.f32 %v3588, %v2012
  %v4293 = vmul.f32 %v3589, %v2014
  %v4294 = vmul.f32 %v3590, %v2016
  %v4295 = vmul.f32 %v3591, %v2018
  %v4296 = vmul.f32 %v3592, %v2020
  %v4297 = vmul.f32 %v3593, %v2022
  %v4298 = vmul.f32 %v3594, %v2021
  %v4299 = vpack.c.bf16 %v4283, %v2040
  %v4300 = vpack.c.bf16 %v4285, %v4284
  %v4301 = vpack.c.bf16 %v4287, %v4286
  %v4302 = vpack.c.bf16 %v4289, %v4288
  %v4303 = vpack.c.bf16 %v4291, %v4290
  %v4304 = vpack.c.bf16 %v4293, %v4292
  %v4305 = vpack.c.bf16 %v4295, %v4294
  %v4306 = vpack.c.bf16 %v4297, %v4296
  %v4307 = vpack.c.bf16 %v4298, %v4298
  %s4308 = scalar_lea.vmem %s5, 96
  %v4309 = vld [vmem:[%s4308] sm:$0xf]
  %v4310 = vld [vmem:[%s4308 + $0x4] sm:$0xf]
  %v4311 = vld [vmem:[%s4308 + $0x8] sm:$0xf]
  %v4312 = vld [vmem:[%s4308 + $0xc] sm:$0xf]
  %v4313 = vld [vmem:[%s4308 + $0x10] sm:$0xf]
  %v4314 = vld [vmem:[%s4308 + $0x14] sm:$0xf]
  %v4315 = vld [vmem:[%s4308 + $0x18] sm:$0xf]
  %v4316 = vld [vmem:[%s4308 + $0x1c] sm:$0xf]
  %v4318 = vshrl.u32 %v4299, 16
  %v4320 = vrot.slane %v4318, 3
  %v4321 = vshll.u32 %v4299, 16
  %v4323 = vrot.slane %v4321, 4
  %v4324 = vor.u32 %v4320, %v4323
  %v4326 = vshrl.u32 %v4300, 16
  %v4328 = vrot.slane %v4326, 3
  %v4329 = vshll.u32 %v4300, 16
  %v4331 = vrot.slane %v4329, 4
  %v4332 = vor.u32 %v4328, %v4331
  %v4333 = vsel %vm1462, %v4324, %v4332
  %v4335 = vshrl.u32 %v4301, 16
  %v4337 = vrot.slane %v4335, 3
  %v4338 = vshll.u32 %v4301, 16
  %v4340 = vrot.slane %v4338, 4
  %v4341 = vor.u32 %v4337, %v4340
  %v4342 = vsel %vm1462, %v4332, %v4341
  %v4344 = vshrl.u32 %v4302, 16
  %v4346 = vrot.slane %v4344, 3
  %v4347 = vshll.u32 %v4302, 16
  %v4349 = vrot.slane %v4347, 4
  %v4350 = vor.u32 %v4346, %v4349
  %v4351 = vsel %vm1462, %v4341, %v4350
  %v4353 = vshrl.u32 %v4303, 16
  %v4355 = vrot.slane %v4353, 3
  %v4356 = vshll.u32 %v4303, 16
  %v4358 = vrot.slane %v4356, 4
  %v4359 = vor.u32 %v4355, %v4358
  %v4360 = vsel %vm1462, %v4350, %v4359
  %v4362 = vshrl.u32 %v4304, 16
  %v4364 = vrot.slane %v4362, 3
  %v4365 = vshll.u32 %v4304, 16
  %v4367 = vrot.slane %v4365, 4
  %v4368 = vor.u32 %v4364, %v4367
  %v4369 = vsel %vm1462, %v4359, %v4368
  %v4371 = vshrl.u32 %v4305, 16
  %v4373 = vrot.slane %v4371, 3
  %v4374 = vshll.u32 %v4305, 16
  %v4376 = vrot.slane %v4374, 4
  %v4377 = vor.u32 %v4373, %v4376
  %v4378 = vsel %vm1462, %v4368, %v4377
  %v4380 = vshrl.u32 %v4306, 16
  %v4382 = vrot.slane %v4380, 3
  %v4383 = vshll.u32 %v4306, 16
  %v4385 = vrot.slane %v4383, 4
  %v4386 = vor.u32 %v4382, %v4385
  %v4387 = vsel %vm1462, %v4377, %v4386
  %v4389 = vshrl.u32 %v4307, 16
  %v4391 = vrot.slane %v4389, 3
  %v4392 = vshll.u32 %v4307, 16
  %v4394 = vrot.slane %v4392, 4
  %v4395 = vor.u32 %v4391, %v4394
  %v4396 = vsel %vm1462, %v4386, %v4395
  %v4405 = vunpack.c.l.b16 %v4309
  %v4406 = vunpack.c.l.b16 %v4310
  %v4407 = vunpack.c.l.b16 %v4311
  %v4408 = vunpack.c.l.b16 %v4312
  %v4409 = vunpack.c.l.b16 %v4313
  %v4410 = vunpack.c.l.b16 %v4314
  %v4411 = vunpack.c.l.b16 %v4315
  %v4412 = vunpack.c.l.b16 %v4316
  %v4413 = vpack.c.b16 %v4406, %v4405
  %v4414 = vpack.c.b16 %v4408, %v4407
  %v4415 = vpack.c.b16 %v4410, %v4409
  %v4416 = vpack.c.b16 %v4412, %v4411
  %v4422 = vsel %vm1076, %v4333, 0
  %v4425 = vsel %vm1076, %v4342, 0
  %v4428 = vsel %vm1076, %v4351, 0
  %v4431 = vsel %vm1076, %v4360, 0
  %v4434 = vsel %vm1076, %v4369, 0
  %v4437 = vsel %vm1076, %v4378, 0
  %v4440 = vsel %vm1076, %v4387, 0
  %v4443 = vsel %vm1076, %v4396, 0
  %4445 = vmatprep.subr.bf16.mxu0 0
  %4446 = vmatpush1.bf16.msra.mxu0 0
  %4447 = vmatprep.subr.bf16.mxu0 0
  %4448 = vmatpush1.bf16.msra.mxu0 0
  %4449 = vmatprep.subr.bf16.mxu0 0
  %4450 = vmatpush1.bf16.msra.mxu0 0
  %4451 = vmatprep.subr.bf16.mxu0 0
  %4452 = vmatpush1.bf16.msra.mxu0 0
  %4453 = vmatprep.subr.bf16.mxu0 0
  %4454 = vmatpush1.bf16.msra.mxu0 %v4416
  %4455 = vmatprep.subr.bf16.mxu0 0
  %4456 = vmatpush1.bf16.msra.mxu0 %v4415
  %4457 = vmatprep.subr.bf16.mxu0 0
  %4458 = vmatpush1.bf16.msra.mxu0 %v4414
  %4459 = vmatprep.subr.bf16.mxu0 0
  %4460 = vmatpush1.bf16.msra.mxu0 %v4413
  %4461 = vmatprep.subr.bf16.mxu0 0
  %4462 = vmatpush2.bf16.msra.mxu0 0
  %4463 = vmatprep.subr.bf16.mxu0 0
  %4464 = vmatpush2.bf16.msra.mxu0 0
  %4465 = vmatprep.subr.bf16.mxu0 0
  %4466 = vmatpush2.bf16.msra.mxu0 0
  %4467 = vmatprep.subr.bf16.mxu0 0
  %4468 = vmatpush2.bf16.msra.mxu0 0
  %4469 = vmatprep.subr.bf16.mxu0 0
  %4470 = vmatpush2.bf16.msra.mxu0 0
  %4471 = vmatprep.subr.bf16.mxu0 0
  %4472 = vmatpush2.bf16.msra.mxu0 0
  %4473 = vmatprep.subr.bf16.mxu0 0
  %4474 = vmatpush2.bf16.msra.mxu0 0
  %4475 = vmatprep.subr.bf16.mxu0 0
  %4476 = vmatpush2.bf16.msra.mxu0 0
  %4477 = vmatprep.mubr.bf16.mxu0 0
  %4478 = vmatmul.mubr.bf16.gmra.mxu0 %v4422
  %v4479 = vpop.f32.mrf.mxu0
  %v4480 = vadd.f32 0.0, %v4479
  %v4481 = vpop.f32.mrf.mxu0
  %v4482 = vpop.f32.mrf.mxu0
  %v4483 = vadd.f32 0.0, %v4482
  %v4484 = vpop.f32.mrf.mxu0
  %4485 = vmatprep.mubr.bf16.mxu0 0
  %4486 = vmatmul.mubr.bf16.gmra.mxu0 %v4425
  %v4487 = vpop.f32.mrf.mxu0
  %v4488 = vadd.f32 0.0, %v4487
  %v4489 = vpop.f32.mrf.mxu0
  %v4490 = vpop.f32.mrf.mxu0
  %v4491 = vadd.f32 0.0, %v4490
  %v4492 = vpop.f32.mrf.mxu0
  %4493 = vmatprep.mubr.bf16.mxu0 0
  %4494 = vmatmul.mubr.bf16.gmra.mxu0 %v4428
  %v4495 = vpop.f32.mrf.mxu0
  %v4496 = vadd.f32 0.0, %v4495
  %v4497 = vpop.f32.mrf.mxu0
  %v4498 = vpop.f32.mrf.mxu0
  %v4499 = vadd.f32 0.0, %v4498
  %v4500 = vpop.f32.mrf.mxu0
  %4501 = vmatprep.mubr.bf16.mxu0 0
  %4502 = vmatmul.mubr.bf16.gmra.mxu0 %v4431
  %v4503 = vpop.f32.mrf.mxu0
  %v4504 = vadd.f32 0.0, %v4503
  %v4505 = vpop.f32.mrf.mxu0
  %v4506 = vpop.f32.mrf.mxu0
  %v4507 = vadd.f32 0.0, %v4506
  %v4508 = vpop.f32.mrf.mxu0
  %4509 = vmatprep.mubr.bf16.mxu0 0
  %4510 = vmatmul.mubr.bf16.gmra.mxu0 %v4434
  %v4511 = vpop.f32.mrf.mxu0
  %v4512 = vadd.f32 0.0, %v4511
  %v4513 = vpop.f32.mrf.mxu0
  %v4514 = vpop.f32.mrf.mxu0
  %v4515 = vadd.f32 0.0, %v4514
  %v4516 = vpop.f32.mrf.mxu0
  %4517 = vmatprep.mubr.bf16.mxu0 0
  %4518 = vmatmul.mubr.bf16.gmra.mxu0 %v4437
  %v4519 = vpop.f32.mrf.mxu0
  %v4520 = vadd.f32 0.0, %v4519
  %v4521 = vpop.f32.mrf.mxu0
  %v4522 = vpop.f32.mrf.mxu0
  %v4523 = vadd.f32 0.0, %v4522
  %v4524 = vpop.f32.mrf.mxu0
  %4525 = vmatprep.mubr.bf16.mxu0 0
  %4526 = vmatmul.mubr.bf16.gmra.mxu0 %v4440
  %v4527 = vpop.f32.mrf.mxu0
  %v4528 = vadd.f32 0.0, %v4527
  %v4529 = vpop.f32.mrf.mxu0
  %v4530 = vpop.f32.mrf.mxu0
  %v4531 = vadd.f32 0.0, %v4530
  %v4532 = vpop.f32.mrf.mxu0
  %4533 = vmatprep.mubr.bf16.mxu0 0
  %4534 = vmatmul.mubr.bf16.gmra.mxu0 %v4443
  %v4535 = vpop.f32.mrf.mxu0
  %v4536 = vadd.f32 0.0, %v4535
  %v4537 = vpop.f32.mrf.mxu0
  %v4538 = vpop.f32.mrf.mxu0
  %v4539 = vadd.f32 0.0, %v4538
  %v4540 = vpop.f32.mrf.mxu0
  %4541 = vdwg.mxu0
  %v4542 = vadd.f32 %v4267, %v4480
  %v4543 = vadd.f32 %v4268, %v4483
  %v4544 = vadd.f32 %v4269, %v4488
  %v4545 = vadd.f32 %v4270, %v4491
  %v4546 = vadd.f32 %v4271, %v4496
  %v4547 = vadd.f32 %v4272, %v4499
  %v4548 = vadd.f32 %v4273, %v4504
  %v4549 = vadd.f32 %v4274, %v4507
  %v4550 = vadd.f32 %v4275, %v4512
  %v4551 = vadd.f32 %v4276, %v4515
  %v4552 = vadd.f32 %v4277, %v4520
  %v4553 = vadd.f32 %v4278, %v4523
  %v4554 = vadd.f32 %v4279, %v4528
  %v4555 = vadd.f32 %v4280, %v4531
  %v4556 = vadd.f32 %v4281, %v4536
  %v4557 = vadd.f32 %v4282, %v4539
  %v4558 = vmul.f32 %v3579, %v645
  %v4559 = vmul.f32 %v3580, %v646
  %v4560 = vmul.f32 %v3581, %v647
  %v4561 = vmul.f32 %v3582, %v648
  %v4562 = vmul.f32 %v3583, %v649
  %v4563 = vmul.f32 %v3584, %v650
  %v4564 = vmul.f32 %v3585, %v651
  %v4565 = vmul.f32 %v3586, %v652
  %v4566 = vmul.f32 %v3587, %v653
  %v4567 = vmul.f32 %v3588, %v654
  %v4568 = vmul.f32 %v3589, %v655
  %v4569 = vmul.f32 %v3590, %v656
  %v4570 = vmul.f32 %v3591, %v657
  %v4571 = vmul.f32 %v3592, %v658
  %v4572 = vmul.f32 %v3593, %v659
  %v4573 = vmul.f32 %v3594, %v660
  %v4574 = vpack.c.bf16 %v4559, %v4558
  %v4575 = vpack.c.bf16 %v4561, %v4560
  %v4576 = vpack.c.bf16 %v4563, %v4562
  %v4577 = vpack.c.bf16 %v4565, %v4564
  %v4578 = vpack.c.bf16 %v4567, %v4566
  %v4579 = vpack.c.bf16 %v4569, %v4568
  %v4580 = vpack.c.bf16 %v4571, %v4570
  %v4581 = vpack.c.bf16 %v4573, %v4572
  %s4582 = scalar_lea.vmem %s5, 128
  %v4583 = vld [vmem:[%s4582] sm:$0xf]
  %v4584 = vld [vmem:[%s4582 + $0x4] sm:$0xf]
  %v4585 = vld [vmem:[%s4582 + $0x8] sm:$0xf]
  %v4586 = vld [vmem:[%s4582 + $0xc] sm:$0xf]
  %v4587 = vld [vmem:[%s4582 + $0x10] sm:$0xf]
  %v4588 = vld [vmem:[%s4582 + $0x14] sm:$0xf]
  %v4589 = vld [vmem:[%s4582 + $0x18] sm:$0xf]
  %v4590 = vld [vmem:[%s4582 + $0x1c] sm:$0xf]
  %v4599 = vunpack.c.l.b16 %v4583
  %v4600 = vunpack.c.l.b16 %v4584
  %v4601 = vunpack.c.l.b16 %v4585
  %v4602 = vunpack.c.l.b16 %v4586
  %v4603 = vunpack.c.l.b16 %v4587
  %v4604 = vunpack.c.l.b16 %v4588
  %v4605 = vunpack.c.l.b16 %v4589
  %v4606 = vunpack.c.l.b16 %v4590
  %v4607 = vpack.c.b16 %v4600, %v4599
  %v4608 = vpack.c.b16 %v4602, %v4601
  %v4609 = vpack.c.b16 %v4604, %v4603
  %v4610 = vpack.c.b16 %v4606, %v4605
  %v4616 = vsel %vm1076, %v4574, 0
  %v4619 = vsel %vm1076, %v4575, 0
  %v4622 = vsel %vm1076, %v4576, 0
  %v4625 = vsel %vm1076, %v4577, 0
  %v4628 = vsel %vm1076, %v4578, 0
  %v4631 = vsel %vm1076, %v4579, 0
  %v4634 = vsel %vm1076, %v4580, 0
  %v4637 = vsel %vm1076, %v4581, 0
  %4639 = vmatprep.subr.bf16.mxu0 0
  %4640 = vmatpush1.bf16.msra.mxu0 0
  %4641 = vmatprep.subr.bf16.mxu0 0
  %4642 = vmatpush1.bf16.msra.mxu0 0
  %4643 = vmatprep.subr.bf16.mxu0 0
  %4644 = vmatpush1.bf16.msra.mxu0 0
  %4645 = vmatprep.subr.bf16.mxu0 0
  %4646 = vmatpush1.bf16.msra.mxu0 0
  %4647 = vmatprep.subr.bf16.mxu0 0
  %4648 = vmatpush1.bf16.msra.mxu0 %v4610
  %4649 = vmatprep.subr.bf16.mxu0 0
  %4650 = vmatpush1.bf16.msra.mxu0 %v4609
  %4651 = vmatprep.subr.bf16.mxu0 0
  %4652 = vmatpush1.bf16.msra.mxu0 %v4608
  %4653 = vmatprep.subr.bf16.mxu0 0
  %4654 = vmatpush1.bf16.msra.mxu0 %v4607
  %4655 = vmatprep.subr.bf16.mxu0 0
  %4656 = vmatpush2.bf16.msra.mxu0 0
  %4657 = vmatprep.subr.bf16.mxu0 0
  %4658 = vmatpush2.bf16.msra.mxu0 0
  %4659 = vmatprep.subr.bf16.mxu0 0
  %4660 = vmatpush2.bf16.msra.mxu0 0
  %4661 = vmatprep.subr.bf16.mxu0 0
  %4662 = vmatpush2.bf16.msra.mxu0 0
  %4663 = vmatprep.subr.bf16.mxu0 0
  %4664 = vmatpush2.bf16.msra.mxu0 0
  %4665 = vmatprep.subr.bf16.mxu0 0
  %4666 = vmatpush2.bf16.msra.mxu0 0
  %4667 = vmatprep.subr.bf16.mxu0 0
  %4668 = vmatpush2.bf16.msra.mxu0 0
  %4669 = vmatprep.subr.bf16.mxu0 0
  %4670 = vmatpush2.bf16.msra.mxu0 0
  %4671 = vmatprep.mubr.bf16.mxu0 0
  %4672 = vmatmul.mubr.bf16.gmra.mxu0 %v4616
  %v4673 = vpop.f32.mrf.mxu0
  %v4674 = vadd.f32 0.0, %v4673
  %v4675 = vpop.f32.mrf.mxu0
  %v4676 = vpop.f32.mrf.mxu0
  %v4677 = vadd.f32 0.0, %v4676
  %v4678 = vpop.f32.mrf.mxu0
  %4679 = vmatprep.mubr.bf16.mxu0 0
  %4680 = vmatmul.mubr.bf16.gmra.mxu0 %v4619
  %v4681 = vpop.f32.mrf.mxu0
  %v4682 = vadd.f32 0.0, %v4681
  %v4683 = vpop.f32.mrf.mxu0
  %v4684 = vpop.f32.mrf.mxu0
  %v4685 = vadd.f32 0.0, %v4684
  %v4686 = vpop.f32.mrf.mxu0
  %4687 = vmatprep.mubr.bf16.mxu0 0
  %4688 = vmatmul.mubr.bf16.gmra.mxu0 %v4622
  %v4689 = vpop.f32.mrf.mxu0
  %v4690 = vadd.f32 0.0, %v4689
  %v4691 = vpop.f32.mrf.mxu0
  %v4692 = vpop.f32.mrf.mxu0
  %v4693 = vadd.f32 0.0, %v4692
  %v4694 = vpop.f32.mrf.mxu0
  %4695 = vmatprep.mubr.bf16.mxu0 0
  %4696 = vmatmul.mubr.bf16.gmra.mxu0 %v4625
  %v4697 = vpop.f32.mrf.mxu0
  %v4698 = vadd.f32 0.0, %v4697
  %v4699 = vpop.f32.mrf.mxu0
  %v4700 = vpop.f32.mrf.mxu0
  %v4701 = vadd.f32 0.0, %v4700
  %v4702 = vpop.f32.mrf.mxu0
  %4703 = vmatprep.mubr.bf16.mxu0 0
  %4704 = vmatmul.mubr.bf16.gmra.mxu0 %v4628
  %v4705 = vpop.f32.mrf.mxu0
  %v4706 = vadd.f32 0.0, %v4705
  %v4707 = vpop.f32.mrf.mxu0
  %v4708 = vpop.f32.mrf.mxu0
  %v4709 = vadd.f32 0.0, %v4708
  %v4710 = vpop.f32.mrf.mxu0
  %4711 = vmatprep.mubr.bf16.mxu0 0
  %4712 = vmatmul.mubr.bf16.gmra.mxu0 %v4631
  %v4713 = vpop.f32.mrf.mxu0
  %v4714 = vadd.f32 0.0, %v4713
  %v4715 = vpop.f32.mrf.mxu0
  %v4716 = vpop.f32.mrf.mxu0
  %v4717 = vadd.f32 0.0, %v4716
  %v4718 = vpop.f32.mrf.mxu0
  %4719 = vmatprep.mubr.bf16.mxu0 0
  %4720 = vmatmul.mubr.bf16.gmra.mxu0 %v4634
  %v4721 = vpop.f32.mrf.mxu0
  %v4722 = vadd.f32 0.0, %v4721
  %v4723 = vpop.f32.mrf.mxu0
  %v4724 = vpop.f32.mrf.mxu0
  %v4725 = vadd.f32 0.0, %v4724
  %v4726 = vpop.f32.mrf.mxu0
  %4727 = vmatprep.mubr.bf16.mxu0 0
  %4728 = vmatmul.mubr.bf16.gmra.mxu0 %v4637
  %v4729 = vpop.f32.mrf.mxu0
  %v4730 = vadd.f32 0.0, %v4729
  %v4731 = vpop.f32.mrf.mxu0
  %v4732 = vpop.f32.mrf.mxu0
  %v4733 = vadd.f32 0.0, %v4732
  %v4734 = vpop.f32.mrf.mxu0
  %4735 = vdwg.mxu0
  %v4736 = vadd.f32 %v4542, %v4674
  %v4737 = vadd.f32 %v4543, %v4677
  %v4738 = vadd.f32 %v4544, %v4682
  %v4739 = vadd.f32 %v4545, %v4685
  %v4740 = vadd.f32 %v4546, %v4690
  %v4741 = vadd.f32 %v4547, %v4693
  %v4742 = vadd.f32 %v4548, %v4698
  %v4743 = vadd.f32 %v4549, %v4701
  %v4744 = vadd.f32 %v4550, %v4706
  %v4745 = vadd.f32 %v4551, %v4709
  %v4746 = vadd.f32 %v4552, %v4714
  %v4747 = vadd.f32 %v4553, %v4717
  %v4748 = vadd.f32 %v4554, %v4722
  %v4749 = vadd.f32 %v4555, %v4725
  %v4750 = vadd.f32 %v4556, %v4730
  %v4751 = vadd.f32 %v4557, %v4733
  %v4752 = vmul.f32 %v3579, %v2478
  %v4753 = vmul.f32 %v3580, %v2480
  %v4754 = vmul.f32 %v3581, %v2482
  %v4755 = vmul.f32 %v3582, %v2484
  %v4756 = vmul.f32 %v3583, %v2486
  %v4757 = vmul.f32 %v3584, %v2488
  %v4758 = vmul.f32 %v3585, %v2490
  %v4759 = vmul.f32 %v3586, %v2492
  %v4760 = vmul.f32 %v3587, %v2494
  %v4761 = vmul.f32 %v3588, %v2496
  %v4762 = vmul.f32 %v3589, %v2498
  %v4763 = vmul.f32 %v3590, %v2500
  %v4764 = vmul.f32 %v3591, %v2502
  %v4765 = vmul.f32 %v3592, %v2504
  %v4766 = vmul.f32 %v3593, %v2506
  %v4767 = vmul.f32 %v3594, %v2508
  %v4768 = vpack.c.bf16 %v4753, %v4752
  %v4769 = vpack.c.bf16 %v4755, %v4754
  %v4770 = vpack.c.bf16 %v4757, %v4756
  %v4771 = vpack.c.bf16 %v4759, %v4758
  %v4772 = vpack.c.bf16 %v4761, %v4760
  %v4773 = vpack.c.bf16 %v4763, %v4762
  %v4774 = vpack.c.bf16 %v4765, %v4764
  %v4775 = vpack.c.bf16 %v4767, %v4766
  %s4776 = scalar_lea.vmem %s5, 160
  %v4777 = vld [vmem:[%s4776] sm:$0xf]
  %v4778 = vld [vmem:[%s4776 + $0x4] sm:$0xf]
  %v4779 = vld [vmem:[%s4776 + $0x8] sm:$0xf]
  %v4780 = vld [vmem:[%s4776 + $0xc] sm:$0xf]
  %v4781 = vld [vmem:[%s4776 + $0x10] sm:$0xf]
  %v4782 = vld [vmem:[%s4776 + $0x14] sm:$0xf]
  %v4783 = vld [vmem:[%s4776 + $0x18] sm:$0xf]
  %v4784 = vld [vmem:[%s4776 + $0x1c] sm:$0xf]
  %v4786 = vshrl.u32 %v4768, 16
  %v4788 = vshll.u32 %v4768, 16
  %v4790 = vrot.slane %v4788, 1
  %v4791 = vor.u32 %v4786, %v4790
  %v4793 = vshll.u32 %v4769, 16
  %v4795 = vrot.slane %v4793, 1
  %v4796 = vsel %vm1764, %v4791, %v4795
  %v4797 = vshrl.u32 %v4769, 16
  %v4799 = vor.u32 %v4797, %v4795
  %v4801 = vshll.u32 %v4770, 16
  %v4803 = vrot.slane %v4801, 1
  %v4804 = vsel %vm1764, %v4799, %v4803
  %v4805 = vshrl.u32 %v4770, 16
  %v4807 = vor.u32 %v4805, %v4803
  %v4809 = vshll.u32 %v4771, 16
  %v4811 = vrot.slane %v4809, 1
  %v4812 = vsel %vm1764, %v4807, %v4811
  %v4813 = vshrl.u32 %v4771, 16
  %v4815 = vor.u32 %v4813, %v4811
  %v4817 = vshll.u32 %v4772, 16
  %v4819 = vrot.slane %v4817, 1
  %v4820 = vsel %vm1764, %v4815, %v4819
  %v4821 = vshrl.u32 %v4772, 16
  %v4823 = vor.u32 %v4821, %v4819
  %v4825 = vshll.u32 %v4773, 16
  %v4827 = vrot.slane %v4825, 1
  %v4828 = vsel %vm1764, %v4823, %v4827
  %v4829 = vshrl.u32 %v4773, 16
  %v4831 = vor.u32 %v4829, %v4827
  %v4833 = vshll.u32 %v4774, 16
  %v4835 = vrot.slane %v4833, 1
  %v4836 = vsel %vm1764, %v4831, %v4835
  %v4837 = vshrl.u32 %v4774, 16
  %v4839 = vor.u32 %v4837, %v4835
  %v4841 = vshll.u32 %v4775, 16
  %v4843 = vrot.slane %v4841, 1
  %v4844 = vsel %vm1764, %v4839, %v4843
  %v4845 = vshrl.u32 %v4775, 16
  %v4847 = vor.u32 %v4845, %v4843
  %v4848 = vsel %vm1764, %v4847, %v2621
  %v4857 = vunpack.c.l.b16 %v4777
  %v4858 = vunpack.c.l.b16 %v4778
  %v4859 = vunpack.c.l.b16 %v4779
  %v4860 = vunpack.c.l.b16 %v4780
  %v4861 = vunpack.c.l.b16 %v4781
  %v4862 = vunpack.c.l.b16 %v4782
  %v4863 = vunpack.c.l.b16 %v4783
  %v4864 = vunpack.c.l.b16 %v4784
  %v4865 = vpack.c.b16 %v4858, %v4857
  %v4866 = vpack.c.b16 %v4860, %v4859
  %v4867 = vpack.c.b16 %v4862, %v4861
  %v4868 = vpack.c.b16 %v4864, %v4863
  %v4874 = vsel %vm1076, %v4796, 0
  %v4877 = vsel %vm1076, %v4804, 0
  %v4880 = vsel %vm1076, %v4812, 0
  %v4883 = vsel %vm1076, %v4820, 0
  %v4886 = vsel %vm1076, %v4828, 0
  %v4889 = vsel %vm1076, %v4836, 0
  %v4892 = vsel %vm1076, %v4844, 0
  %v4895 = vsel %vm1076, %v4848, 0
  %4897 = vmatprep.subr.bf16.mxu0 0
  %4898 = vmatpush1.bf16.msra.mxu0 0
  %4899 = vmatprep.subr.bf16.mxu0 0
  %4900 = vmatpush1.bf16.msra.mxu0 0
  %4901 = vmatprep.subr.bf16.mxu0 0
  %4902 = vmatpush1.bf16.msra.mxu0 0
  %4903 = vmatprep.subr.bf16.mxu0 0
  %4904 = vmatpush1.bf16.msra.mxu0 0
  %4905 = vmatprep.subr.bf16.mxu0 0
  %4906 = vmatpush1.bf16.msra.mxu0 %v4868
  %4907 = vmatprep.subr.bf16.mxu0 0
  %4908 = vmatpush1.bf16.msra.mxu0 %v4867
  %4909 = vmatprep.subr.bf16.mxu0 0
  %4910 = vmatpush1.bf16.msra.mxu0 %v4866
  %4911 = vmatprep.subr.bf16.mxu0 0
  %4912 = vmatpush1.bf16.msra.mxu0 %v4865
  %4913 = vmatprep.subr.bf16.mxu0 0
  %4914 = vmatpush2.bf16.msra.mxu0 0
  %4915 = vmatprep.subr.bf16.mxu0 0
  %4916 = vmatpush2.bf16.msra.mxu0 0
  %4917 = vmatprep.subr.bf16.mxu0 0
  %4918 = vmatpush2.bf16.msra.mxu0 0
  %4919 = vmatprep.subr.bf16.mxu0 0
  %4920 = vmatpush2.bf16.msra.mxu0 0
  %4921 = vmatprep.subr.bf16.mxu0 0
  %4922 = vmatpush2.bf16.msra.mxu0 0
  %4923 = vmatprep.subr.bf16.mxu0 0
  %4924 = vmatpush2.bf16.msra.mxu0 0
  %4925 = vmatprep.subr.bf16.mxu0 0
  %4926 = vmatpush2.bf16.msra.mxu0 0
  %4927 = vmatprep.subr.bf16.mxu0 0
  %4928 = vmatpush2.bf16.msra.mxu0 0
  %4929 = vmatprep.mubr.bf16.mxu0 0
  %4930 = vmatmul.mubr.bf16.gmra.mxu0 %v4874
  %v4931 = vpop.f32.mrf.mxu0
  %v4932 = vadd.f32 0.0, %v4931
  %v4933 = vpop.f32.mrf.mxu0
  %v4934 = vpop.f32.mrf.mxu0
  %v4935 = vadd.f32 0.0, %v4934
  %v4936 = vpop.f32.mrf.mxu0
  %4937 = vmatprep.mubr.bf16.mxu0 0
  %4938 = vmatmul.mubr.bf16.gmra.mxu0 %v4877
  %v4939 = vpop.f32.mrf.mxu0
  %v4940 = vadd.f32 0.0, %v4939
  %v4941 = vpop.f32.mrf.mxu0
  %v4942 = vpop.f32.mrf.mxu0
  %v4943 = vadd.f32 0.0, %v4942
  %v4944 = vpop.f32.mrf.mxu0
  %4945 = vmatprep.mubr.bf16.mxu0 0
  %4946 = vmatmul.mubr.bf16.gmra.mxu0 %v4880
  %v4947 = vpop.f32.mrf.mxu0
  %v4948 = vadd.f32 0.0, %v4947
  %v4949 = vpop.f32.mrf.mxu0
  %v4950 = vpop.f32.mrf.mxu0
  %v4951 = vadd.f32 0.0, %v4950
  %v4952 = vpop.f32.mrf.mxu0
  %4953 = vmatprep.mubr.bf16.mxu0 0
  %4954 = vmatmul.mubr.bf16.gmra.mxu0 %v4883
  %v4955 = vpop.f32.mrf.mxu0
  %v4956 = vadd.f32 0.0, %v4955
  %v4957 = vpop.f32.mrf.mxu0
  %v4958 = vpop.f32.mrf.mxu0
  %v4959 = vadd.f32 0.0, %v4958
  %v4960 = vpop.f32.mrf.mxu0
  %4961 = vmatprep.mubr.bf16.mxu0 0
  %4962 = vmatmul.mubr.bf16.gmra.mxu0 %v4886
  %v4963 = vpop.f32.mrf.mxu0
  %v4964 = vadd.f32 0.0, %v4963
  %v4965 = vpop.f32.mrf.mxu0
  %v4966 = vpop.f32.mrf.mxu0
  %v4967 = vadd.f32 0.0, %v4966
  %v4968 = vpop.f32.mrf.mxu0
  %4969 = vmatprep.mubr.bf16.mxu0 0
  %4970 = vmatmul.mubr.bf16.gmra.mxu0 %v4889
  %v4971 = vpop.f32.mrf.mxu0
  %v4972 = vadd.f32 0.0, %v4971
  %v4973 = vpop.f32.mrf.mxu0
  %v4974 = vpop.f32.mrf.mxu0
  %v4975 = vadd.f32 0.0, %v4974
  %v4976 = vpop.f32.mrf.mxu0
  %4977 = vmatprep.mubr.bf16.mxu0 0
  %4978 = vmatmul.mubr.bf16.gmra.mxu0 %v4892
  %v4979 = vpop.f32.mrf.mxu0
  %v4980 = vadd.f32 0.0, %v4979
  %v4981 = vpop.f32.mrf.mxu0
  %v4982 = vpop.f32.mrf.mxu0
  %v4983 = vadd.f32 0.0, %v4982
  %v4984 = vpop.f32.mrf.mxu0
  %4985 = vmatprep.mubr.bf16.mxu0 0
  %4986 = vmatmul.mubr.bf16.gmra.mxu0 %v4895
  %v4987 = vpop.f32.mrf.mxu0
  %v4988 = vadd.f32 0.0, %v4987
  %v4989 = vpop.f32.mrf.mxu0
  %v4990 = vpop.f32.mrf.mxu0
  %v4991 = vadd.f32 0.0, %v4990
  %v4992 = vpop.f32.mrf.mxu0
  %4993 = vdwg.mxu0
  %v4994 = vadd.f32 %v4736, %v4932
  %v4995 = vadd.f32 %v4737, %v4935
  %v4996 = vadd.f32 %v4738, %v4940
  %v4997 = vadd.f32 %v4739, %v4943
  %v4998 = vadd.f32 %v4740, %v4948
  %v4999 = vadd.f32 %v4741, %v4951
  %v5000 = vadd.f32 %v4742, %v4956
  %v5001 = vadd.f32 %v4743, %v4959
  %v5002 = vadd.f32 %v4744, %v4964
  %v5003 = vadd.f32 %v4745, %v4967
  %v5004 = vadd.f32 %v4746, %v4972
  %v5005 = vadd.f32 %v4747, %v4975
  %v5006 = vadd.f32 %v4748, %v4980
  %v5007 = vadd.f32 %v4749, %v4983
  %v5008 = vadd.f32 %v4750, %v4988
  %v5009 = vadd.f32 %v4751, %v4991
  %v5010 = vmul.f32 %v3579, %v2782
  %v5011 = vmul.f32 %v3580, %v2784
  %v5012 = vmul.f32 %v3581, %v2786
  %v5013 = vmul.f32 %v3582, %v2788
  %v5014 = vmul.f32 %v3583, %v2790
  %v5015 = vmul.f32 %v3584, %v2792
  %v5016 = vmul.f32 %v3585, %v2794
  %v5017 = vmul.f32 %v3586, %v2796
  %v5018 = vmul.f32 %v3587, %v2798
  %v5019 = vmul.f32 %v3588, %v2800
  %v5020 = vmul.f32 %v3589, %v2802
  %v5021 = vmul.f32 %v3590, %v2804
  %v5022 = vmul.f32 %v3591, %v2806
  %v5023 = vmul.f32 %v3592, %v2808
  %v5024 = vmul.f32 %v3593, %v2810
  %v5025 = vmul.f32 %v3594, %v2812
  %v5026 = vpack.c.bf16 %v5011, %v5010
  %v5027 = vpack.c.bf16 %v5013, %v5012
  %v5028 = vpack.c.bf16 %v5015, %v5014
  %v5029 = vpack.c.bf16 %v5017, %v5016
  %v5030 = vpack.c.bf16 %v5019, %v5018
  %v5031 = vpack.c.bf16 %v5021, %v5020
  %v5032 = vpack.c.bf16 %v5023, %v5022
  %v5033 = vpack.c.bf16 %v5025, %v5024
  %s5034 = scalar_lea.vmem %s5, 192
  %v5035 = vld [vmem:[%s5034] sm:$0xf]
  %v5036 = vld [vmem:[%s5034 + $0x4] sm:$0xf]
  %v5037 = vld [vmem:[%s5034 + $0x8] sm:$0xf]
  %v5038 = vld [vmem:[%s5034 + $0xc] sm:$0xf]
  %v5039 = vld [vmem:[%s5034 + $0x10] sm:$0xf]
  %v5040 = vld [vmem:[%s5034 + $0x14] sm:$0xf]
  %v5041 = vld [vmem:[%s5034 + $0x18] sm:$0xf]
  %v5042 = vld [vmem:[%s5034 + $0x1c] sm:$0xf]
  %v5044 = vshrl.u32 %v5026, 16
  %v5046 = vrot.slane %v5044, 3
  %v5047 = vshll.u32 %v5026, 16
  %v5049 = vrot.slane %v5047, 4
  %v5050 = vor.u32 %v5046, %v5049
  %v5052 = vshrl.u32 %v5027, 16
  %v5054 = vrot.slane %v5052, 3
  %v5055 = vshll.u32 %v5027, 16
  %v5057 = vrot.slane %v5055, 4
  %v5058 = vor.u32 %v5054, %v5057
  %v5059 = vsel %vm1462, %v5050, %v5058
  %v5061 = vshrl.u32 %v5028, 16
  %v5063 = vrot.slane %v5061, 3
  %v5064 = vshll.u32 %v5028, 16
  %v5066 = vrot.slane %v5064, 4
  %v5067 = vor.u32 %v5063, %v5066
  %v5068 = vsel %vm1462, %v5058, %v5067
  %v5070 = vshrl.u32 %v5029, 16
  %v5072 = vrot.slane %v5070, 3
  %v5073 = vshll.u32 %v5029, 16
  %v5075 = vrot.slane %v5073, 4
  %v5076 = vor.u32 %v5072, %v5075
  %v5077 = vsel %vm1462, %v5067, %v5076
  %v5079 = vshrl.u32 %v5030, 16
  %v5081 = vrot.slane %v5079, 3
  %v5082 = vshll.u32 %v5030, 16
  %v5084 = vrot.slane %v5082, 4
  %v5085 = vor.u32 %v5081, %v5084
  %v5086 = vsel %vm1462, %v5076, %v5085
  %v5088 = vshrl.u32 %v5031, 16
  %v5090 = vrot.slane %v5088, 3
  %v5091 = vshll.u32 %v5031, 16
  %v5093 = vrot.slane %v5091, 4
  %v5094 = vor.u32 %v5090, %v5093
  %v5095 = vsel %vm1462, %v5085, %v5094
  %v5097 = vshrl.u32 %v5032, 16
  %v5099 = vrot.slane %v5097, 3
  %v5100 = vshll.u32 %v5032, 16
  %v5102 = vrot.slane %v5100, 4
  %v5103 = vor.u32 %v5099, %v5102
  %v5104 = vsel %vm1462, %v5094, %v5103
  %v5106 = vshrl.u32 %v5033, 16
  %v5108 = vrot.slane %v5106, 3
  %v5109 = vshll.u32 %v5033, 16
  %v5111 = vrot.slane %v5109, 4
  %v5112 = vor.u32 %v5108, %v5111
  %v5113 = vsel %vm1462, %v5103, %v5112
  %v5114 = vsel %vm1462, %v5112, %v2937
  %v5123 = vunpack.c.l.b16 %v5035
  %v5124 = vunpack.c.l.b16 %v5036
  %v5125 = vunpack.c.l.b16 %v5037
  %v5126 = vunpack.c.l.b16 %v5038
  %v5127 = vunpack.c.l.b16 %v5039
  %v5128 = vunpack.c.l.b16 %v5040
  %v5129 = vunpack.c.l.b16 %v5041
  %v5130 = vunpack.c.l.b16 %v5042
  %v5131 = vpack.c.b16 %v5124, %v5123
  %v5132 = vpack.c.b16 %v5126, %v5125
  %v5133 = vpack.c.b16 %v5128, %v5127
  %v5134 = vpack.c.b16 %v5130, %v5129
  %v5140 = vsel %vm1076, %v5059, 0
  %v5143 = vsel %vm1076, %v5068, 0
  %v5146 = vsel %vm1076, %v5077, 0
  %v5149 = vsel %vm1076, %v5086, 0
  %v5152 = vsel %vm1076, %v5095, 0
  %v5155 = vsel %vm1076, %v5104, 0
  %v5158 = vsel %vm1076, %v5113, 0
  %v5161 = vsel %vm1076, %v5114, 0
  %5163 = vmatprep.subr.bf16.mxu0 0
  %5164 = vmatpush1.bf16.msra.mxu0 0
  %5165 = vmatprep.subr.bf16.mxu0 0
  %5166 = vmatpush1.bf16.msra.mxu0 0
  %5167 = vmatprep.subr.bf16.mxu0 0
  %5168 = vmatpush1.bf16.msra.mxu0 0
  %5169 = vmatprep.subr.bf16.mxu0 0
  %5170 = vmatpush1.bf16.msra.mxu0 0
  %5171 = vmatprep.subr.bf16.mxu0 0
  %5172 = vmatpush1.bf16.msra.mxu0 %v5134
  %5173 = vmatprep.subr.bf16.mxu0 0
  %5174 = vmatpush1.bf16.msra.mxu0 %v5133
  %5175 = vmatprep.subr.bf16.mxu0 0
  %5176 = vmatpush1.bf16.msra.mxu0 %v5132
  %5177 = vmatprep.subr.bf16.mxu0 0
  %5178 = vmatpush1.bf16.msra.mxu0 %v5131
  %5179 = vmatprep.subr.bf16.mxu0 0
  %5180 = vmatpush2.bf16.msra.mxu0 0
  %5181 = vmatprep.subr.bf16.mxu0 0
  %5182 = vmatpush2.bf16.msra.mxu0 0
  %5183 = vmatprep.subr.bf16.mxu0 0
  %5184 = vmatpush2.bf16.msra.mxu0 0
  %5185 = vmatprep.subr.bf16.mxu0 0
  %5186 = vmatpush2.bf16.msra.mxu0 0
  %5187 = vmatprep.subr.bf16.mxu0 0
  %5188 = vmatpush2.bf16.msra.mxu0 0
  %5189 = vmatprep.subr.bf16.mxu0 0
  %5190 = vmatpush2.bf16.msra.mxu0 0
  %5191 = vmatprep.subr.bf16.mxu0 0
  %5192 = vmatpush2.bf16.msra.mxu0 0
  %5193 = vmatprep.subr.bf16.mxu0 0
  %5194 = vmatpush2.bf16.msra.mxu0 0
  %5195 = vmatprep.mubr.bf16.mxu0 0
  %5196 = vmatmul.mubr.bf16.gmra.mxu0 %v5140
  %v5197 = vpop.f32.mrf.mxu0
  %v5198 = vadd.f32 0.0, %v5197
  %v5199 = vpop.f32.mrf.mxu0
  %v5200 = vpop.f32.mrf.mxu0
  %v5201 = vadd.f32 0.0, %v5200
  %v5202 = vpop.f32.mrf.mxu0
  %5203 = vmatprep.mubr.bf16.mxu0 0
  %5204 = vmatmul.mubr.bf16.gmra.mxu0 %v5143
  %v5205 = vpop.f32.mrf.mxu0
  %v5206 = vadd.f32 0.0, %v5205
  %v5207 = vpop.f32.mrf.mxu0
  %v5208 = vpop.f32.mrf.mxu0
  %v5209 = vadd.f32 0.0, %v5208
  %v5210 = vpop.f32.mrf.mxu0
  %5211 = vmatprep.mubr.bf16.mxu0 0
  %5212 = vmatmul.mubr.bf16.gmra.mxu0 %v5146
  %v5213 = vpop.f32.mrf.mxu0
  %v5214 = vadd.f32 0.0, %v5213
  %v5215 = vpop.f32.mrf.mxu0
  %v5216 = vpop.f32.mrf.mxu0
  %v5217 = vadd.f32 0.0, %v5216
  %v5218 = vpop.f32.mrf.mxu0
  %5219 = vmatprep.mubr.bf16.mxu0 0
  %5220 = vmatmul.mubr.bf16.gmra.mxu0 %v5149
  %v5221 = vpop.f32.mrf.mxu0
  %v5222 = vadd.f32 0.0, %v5221
  %v5223 = vpop.f32.mrf.mxu0
  %v5224 = vpop.f32.mrf.mxu0
  %v5225 = vadd.f32 0.0, %v5224
  %v5226 = vpop.f32.mrf.mxu0
  %5227 = vmatprep.mubr.bf16.mxu0 0
  %5228 = vmatmul.mubr.bf16.gmra.mxu0 %v5152
  %v5229 = vpop.f32.mrf.mxu0
  %v5230 = vadd.f32 0.0, %v5229
  %v5231 = vpop.f32.mrf.mxu0
  %v5232 = vpop.f32.mrf.mxu0
  %v5233 = vadd.f32 0.0, %v5232
  %v5234 = vpop.f32.mrf.mxu0
  %5235 = vmatprep.mubr.bf16.mxu0 0
  %5236 = vmatmul.mubr.bf16.gmra.mxu0 %v5155
  %v5237 = vpop.f32.mrf.mxu0
  %v5238 = vadd.f32 0.0, %v5237
  %v5239 = vpop.f32.mrf.mxu0
  %v5240 = vpop.f32.mrf.mxu0
  %v5241 = vadd.f32 0.0, %v5240
  %v5242 = vpop.f32.mrf.mxu0
  %5243 = vmatprep.mubr.bf16.mxu0 0
  %5244 = vmatmul.mubr.bf16.gmra.mxu0 %v5158
  %v5245 = vpop.f32.mrf.mxu0
  %v5246 = vadd.f32 0.0, %v5245
  %v5247 = vpop.f32.mrf.mxu0
  %v5248 = vpop.f32.mrf.mxu0
  %v5249 = vadd.f32 0.0, %v5248
  %v5250 = vpop.f32.mrf.mxu0
  %5251 = vmatprep.mubr.bf16.mxu0 0
  %5252 = vmatmul.mubr.bf16.gmra.mxu0 %v5161
  %v5253 = vpop.f32.mrf.mxu0
  %v5254 = vadd.f32 0.0, %v5253
  %v5255 = vpop.f32.mrf.mxu0
  %v5256 = vpop.f32.mrf.mxu0
  %v5257 = vadd.f32 0.0, %v5256
  %v5258 = vpop.f32.mrf.mxu0
  %5259 = vdwg.mxu0
  %v5260 = vadd.f32 %v4994, %v5198
  %v5261 = vadd.f32 %v4995, %v5201
  %v5262 = vadd.f32 %v4996, %v5206
  %v5263 = vadd.f32 %v4997, %v5209
  %v5264 = vadd.f32 %v4998, %v5214
  %v5265 = vadd.f32 %v4999, %v5217
  %v5266 = vadd.f32 %v5000, %v5222
  %v5267 = vadd.f32 %v5001, %v5225
  %v5268 = vadd.f32 %v5002, %v5230
  %v5269 = vadd.f32 %v5003, %v5233
  %v5270 = vadd.f32 %v5004, %v5238
  %v5271 = vadd.f32 %v5005, %v5241
  %v5272 = vadd.f32 %v5006, %v5246
  %v5273 = vadd.f32 %v5007, %v5249
  %v5274 = vadd.f32 %v5008, %v5254
  %v5275 = vadd.f32 %v5009, %v5257
  %v5276 = vmul.f32 %v3580, %v901
  %v5277 = vmul.f32 %v3581, %v902
  %v5278 = vmul.f32 %v3582, %v903
  %v5279 = vmul.f32 %v3583, %v904
  %v5280 = vmul.f32 %v3584, %v905
  %v5281 = vmul.f32 %v3585, %v906
  %v5282 = vmul.f32 %v3586, %v907
  %v5283 = vmul.f32 %v3587, %v908
  %v5284 = vmul.f32 %v3588, %v909
  %v5285 = vmul.f32 %v3589, %v910
  %v5286 = vmul.f32 %v3590, %v911
  %v5287 = vmul.f32 %v3591, %v912
  %v5288 = vmul.f32 %v3592, %v913
  %v5289 = vmul.f32 %v3593, %v914
  %v5290 = vmul.f32 %v3594, %v915
  %v5291 = vpack.c.bf16 %v5277, %v5276
  %v5292 = vpack.c.bf16 %v5279, %v5278
  %v5293 = vpack.c.bf16 %v5281, %v5280
  %v5294 = vpack.c.bf16 %v5283, %v5282
  %v5295 = vpack.c.bf16 %v5285, %v5284
  %v5296 = vpack.c.bf16 %v5287, %v5286
  %v5297 = vpack.c.bf16 %v5289, %v5288
  %v5298 = vpack.c.bf16 %v3097, %v5290
  %s5299 = scalar_lea.vmem %s5, 224
  %v5300 = vld [vmem:[%s5299] sm:$0xf]
  %v5301 = vld [vmem:[%s5299 + $0x4] sm:$0xf]
  %v5302 = vld [vmem:[%s5299 + $0x8] sm:$0xf]
  %v5303 = vld [vmem:[%s5299 + $0xc] sm:$0xf]
  %v5304 = vld [vmem:[%s5299 + $0x10] sm:$0xf]
  %v5305 = vld [vmem:[%s5299 + $0x14] sm:$0xf]
  %v5306 = vld [vmem:[%s5299 + $0x18] sm:$0xf]
  %v5307 = vld [vmem:[%s5299 + $0x1c] sm:$0xf]
  %v5316 = vunpack.c.l.b16 %v5300
  %v5317 = vunpack.c.l.b16 %v5301
  %v5318 = vunpack.c.l.b16 %v5302
  %v5319 = vunpack.c.l.b16 %v5303
  %v5320 = vunpack.c.l.b16 %v5304
  %v5321 = vunpack.c.l.b16 %v5305
  %v5322 = vunpack.c.l.b16 %v5306
  %v5323 = vunpack.c.l.b16 %v5307
  %v5324 = vpack.c.b16 %v5317, %v5316
  %v5325 = vpack.c.b16 %v5319, %v5318
  %v5326 = vpack.c.b16 %v5321, %v5320
  %v5327 = vpack.c.b16 %v5323, %v5322
  %v5333 = vsel %vm1076, %v5291, 0
  %v5336 = vsel %vm1076, %v5292, 0
  %v5339 = vsel %vm1076, %v5293, 0
  %v5342 = vsel %vm1076, %v5294, 0
  %v5345 = vsel %vm1076, %v5295, 0
  %v5348 = vsel %vm1076, %v5296, 0
  %v5351 = vsel %vm1076, %v5297, 0
  %v5354 = vsel %vm1076, %v5298, 0
  %5356 = vmatprep.subr.bf16.mxu0 0
  %5357 = vmatpush1.bf16.msra.mxu0 0
  %5358 = vmatprep.subr.bf16.mxu0 0
  %5359 = vmatpush1.bf16.msra.mxu0 0
  %5360 = vmatprep.subr.bf16.mxu0 0
  %5361 = vmatpush1.bf16.msra.mxu0 0
  %5362 = vmatprep.subr.bf16.mxu0 0
  %5363 = vmatpush1.bf16.msra.mxu0 0
  %5364 = vmatprep.subr.bf16.mxu0 0
  %5365 = vmatpush1.bf16.msra.mxu0 %v5327
  %5366 = vmatprep.subr.bf16.mxu0 0
  %5367 = vmatpush1.bf16.msra.mxu0 %v5326
  %5368 = vmatprep.subr.bf16.mxu0 0
  %5369 = vmatpush1.bf16.msra.mxu0 %v5325
  %5370 = vmatprep.subr.bf16.mxu0 0
  %5371 = vmatpush1.bf16.msra.mxu0 %v5324
  %5372 = vmatprep.subr.bf16.mxu0 0
  %5373 = vmatpush2.bf16.msra.mxu0 0
  %5374 = vmatprep.subr.bf16.mxu0 0
  %5375 = vmatpush2.bf16.msra.mxu0 0
  %5376 = vmatprep.subr.bf16.mxu0 0
  %5377 = vmatpush2.bf16.msra.mxu0 0
  %5378 = vmatprep.subr.bf16.mxu0 0
  %5379 = vmatpush2.bf16.msra.mxu0 0
  %5380 = vmatprep.subr.bf16.mxu0 0
  %5381 = vmatpush2.bf16.msra.mxu0 0
  %5382 = vmatprep.subr.bf16.mxu0 0
  %5383 = vmatpush2.bf16.msra.mxu0 0
  %5384 = vmatprep.subr.bf16.mxu0 0
  %5385 = vmatpush2.bf16.msra.mxu0 0
  %5386 = vmatprep.subr.bf16.mxu0 0
  %5387 = vmatpush2.bf16.msra.mxu0 0
  %5388 = vmatprep.mubr.bf16.mxu0 0
  %5389 = vmatmul.mubr.bf16.gmra.mxu0 %v5333
  %v5390 = vpop.f32.mrf.mxu0
  %v5391 = vadd.f32 0.0, %v5390
  %v5392 = vpop.f32.mrf.mxu0
  %v5393 = vpop.f32.mrf.mxu0
  %v5394 = vadd.f32 0.0, %v5393
  %v5395 = vpop.f32.mrf.mxu0
  %5396 = vmatprep.mubr.bf16.mxu0 0
  %5397 = vmatmul.mubr.bf16.gmra.mxu0 %v5336
  %v5398 = vpop.f32.mrf.mxu0
  %v5399 = vadd.f32 0.0, %v5398
  %v5400 = vpop.f32.mrf.mxu0
  %v5401 = vpop.f32.mrf.mxu0
  %v5402 = vadd.f32 0.0, %v5401
  %v5403 = vpop.f32.mrf.mxu0
  %5404 = vmatprep.mubr.bf16.mxu0 0
  %5405 = vmatmul.mubr.bf16.gmra.mxu0 %v5339
  %v5406 = vpop.f32.mrf.mxu0
  %v5407 = vadd.f32 0.0, %v5406
  %v5408 = vpop.f32.mrf.mxu0
  %v5409 = vpop.f32.mrf.mxu0
  %v5410 = vadd.f32 0.0, %v5409
  %v5411 = vpop.f32.mrf.mxu0
  %5412 = vmatprep.mubr.bf16.mxu0 0
  %5413 = vmatmul.mubr.bf16.gmra.mxu0 %v5342
  %v5414 = vpop.f32.mrf.mxu0
  %v5415 = vadd.f32 0.0, %v5414
  %v5416 = vpop.f32.mrf.mxu0
  %v5417 = vpop.f32.mrf.mxu0
  %v5418 = vadd.f32 0.0, %v5417
  %v5419 = vpop.f32.mrf.mxu0
  %5420 = vmatprep.mubr.bf16.mxu0 0
  %5421 = vmatmul.mubr.bf16.gmra.mxu0 %v5345
  %v5422 = vpop.f32.mrf.mxu0
  %v5423 = vadd.f32 0.0, %v5422
  %v5424 = vpop.f32.mrf.mxu0
  %v5425 = vpop.f32.mrf.mxu0
  %v5426 = vadd.f32 0.0, %v5425
  %v5427 = vpop.f32.mrf.mxu0
  %5428 = vmatprep.mubr.bf16.mxu0 0
  %5429 = vmatmul.mubr.bf16.gmra.mxu0 %v5348
  %v5430 = vpop.f32.mrf.mxu0
  %v5431 = vadd.f32 0.0, %v5430
  %v5432 = vpop.f32.mrf.mxu0
  %v5433 = vpop.f32.mrf.mxu0
  %v5434 = vadd.f32 0.0, %v5433
  %v5435 = vpop.f32.mrf.mxu0
  %5436 = vmatprep.mubr.bf16.mxu0 0
  %5437 = vmatmul.mubr.bf16.gmra.mxu0 %v5351
  %v5438 = vpop.f32.mrf.mxu0
  %v5439 = vadd.f32 0.0, %v5438
  %v5440 = vpop.f32.mrf.mxu0
  %v5441 = vpop.f32.mrf.mxu0
  %v5442 = vadd.f32 0.0, %v5441
  %v5443 = vpop.f32.mrf.mxu0
  %5444 = vmatprep.mubr.bf16.mxu0 0
  %5445 = vmatmul.mubr.bf16.gmra.mxu0 %v5354
  %v5446 = vpop.f32.mrf.mxu0
  %v5447 = vadd.f32 0.0, %v5446
  %v5448 = vpop.f32.mrf.mxu0
  %v5449 = vpop.f32.mrf.mxu0
  %v5450 = vadd.f32 0.0, %v5449
  %v5451 = vpop.f32.mrf.mxu0
  %5452 = vdwg.mxu0
  %v5453 = vadd.f32 %v5260, %v5391
  %v5454 = vadd.f32 %v5261, %v5394
  %v5455 = vadd.f32 %v5262, %v5399
  %v5456 = vadd.f32 %v5263, %v5402
  %v5457 = vadd.f32 %v5264, %v5407
  %v5458 = vadd.f32 %v5265, %v5410
  %v5459 = vadd.f32 %v5266, %v5415
  %v5460 = vadd.f32 %v5267, %v5418
  %v5461 = vadd.f32 %v5268, %v5423
  %v5462 = vadd.f32 %v5269, %v5426
  %v5463 = vadd.f32 %v5270, %v5431
  %v5464 = vadd.f32 %v5271, %v5434
  %v5465 = vadd.f32 %v5272, %v5439
  %v5466 = vadd.f32 %v5273, %v5442
  %v5467 = vadd.f32 %v5274, %v5447
  %v5468 = vadd.f32 %v5275, %v5450
  %v5469 = vmul.f32 %v3580, %v3268
  %v5470 = vmul.f32 %v3581, %v3270
  %v5471 = vmul.f32 %v3582, %v3272
  %v5472 = vmul.f32 %v3583, %v3274
  %v5473 = vmul.f32 %v3584, %v3276
  %v5474 = vmul.f32 %v3585, %v3278
  %v5475 = vmul.f32 %v3586, %v3280
  %v5476 = vmul.f32 %v3587, %v3282
  %v5477 = vmul.f32 %v3588, %v3284
  %v5478 = vmul.f32 %v3589, %v3286
  %v5479 = vmul.f32 %v3590, %v3288
  %v5480 = vmul.f32 %v3591, %v3290
  %v5481 = vmul.f32 %v3592, %v3292
  %v5482 = vmul.f32 %v3593, %v3294
  %v5483 = vmul.f32 %v3594, %v3296
  %v5484 = vpack.c.bf16 %v5470, %v5469
  %v5485 = vpack.c.bf16 %v5472, %v5471
  %v5486 = vpack.c.bf16 %v5474, %v5473
  %v5487 = vpack.c.bf16 %v5476, %v5475
  %v5488 = vpack.c.bf16 %v5478, %v5477
  %v5489 = vpack.c.bf16 %v5480, %v5479
  %v5490 = vpack.c.bf16 %v5482, %v5481
  %v5491 = vpack.c.bf16 %v3331, %v5483
  %s5492 = scalar_lea.vmem %s5, 256
  %v5493 = vld [vmem:[%s5492] sm:$0xf]
  %v5494 = vld [vmem:[%s5492 + $0x4] sm:$0xf]
  %v5495 = vld [vmem:[%s5492 + $0x8] sm:$0xf]
  %v5496 = vld [vmem:[%s5492 + $0xc] sm:$0xf]
  %v5497 = vld [vmem:[%s5492 + $0x10] sm:$0xf]
  %v5498 = vld [vmem:[%s5492 + $0x14] sm:$0xf]
  %v5499 = vld [vmem:[%s5492 + $0x18] sm:$0xf]
  %v5500 = vld [vmem:[%s5492 + $0x1c] sm:$0xf]
  %v5502 = vshrl.u32 %v5484, 16
  %v5504 = vshll.u32 %v5484, 16
  %v5506 = vrot.slane %v5504, 1
  %v5507 = vor.u32 %v5502, %v5506
  %v5509 = vshll.u32 %v5485, 16
  %v5511 = vrot.slane %v5509, 1
  %v5512 = vsel %vm1764, %v5507, %v5511
  %v5513 = vshrl.u32 %v5485, 16
  %v5515 = vor.u32 %v5513, %v5511
  %v5517 = vshll.u32 %v5486, 16
  %v5519 = vrot.slane %v5517, 1
  %v5520 = vsel %vm1764, %v5515, %v5519
  %v5521 = vshrl.u32 %v5486, 16
  %v5523 = vor.u32 %v5521, %v5519
  %v5525 = vshll.u32 %v5487, 16
  %v5527 = vrot.slane %v5525, 1
  %v5528 = vsel %vm1764, %v5523, %v5527
  %v5529 = vshrl.u32 %v5487, 16
  %v5531 = vor.u32 %v5529, %v5527
  %v5533 = vshll.u32 %v5488, 16
  %v5535 = vrot.slane %v5533, 1
  %v5536 = vsel %vm1764, %v5531, %v5535
  %v5537 = vshrl.u32 %v5488, 16
  %v5539 = vor.u32 %v5537, %v5535
  %v5541 = vshll.u32 %v5489, 16
  %v5543 = vrot.slane %v5541, 1
  %v5544 = vsel %vm1764, %v5539, %v5543
  %v5545 = vshrl.u32 %v5489, 16
  %v5547 = vor.u32 %v5545, %v5543
  %v5549 = vshll.u32 %v5490, 16
  %v5551 = vrot.slane %v5549, 1
  %v5552 = vsel %vm1764, %v5547, %v5551
  %v5553 = vshrl.u32 %v5490, 16
  %v5555 = vor.u32 %v5553, %v5551
  %v5557 = vshll.u32 %v5491, 16
  %v5559 = vrot.slane %v5557, 1
  %v5560 = vsel %vm1764, %v5555, %v5559
  %v5561 = vshrl.u32 %v5491, 16
  %v5563 = vor.u32 %v5561, %v5559
  %v5564 = vsel %vm1764, %v5563, %v3411
  %v5573 = vunpack.c.l.b16 %v5493
  %v5574 = vunpack.c.l.b16 %v5494
  %v5575 = vunpack.c.l.b16 %v5495
  %v5576 = vunpack.c.l.b16 %v5496
  %v5577 = vunpack.c.l.b16 %v5497
  %v5578 = vunpack.c.l.b16 %v5498
  %v5579 = vunpack.c.l.b16 %v5499
  %v5580 = vunpack.c.l.b16 %v5500
  %v5581 = vpack.c.b16 %v5574, %v5573
  %v5582 = vpack.c.b16 %v5576, %v5575
  %v5583 = vpack.c.b16 %v5578, %v5577
  %v5584 = vpack.c.b16 %v5580, %v5579
  %v5590 = vsel %vm1076, %v5512, 0
  %v5593 = vsel %vm1076, %v5520, 0
  %v5596 = vsel %vm1076, %v5528, 0
  %v5599 = vsel %vm1076, %v5536, 0
  %v5602 = vsel %vm1076, %v5544, 0
  %v5605 = vsel %vm1076, %v5552, 0
  %v5608 = vsel %vm1076, %v5560, 0
  %v5611 = vsel %vm1076, %v5564, 0
  %5613 = vmatprep.subr.bf16.mxu0 0
  %5614 = vmatpush1.bf16.msra.mxu0 0
  %5615 = vmatprep.subr.bf16.mxu0 0
  %5616 = vmatpush1.bf16.msra.mxu0 0
  %5617 = vmatprep.subr.bf16.mxu0 0
  %5618 = vmatpush1.bf16.msra.mxu0 0
  %5619 = vmatprep.subr.bf16.mxu0 0
  %5620 = vmatpush1.bf16.msra.mxu0 0
  %5621 = vmatprep.subr.bf16.mxu0 0
  %5622 = vmatpush1.bf16.msra.mxu0 %v5584
  %5623 = vmatprep.subr.bf16.mxu0 0
  %5624 = vmatpush1.bf16.msra.mxu0 %v5583
  %5625 = vmatprep.subr.bf16.mxu0 0
  %5626 = vmatpush1.bf16.msra.mxu0 %v5582
  %5627 = vmatprep.subr.bf16.mxu0 0
  %5628 = vmatpush1.bf16.msra.mxu0 %v5581
  %5629 = vmatprep.subr.bf16.mxu0 0
  %5630 = vmatpush2.bf16.msra.mxu0 0
  %5631 = vmatprep.subr.bf16.mxu0 0
  %5632 = vmatpush2.bf16.msra.mxu0 0
  %5633 = vmatprep.subr.bf16.mxu0 0
  %5634 = vmatpush2.bf16.msra.mxu0 0
  %5635 = vmatprep.subr.bf16.mxu0 0
  %5636 = vmatpush2.bf16.msra.mxu0 0
  %5637 = vmatprep.subr.bf16.mxu0 0
  %5638 = vmatpush2.bf16.msra.mxu0 0
  %5639 = vmatprep.subr.bf16.mxu0 0
  %5640 = vmatpush2.bf16.msra.mxu0 0
  %5641 = vmatprep.subr.bf16.mxu0 0
  %5642 = vmatpush2.bf16.msra.mxu0 0
  %5643 = vmatprep.subr.bf16.mxu0 0
  %5644 = vmatpush2.bf16.msra.mxu0 0
  %5645 = vmatprep.mubr.bf16.mxu0 0
  %5646 = vmatmul.mubr.bf16.gmra.mxu0 %v5590
  %v5647 = vpop.f32.mrf.mxu0
  %v5648 = vadd.f32 0.0, %v5647
  %v5649 = vpop.f32.mrf.mxu0
  %v5650 = vpop.f32.mrf.mxu0
  %v5651 = vadd.f32 0.0, %v5650
  %v5652 = vpop.f32.mrf.mxu0
  %5653 = vmatprep.mubr.bf16.mxu0 0
  %5654 = vmatmul.mubr.bf16.gmra.mxu0 %v5593
  %v5655 = vpop.f32.mrf.mxu0
  %v5656 = vadd.f32 0.0, %v5655
  %v5657 = vpop.f32.mrf.mxu0
  %v5658 = vpop.f32.mrf.mxu0
  %v5659 = vadd.f32 0.0, %v5658
  %v5660 = vpop.f32.mrf.mxu0
  %5661 = vmatprep.mubr.bf16.mxu0 0
  %5662 = vmatmul.mubr.bf16.gmra.mxu0 %v5596
  %v5663 = vpop.f32.mrf.mxu0
  %v5664 = vadd.f32 0.0, %v5663
  %v5665 = vpop.f32.mrf.mxu0
  %v5666 = vpop.f32.mrf.mxu0
  %v5667 = vadd.f32 0.0, %v5666
  %v5668 = vpop.f32.mrf.mxu0
  %5669 = vmatprep.mubr.bf16.mxu0 0
  %5670 = vmatmul.mubr.bf16.gmra.mxu0 %v5599
  %v5671 = vpop.f32.mrf.mxu0
  %v5672 = vadd.f32 0.0, %v5671
  %v5673 = vpop.f32.mrf.mxu0
  %v5674 = vpop.f32.mrf.mxu0
  %v5675 = vadd.f32 0.0, %v5674
  %v5676 = vpop.f32.mrf.mxu0
  %5677 = vmatprep.mubr.bf16.mxu0 0
  %5678 = vmatmul.mubr.bf16.gmra.mxu0 %v5602
  %v5679 = vpop.f32.mrf.mxu0
  %v5680 = vadd.f32 0.0, %v5679
  %v5681 = vpop.f32.mrf.mxu0
  %v5682 = vpop.f32.mrf.mxu0
  %v5683 = vadd.f32 0.0, %v5682
  %v5684 = vpop.f32.mrf.mxu0
  %5685 = vmatprep.mubr.bf16.mxu0 0
  %5686 = vmatmul.mubr.bf16.gmra.mxu0 %v5605
  %v5687 = vpop.f32.mrf.mxu0
  %v5688 = vadd.f32 0.0, %v5687
  %v5689 = vpop.f32.mrf.mxu0
  %v5690 = vpop.f32.mrf.mxu0
  %v5691 = vadd.f32 0.0, %v5690
  %v5692 = vpop.f32.mrf.mxu0
  %5693 = vmatprep.mubr.bf16.mxu0 0
  %5694 = vmatmul.mubr.bf16.gmra.mxu0 %v5608
  %v5695 = vpop.f32.mrf.mxu0
  %v5696 = vadd.f32 0.0, %v5695
  %v5697 = vpop.f32.mrf.mxu0
  %v5698 = vpop.f32.mrf.mxu0
  %v5699 = vadd.f32 0.0, %v5698
  %v5700 = vpop.f32.mrf.mxu0
  %5701 = vmatprep.mubr.bf16.mxu0 0
  %5702 = vmatmul.mubr.bf16.gmra.mxu0 %v5611
  %v5703 = vpop.f32.mrf.mxu0
  %v5704 = vadd.f32 0.0, %v5703
  %v5705 = vpop.f32.mrf.mxu0
  %v5706 = vpop.f32.mrf.mxu0
  %v5707 = vadd.f32 0.0, %v5706
  %v5708 = vpop.f32.mrf.mxu0
  %5709 = vdwg.mxu0
  %v5710 = vadd.f32 %v5453, %v5648
  %v5711 = vadd.f32 %v5454, %v5651
  %v5712 = vadd.f32 %v5455, %v5656
  %v5713 = vadd.f32 %v5456, %v5659
  %v5714 = vadd.f32 %v5457, %v5664
  %v5715 = vadd.f32 %v5458, %v5667
  %v5716 = vadd.f32 %v5459, %v5672
  %v5717 = vadd.f32 %v5460, %v5675
  %v5718 = vadd.f32 %v5461, %v5680
  %v5719 = vadd.f32 %v5462, %v5683
  %v5720 = vadd.f32 %v5463, %v5688
  %v5721 = vadd.f32 %v5464, %v5691
  %v5722 = vadd.f32 %v5465, %v5696
  %v5723 = vadd.f32 %v5466, %v5699
  %v5724 = vadd.f32 %v5467, %v5704
  %v5725 = vadd.f32 %v5468, %v5707
  %v5726 = vld [vmem:[%s6] sm:$0x1]
  %v5728 = vlaneseq
  %v5729 = vshrl.u32 %v5728, 7
  %v5730 = vsub.s32 0, %v5729
  %v5731 = vrot.slane %v5726, %v5730
  %v5733 = vadd.f32 %v5710, %v5731
  %v5734 = vadd.f32 %v5711, %v5731
  %v5735 = vadd.f32 %v5712, %v5731
  %v5736 = vadd.f32 %v5713, %v5731
  %v5737 = vadd.f32 %v5714, %v5731
  %v5738 = vadd.f32 %v5715, %v5731
  %v5739 = vadd.f32 %v5716, %v5731
  %v5740 = vadd.f32 %v5717, %v5731
  %v5741 = vadd.f32 %v5718, %v5731
  %v5742 = vadd.f32 %v5719, %v5731
  %v5743 = vadd.f32 %v5720, %v5731
  %v5744 = vadd.f32 %v5721, %v5731
  %v5745 = vadd.f32 %v5722, %v5731
  %v5746 = vadd.f32 %v5723, %v5731
  %v5747 = vadd.f32 %v5724, %v5731
  %v5748 = vadd.f32 %v5725, %v5731
  %v5749 = vpack.c.bf16 %v5734, %v5733
  %v5750 = vpack.c.bf16 %v5736, %v5735
  %v5751 = vpack.c.bf16 %v5738, %v5737
  %v5752 = vpack.c.bf16 %v5740, %v5739
  %v5753 = vpack.c.bf16 %v5742, %v5741
  %v5754 = vpack.c.bf16 %v5744, %v5743
  %v5755 = vpack.c.bf16 %v5746, %v5745
  %v5756 = vpack.c.bf16 %v5748, %v5747
  %v5757 = vld [vmem:[%s7] sm:$0xf]
  %v5758 = vld [vmem:[%s7 + $0x4] sm:$0xf]
  %v5759 = vld [vmem:[%s7 + $0x8] sm:$0xf]
  %v5760 = vld [vmem:[%s7 + $0xc] sm:$0xf]
  %v5761 = vld [vmem:[%s8] sm:$0x1]
  %v5763 = vlaneseq
  %v5764 = vshrl.u32 %v5763, 7
  %v5765 = vsub.s32 0, %v5764
  %v5766 = vrot.slane %v5761, %v5765
  %v5772 = vunpack.c.l.b16 %v5757
  %v5773 = vunpack.c.l.b16 %v5758
  %v5774 = vunpack.c.l.b16 %v5759
  %v5775 = vunpack.c.l.b16 %v5760
  %v5776 = vpack.c.b16 %v5773, %v5772
  %v5777 = vpack.c.b16 %v5775, %v5774
  %vm5780 = vcmask 261120
  %v5782 = vsel %vm5780, %v5749, 0
  %v5785 = vsel %vm5780, %v5750, 0
  %v5788 = vsel %vm5780, %v5751, 0
  %v5791 = vsel %vm5780, %v5752, 0
  %v5794 = vsel %vm5780, %v5753, 0
  %v5797 = vsel %vm5780, %v5754, 0
  %v5800 = vsel %vm5780, %v5755, 0
  %v5803 = vsel %vm5780, %v5756, 0
  %5805 = vmatprep.subr.bf16.mxu0 0
  %5806 = vmatpush1.bf16.msra.mxu0 0
  %5807 = vmatprep.subr.bf16.mxu0 0
  %5808 = vmatpush1.bf16.msra.mxu0 0
  %5809 = vmatprep.subr.bf16.mxu0 0
  %5810 = vmatpush1.bf16.msra.mxu0 0
  %5811 = vmatprep.subr.bf16.mxu0 0
  %5812 = vmatpush1.bf16.msra.mxu0 0
  %5813 = vmatprep.subr.bf16.mxu0 0
  %5814 = vmatpush1.bf16.msra.mxu0 0
  %5815 = vmatprep.subr.bf16.mxu0 0
  %5816 = vmatpush1.bf16.msra.mxu0 0
  %5817 = vmatprep.subr.bf16.mxu0 0
  %5818 = vmatpush1.bf16.msra.mxu0 %v5777
  %5819 = vmatprep.subr.bf16.mxu0 0
  %5820 = vmatpush1.bf16.msra.mxu0 %v5776
  %5821 = vmatprep.subr.bf16.mxu0 0
  %5822 = vmatpush2.bf16.msra.mxu0 0
  %5823 = vmatprep.subr.bf16.mxu0 0
  %5824 = vmatpush2.bf16.msra.mxu0 0
  %5825 = vmatprep.subr.bf16.mxu0 0
  %5826 = vmatpush2.bf16.msra.mxu0 0
  %5827 = vmatprep.subr.bf16.mxu0 0
  %5828 = vmatpush2.bf16.msra.mxu0 0
  %5829 = vmatprep.subr.bf16.mxu0 0
  %5830 = vmatpush2.bf16.msra.mxu0 0
  %5831 = vmatprep.subr.bf16.mxu0 0
  %5832 = vmatpush2.bf16.msra.mxu0 0
  %5833 = vmatprep.subr.bf16.mxu0 0
  %5834 = vmatpush2.bf16.msra.mxu0 0
  %5835 = vmatprep.subr.bf16.mxu0 0
  %5836 = vmatpush2.bf16.msra.mxu0 0
  %5837 = vmatprep.mubr.bf16.mxu0 0
  %5838 = vmatmul.mubr.bf16.gmra.mxu0 %v5782
  %v5839 = vpop.f32.mrf.mxu0
  %v5840 = vadd.f32 %v5766, %v5839
  %v5841 = vpop.f32.mrf.mxu0
  %v5842 = vpop.f32.mrf.mxu0
  %v5843 = vadd.f32 %v5766, %v5842
  %v5844 = vpop.f32.mrf.mxu0
  %5845 = vmatprep.mubr.bf16.mxu0 0
  %5846 = vmatmul.mubr.bf16.gmra.mxu0 %v5785
  %v5847 = vpop.f32.mrf.mxu0
  %v5848 = vadd.f32 %v5766, %v5847
  %v5849 = vpop.f32.mrf.mxu0
  %v5850 = vpop.f32.mrf.mxu0
  %v5851 = vadd.f32 %v5766, %v5850
  %v5852 = vpop.f32.mrf.mxu0
  %5853 = vmatprep.mubr.bf16.mxu0 0
  %5854 = vmatmul.mubr.bf16.gmra.mxu0 %v5788
  %v5855 = vpop.f32.mrf.mxu0
  %v5856 = vadd.f32 %v5766, %v5855
  %v5857 = vpop.f32.mrf.mxu0
  %v5858 = vpop.f32.mrf.mxu0
  %v5859 = vadd.f32 %v5766, %v5858
  %v5860 = vpop.f32.mrf.mxu0
  %5861 = vmatprep.mubr.bf16.mxu0 0
  %5862 = vmatmul.mubr.bf16.gmra.mxu0 %v5791
  %v5863 = vpop.f32.mrf.mxu0
  %v5864 = vadd.f32 %v5766, %v5863
  %v5865 = vpop.f32.mrf.mxu0
  %v5866 = vpop.f32.mrf.mxu0
  %v5867 = vadd.f32 %v5766, %v5866
  %v5868 = vpop.f32.mrf.mxu0
  %5869 = vmatprep.mubr.bf16.mxu0 0
  %5870 = vmatmul.mubr.bf16.gmra.mxu0 %v5794
  %v5871 = vpop.f32.mrf.mxu0
  %v5872 = vadd.f32 %v5766, %v5871
  %v5873 = vpop.f32.mrf.mxu0
  %v5874 = vpop.f32.mrf.mxu0
  %v5875 = vadd.f32 %v5766, %v5874
  %v5876 = vpop.f32.mrf.mxu0
  %5877 = vmatprep.mubr.bf16.mxu0 0
  %5878 = vmatmul.mubr.bf16.gmra.mxu0 %v5797
  %v5879 = vpop.f32.mrf.mxu0
  %v5880 = vadd.f32 %v5766, %v5879
  %v5881 = vpop.f32.mrf.mxu0
  %v5882 = vpop.f32.mrf.mxu0
  %v5883 = vadd.f32 %v5766, %v5882
  %v5884 = vpop.f32.mrf.mxu0
  %5885 = vmatprep.mubr.bf16.mxu0 0
  %5886 = vmatmul.mubr.bf16.gmra.mxu0 %v5800
  %v5887 = vpop.f32.mrf.mxu0
  %v5888 = vadd.f32 %v5766, %v5887
  %v5889 = vpop.f32.mrf.mxu0
  %v5890 = vpop.f32.mrf.mxu0
  %v5891 = vadd.f32 %v5766, %v5890
  %v5892 = vpop.f32.mrf.mxu0
  %5893 = vmatprep.mubr.bf16.mxu0 0
  %5894 = vmatmul.mubr.bf16.gmra.mxu0 %v5803
  %v5895 = vpop.f32.mrf.mxu0
  %v5896 = vadd.f32 %v5766, %v5895
  %v5897 = vpop.f32.mrf.mxu0
  %v5898 = vpop.f32.mrf.mxu0
  %v5899 = vadd.f32 %v5766, %v5898
  %v5900 = vpop.f32.mrf.mxu0
  %5901 = vdwg.mxu0
  %v5902 = vld [vmem:[%s9] sm:$0xff]
  %v5903 = vld [vmem:[%s9 + $0x8] sm:$0xff]
  %v5904 = vmul.f32 %v5902, %v5902
  %v5905 = vmul.f32 %v5903, %v5903
  %v5906 = vsel %vm5780, %v5904, 0.0
  %5907 = vadd.xlane.f32.xlu0 %v5906
  %v5908 = vpop.xlane.xlu0 %5907
  %v5909 = vsel %vm5780, %v5905, 0.0
  %5910 = vadd.xlane.f32.xlu0 %v5909
  %v5911 = vpop.xlane.xlu0 %5910
  %v5913 = vsel %vm5780, %v5902, 0
  %v5916 = vsel %vm5780, %v5903, 0
  %v5919 = vsel %vm5780, %v5840, 0
  %v5922 = vsel %vm5780, %v5843, 0
  %v5925 = vsel %vm5780, %v5848, 0
  %v5928 = vsel %vm5780, %v5851, 0
  %v5931 = vsel %vm5780, %v5856, 0
  %v5934 = vsel %vm5780, %v5859, 0
  %v5937 = vsel %vm5780, %v5864, 0
  %v5940 = vsel %vm5780, %v5867, 0
  %v5943 = vsel %vm5780, %v5872, 0
  %v5946 = vsel %vm5780, %v5875, 0
  %v5949 = vsel %vm5780, %v5880, 0
  %v5952 = vsel %vm5780, %v5883, 0
  %v5955 = vsel %vm5780, %v5888, 0
  %v5958 = vsel %vm5780, %v5891, 0
  %v5961 = vsel %vm5780, %v5896, 0
  %v5964 = vsel %vm5780, %v5899, 0
  %5966 = vmatprep.subr.mxu0 0.0
  %5967 = vmatpush1.xpose.msra.mxu0 %v5964
  %5968 = vmatprep.subr.mxu0 0.0
  %5969 = vmatpush1.xpose.msra.mxu0 %v5961
  %5970 = vmatprep.subr.mxu0 0.0
  %5971 = vmatpush1.xpose.msra.mxu0 %v5958
  %5972 = vmatprep.subr.mxu0 0.0
  %5973 = vmatpush1.xpose.msra.mxu0 %v5955
  %5974 = vmatprep.subr.mxu0 0.0
  %5975 = vmatpush1.xpose.msra.mxu0 %v5952
  %5976 = vmatprep.subr.mxu0 0.0
  %5977 = vmatpush1.xpose.msra.mxu0 %v5949
  %5978 = vmatprep.subr.mxu0 0.0
  %5979 = vmatpush1.xpose.msra.mxu0 %v5946
  %5980 = vmatprep.subr.mxu0 0.0
  %5981 = vmatpush1.xpose.msra.mxu0 %v5943
  %5982 = vmatprep.subr.mxu0 0.0
  %5983 = vmatpush1.xpose.msra.mxu0 %v5940
  %5984 = vmatprep.subr.mxu0 0.0
  %5985 = vmatpush1.xpose.msra.mxu0 %v5937
  %5986 = vmatprep.subr.mxu0 0.0
  %5987 = vmatpush1.xpose.msra.mxu0 %v5934
  %5988 = vmatprep.subr.mxu0 0.0
  %5989 = vmatpush1.xpose.msra.mxu0 %v5931
  %5990 = vmatprep.subr.mxu0 0.0
  %5991 = vmatpush1.xpose.msra.mxu0 %v5928
  %5992 = vmatprep.subr.mxu0 0.0
  %5993 = vmatpush1.xpose.msra.mxu0 %v5925
  %5994 = vmatprep.subr.mxu0 0.0
  %5995 = vmatpush1.xpose.msra.mxu0 %v5922
  %5996 = vmatprep.subr.mxu0 0.0
  %5997 = vmatpush1.xpose.msra.mxu0 %v5919
  %5998 = vmatprep.subr.mxu0 0.0
  %5999 = vmatpush2.xpose.msra.mxu0 0.0
  %6000 = vmatprep.subr.mxu0 0.0
  %6001 = vmatpush2.xpose.msra.mxu0 0.0
  %6002 = vmatprep.subr.mxu0 0.0
  %6003 = vmatpush2.xpose.msra.mxu0 0.0
  %6004 = vmatprep.subr.mxu0 0.0
  %6005 = vmatpush2.xpose.msra.mxu0 0.0
  %6006 = vmatprep.subr.mxu0 0.0
  %6007 = vmatpush2.xpose.msra.mxu0 0.0
  %6008 = vmatprep.subr.mxu0 0.0
  %6009 = vmatpush2.xpose.msra.mxu0 0.0
  %6010 = vmatprep.subr.mxu0 0.0
  %6011 = vmatpush2.xpose.msra.mxu0 0.0
  %6012 = vmatprep.subr.mxu0 0.0
  %6013 = vmatpush2.xpose.msra.mxu0 0.0
  %6014 = vmatprep.subr.mxu0 0.0
  %6015 = vmatpush2.xpose.msra.mxu0 0.0
  %6016 = vmatprep.subr.mxu0 0.0
  %6017 = vmatpush2.xpose.msra.mxu0 0.0
  %6018 = vmatprep.subr.mxu0 0.0
  %6019 = vmatpush2.xpose.msra.mxu0 0.0
  %6020 = vmatprep.subr.mxu0 0.0
  %6021 = vmatpush2.xpose.msra.mxu0 0.0
  %6022 = vmatprep.subr.mxu0 0.0
  %6023 = vmatpush2.xpose.msra.mxu0 0.0
  %6024 = vmatprep.subr.mxu0 0.0
  %6025 = vmatpush2.xpose.msra.mxu0 0.0
  %6026 = vmatprep.subr.mxu0 0.0
  %6027 = vmatpush2.xpose.msra.mxu0 0.0
  %6028 = vmatprep.subr.mxu0 0.0
  %6029 = vmatpush2.xpose.msra.mxu0 0.0
  %6030 = vmatprep.mubr.f32.mxu0 0.0
  %6031 = vmatmul.mubr.f32.gmra.mxu0 %v5913
  %v6032 = vpop.f32.mrf.mxu0
  %v6033 = vadd.f32 0.0, %v6032
  %v6034 = vpop.f32.mrf.mxu0
  %6035 = vmatprep.mubr.f32.mxu0 0.0
  %6036 = vmatmul.mubr.f32.gmra.mxu0 %v5916
  %v6037 = vpop.f32.mrf.mxu0
  %v6038 = vadd.f32 0.0, %v6037
  %v6039 = vpop.f32.mrf.mxu0
  %6040 = vdwg.mxu0
  %v6041 = vmul.f32 %v6033, 2.0
  %v6042 = vmul.f32 %v6038, 2.0
  %v6043 = vsub.f32 %v5908, %v6041
  %v6044 = vsub.f32 %v5911, %v6042
  %v6045 = vmin.f32 %v6043, %v6044
  %v6046 = vrot.slane %v6045, 4
  %v6047 = vmin.f32 %v6045, %v6046
  %v6048 = vrot.slane %v6047, 2
  %v6049 = vmin.f32 %v6047, %v6048
  %v6050 = vrot.slane %v6049, 1
  %v6051 = vmin.f32 %v6049, %v6050
  %vm6052 = vcmp.le.f32.partialorder %v6043, %v6051
  %vm6053 = vcmp.le.f32.partialorder %v6044, %v6051
  %v6054 = vsel %vm6052, %v37, 2147483647
  %v6055 = vsel %vm6053, %v38, 2147483647
  %vm6056 = vcmp.lt.s32.totalorder %v6054, %v6055
  %v6057 = vsel %vm6056, %v6054, %v6055
  %v6058 = vrot.slane %v6057, 4
  %vm6059 = vcmp.lt.s32.totalorder %v6057, %v6058
  %v6060 = vsel %vm6059, %v6057, %v6058
  %v6061 = vrot.slane %v6060, 2
  %vm6062 = vcmp.lt.s32.totalorder %v6060, %v6061
  %v6063 = vsel %vm6062, %v6060, %v6061
  %v6064 = vrot.slane %v6063, 1
  %vm6065 = vcmp.lt.s32.totalorder %v6063, %v6064
  %v6066 = vsel %vm6065, %v6063, %v6064
  %6067 = vst [vmem:[%s10] sm:$0x1] %v6066
  // Predicated region
  $region42: #{forward.1} parent=0 // pred_check
    _
  $region43: #{forward.1} parent=0 // pred_check_branch
    %6069 = sbr.rel (0) target = $region45
  $region44: #{forward.1} parent=0 // pred_region
    _
  $region45: #{forward.1} parent=0 // pred_fallthru
    _
  // Predicated region
  $region46: #{forward.1} parent=0 // pred_check
    _
  $region47: #{forward.1} parent=0 // pred_check_branch
    %6071 = sbr.rel (0) target = $region49
  $region48: #{forward.1} parent=0 // pred_region
    _
  $region49: #{forward.1} parent=0 // pred_fallthru
    _

</llo_original>
